<compile_context>
chip_gen: v7x
topology: tpu7x:2x2x1
jax: 0.10.0
libtpu: 0.0.40
codegen_flags: <defaults>
</compile_context>

<pallas_src>
import jax
import jax.numpy as jnp
from jax.experimental import pallas as pl
from jax.experimental.pallas import tpu as pltpu

LANE = 128


def _round_up(x, m):
    return (x + m - 1) // m * m


def _prefer_wide_mxu():
    """256-wide output tiles only on chips with a 256x256 MXU (>= v6e)."""
    try:
        kind = jax.devices()[0].device_kind.lower()
    except Exception:
        return True
    return not any(t in kind for t in ("v2", "v3", "v4", "v5"))


def _pick_row_tile(H, W, Cin_p, TCout):
    """Rows per output block: keep the bf16 input window <= ~2 MiB and the f32
    accumulator <= ~4 MiB so double-buffered blocks stay well inside the scoped
    VMEM limit on every generation (v7x has only 64 MiB physical VMEM)."""
    rows_in = max(8, (2 << 20) // ((W + 2) * Cin_p * 2))
    rows_acc = max(8, (4 << 20) // (W * TCout * 4))
    return max(1, min(H, 64, rows_in, rows_acc))


def conv_bn_activ(x_nchw, weight_oihw, gamma, beta, running_mean, running_var,
                  eps=1e-5, activ="relu"):
    """Forward pass of ConvBNActiv (sample='none-3', bn=True, bias=False);
    BatchNorm2d in eval mode (running statistics), ReLU / LeakyReLU(0.2)."""
    N, Cin, H, W = x_nchw.shape
    Cout = weight_oihw.shape[0]

    Cin_p = _round_up(Cin, LANE)
    Cout_p = _round_up(Cout, LANE)
    TCout = 256 if (_prefer_wide_mxu() and Cout_p % 256 == 0) else 128
    n_ct = Cout_p // TCout
    TH = _pick_row_tile(H, W, Cin_p, TCout)
    n_rt = pl.cdiv(H, TH)

    # ---------------- kernel (closure over static tile sizes) ----------------
    def kernel(x_ref, w_ref, b_ref, o_ref):
        # x_ref: (TH+2, W+2, Cin_p)  bf16, spatially padded row window
        # w_ref: (9, Cin_p, TCout)   bf16, BN scale folded in
        # b_ref: (1, TCout)          f32 folded BN bias
        # o_ref: (TH*W, TCout)       bf16 lane-dense output slab
        acc = jnp.zeros((TH * W, TCout), jnp.float32)
        for ky in range(3):
            for kx in range(3):
                tap = ky * 3 + kx
                lhs = x_ref[ky:ky + TH, kx:kx + W, :].reshape(TH * W, Cin_p)
                acc = acc + jnp.dot(lhs, w_ref[tap],
                                    preferred_element_type=jnp.float32)
        y = acc + b_ref[...]
        if activ == "relu":
            y = jnp.maximum(y, 0.0)
        elif activ == "leaky":
            y = jnp.where(y > 0, y, 0.2 * y)
        o_ref[...] = y.astype(o_ref.dtype)

    # ---- fold BatchNorm (eval) into the conv weights + a per-channel bias ----
    scale = gamma * jax.lax.rsqrt(running_var + eps)          # (Cout,)
    bias = beta - running_mean * scale                        # (Cout,)
    w = weight_oihw.astype(jnp.float32) * scale[:, None, None, None]   # OIHW
    w_hwio = jnp.transpose(w, (2, 3, 1, 0))                   # (3, 3, Cin, Cout)
    w_taps = jnp.zeros((3, 3, Cin_p, Cout_p), jnp.float32)
    w_taps = w_taps.at[:, :, :Cin, :Cout].set(w_hwio)
    w_taps = w_taps.reshape(9, Cin_p, Cout_p).astype(jnp.bfloat16)
    b_pad = jnp.zeros((1, Cout_p), jnp.float32).at[0, :Cout].set(bias)

    # ---- NCHW -> NHWC bf16; channel pad + spatial halo pad in ONE copy ------
    # TODO(synk): keep the surrounding model in NHWC (lane-dense) so this
    # transpose/pad and the final output transpose fuse with neighboring ops.
    x_nhwc = jnp.transpose(x_nchw, (0, 2, 3, 1)).astype(jnp.bfloat16)
    x_sp = jnp.zeros((N, H + 2, W + 2, Cin_p), jnp.bfloat16)
    x_sp = x_sp.at[:, 1:H + 1, 1:W + 1, :Cin].set(x_nhwc)

    # ---- pre-stage overlapping (TH+2)-row windows so plain Blocked BlockSpecs
    # express the 1-row halo (2 duplicated rows per tile in HBM; auto-pipelined).
    if n_rt == 1:
        x_rt = x_sp[:, None]                                  # (N, 1, H+2, W+2, Cin_p)
    else:
        row_idx = jnp.clip(jnp.arange(n_rt)[:, None] * TH
                           + jnp.arange(TH + 2)[None, :], 0, H + 1)
        x_rt = x_sp[:, row_idx]                               # (N, n_rt, TH+2, W+2, Cin_p)

    cost = pl.CostEstimate(
        flops=2 * N * n_rt * TH * W * 9 * Cin_p * Cout_p,
        transcendentals=0,
        bytes_accessed=int(x_rt.size * 2 + N * n_rt * w_taps.size * 2
                           + N * n_rt * TH * W * Cout_p * 2))

    compiler_kwargs = dict(
        dimension_semantics=("parallel", "parallel", "parallel"))
    try:
        cap = pltpu.get_tpu_info().vmem_capacity_bytes
        compiler_kwargs["vmem_limit_bytes"] = min(100 << 20, int(cap * 3 // 4))
    except Exception:
        pass  # fall back to the compiler's default scoped VMEM limit

    out = pl.pallas_call(
        kernel,
        out_shape=jax.ShapeDtypeStruct((N, n_rt, TH * W, Cout_p), jnp.bfloat16),
        grid=(N, n_rt, n_ct),
        in_specs=[
            pl.BlockSpec((None, None, TH + 2, W + 2, Cin_p),
                         lambda n, r, j: (n, r, 0, 0, 0)),
            pl.BlockSpec((9, Cin_p, TCout), lambda n, r, j: (0, 0, j)),
            pl.BlockSpec((1, TCout), lambda n, r, j: (0, j)),
        ],
        out_specs=pl.BlockSpec((None, None, TH * W, TCout),
                               lambda n, r, j: (n, r, 0, j)),
        compiler_params=pltpu.CompilerParams(**compiler_kwargs),
        cost_estimate=cost,
    )(x_rt, w_taps, b_pad)

    out_nhwc = out.reshape(N, n_rt * TH, W, Cout_p)[:, :H, :, :Cout]
    return jnp.transpose(out_nhwc, (0, 3, 1, 2)).astype(x_nchw.dtype)


def _reference(x_nchw, weight_oihw, gamma, beta, running_mean, running_var,
               eps=1e-5):
    """Pure-JAX f32 reference (lax conv + BN eval + ReLU) for verification."""
    y = jax.lax.conv_general_dilated(
        x_nchw, weight_oihw, window_strides=(1, 1), padding=((1, 1), (1, 1)),
        dimension_numbers=("NCHW", "OIHW", "NCHW"))
    s = (gamma / jnp.sqrt(running_var + eps)).reshape(1, -1, 1, 1)
    b = (beta - running_mean * gamma / jnp.sqrt(running_var + eps)).reshape(1, -1, 1, 1)
    return jnp.maximum(y * s + b, 0.0)


if __name__ == "__main__":
    key = jax.random.PRNGKey(0)
    k_x, k_w, k_g, k_b, k_m, k_v = jax.random.split(key, 6)

    N, Cin, H, W = 2, 4, 16, 16
    Cout = 8

    x = jax.random.normal(k_x, (N, Cin, H, W), dtype=jnp.float32)
    weight = jax.random.normal(k_w, (Cout, Cin, 3, 3), dtype=jnp.float32) * 0.1
    gamma = 1.0 + 0.1 * jax.random.normal(k_g, (Cout,), dtype=jnp.float32)
    beta = 0.1 * jax.random.normal(k_b, (Cout,), dtype=jnp.float32)
    running_mean = 0.1 * jax.random.normal(k_m, (Cout,), dtype=jnp.float32)
    running_var = jnp.abs(jax.random.normal(k_v, (Cout,), dtype=jnp.float32)) + 0.5

    out = conv_bn_activ(x, weight, gamma, beta, running_mean, running_var)
    out = jax.block_until_ready(out)

    ref = _reference(x, weight, gamma, beta, running_mean, running_var)
    # bf16 activations/weights/output (f32 accumulation) -> loosened tolerance.
    if not jnp.allclose(out, ref, atol=5e-2, rtol=5e-2):
        max_err = jnp.max(jnp.abs(out - ref))
        raise AssertionError(f"Pallas kernel output does not match reference "
                             f"(max abs err={max_err})")

    print("KERNEL_OK")
</pallas_src>

<mosaic_0001>
module attributes {stable_mosaic.version = 11 : i64} {
  func.func @kernel(%arg0: i32, %arg1: i32, %arg2: i32, %arg3: memref<1x1x18x18x128xbf16, #tpu.memory_space<vmem>>, %arg4: memref<9x128x128xbf16, #tpu.memory_space<vmem>>, %arg5: memref<1x128xf32, #tpu.memory_space<vmem>>, %arg6: memref<1x1x256x128xbf16, #tpu.memory_space<vmem>>) attributes {dimension_semantics = [#tpu.dimension_semantics<parallel>, #tpu.dimension_semantics<parallel>, #tpu.dimension_semantics<parallel>], iteration_bounds = array<i64: 2, 1, 1>, scalar_prefetch = 0 : i64, scratch_operands = 0 : i64, tpu.core_type = #tpu.core_type<tc>, window_params = [{transform_indices = @transform_0, window_bounds = array<i64: 1, 1, 18, 18, 128>}, {transform_indices = @transform_1, window_bounds = array<i64: 9, 128, 128>}, {transform_indices = @transform_2, window_bounds = array<i64: 1, 128>}, {transform_indices = @transform_3, window_bounds = array<i64: 1, 1, 256, 128>}]} {
    %cst = arith.constant 0.000000e+00 : f32
    %0 = vector.broadcast %cst : f32 to vector<256x128xf32>
    %c0 = arith.constant 0 : index
    %c0_0 = arith.constant 0 : index
    %c0_1 = arith.constant 0 : index
    %c0_2 = arith.constant 0 : index
    %c0_3 = arith.constant 0 : index
    %1 = vector.load %arg3[%c0, %c0_0, %c0_1, %c0_2, %c0_3] : memref<1x1x18x18x128xbf16, #tpu.memory_space<vmem>>, vector<1x1x16x16x128xbf16>
    %2 = vector.shape_cast %1 : vector<1x1x16x16x128xbf16> to vector<16x16x128xbf16>
    %3 = vector.shape_cast %2 : vector<16x16x128xbf16> to vector<256x128xbf16>
    %c0_4 = arith.constant 0 : index
    %c0_5 = arith.constant 0 : index
    %c0_6 = arith.constant 0 : index
    %4 = vector.load %arg4[%c0_4, %c0_5, %c0_6] : memref<9x128x128xbf16, #tpu.memory_space<vmem>>, vector<1x128x128xbf16>
    %5 = vector.shape_cast %4 : vector<1x128x128xbf16> to vector<128x128xbf16>
    %cst_7 = arith.constant dense<0.000000e+00> : vector<256x128xf32>
    %6 = tpu.matmul %3, %5, %cst_7 {dimension_numbers = #tpu.dot_dimension_numbers<[1], [0], [0], [1], [0, 0, 1, 1], [], []>} : vector<256x128xbf16>, vector<128x128xbf16>, vector<256x128xf32> -> vector<256x128xf32>
    %7 = arith.addf %0, %6 : vector<256x128xf32>
    %c0_8 = arith.constant 0 : index
    %c0_9 = arith.constant 0 : index
    %c0_10 = arith.constant 0 : index
    %c1 = arith.constant 1 : index
    %c0_11 = arith.constant 0 : index
    %8 = vector.load %arg3[%c0_8, %c0_9, %c0_10, %c1, %c0_11] : memref<1x1x18x18x128xbf16, #tpu.memory_space<vmem>>, vector<1x1x16x16x128xbf16>
    %9 = vector.shape_cast %8 : vector<1x1x16x16x128xbf16> to vector<16x16x128xbf16>
    %10 = vector.shape_cast %9 : vector<16x16x128xbf16> to vector<256x128xbf16>
    %c1_12 = arith.constant 1 : index
    %c0_13 = arith.constant 0 : index
    %c0_14 = arith.constant 0 : index
    %11 = vector.load %arg4[%c1_12, %c0_13, %c0_14] : memref<9x128x128xbf16, #tpu.memory_space<vmem>>, vector<1x128x128xbf16>
    %12 = vector.shape_cast %11 : vector<1x128x128xbf16> to vector<128x128xbf16>
    %cst_15 = arith.constant dense<0.000000e+00> : vector<256x128xf32>
    %13 = tpu.matmul %10, %12, %cst_15 {dimension_numbers = #tpu.dot_dimension_numbers<[1], [0], [0], [1], [0, 0, 1, 1], [], []>} : vector<256x128xbf16>, vector<128x128xbf16>, vector<256x128xf32> -> vector<256x128xf32>
    %14 = arith.addf %7, %13 : vector<256x128xf32>
    %c0_16 = arith.constant 0 : index
    %c0_17 = arith.constant 0 : index
    %c0_18 = arith.constant 0 : index
    %c2 = arith.constant 2 : index
    %c0_19 = arith.constant 0 : index
    %15 = vector.load %arg3[%c0_16, %c0_17, %c0_18, %c2, %c0_19] : memref<1x1x18x18x128xbf16, #tpu.memory_space<vmem>>, vector<1x1x16x16x128xbf16>
    %16 = vector.shape_cast %15 : vector<1x1x16x16x128xbf16> to vector<16x16x128xbf16>
    %17 = vector.shape_cast %16 : vector<16x16x128xbf16> to vector<256x128xbf16>
    %c2_20 = arith.constant 2 : index
    %c0_21 = arith.constant 0 : index
    %c0_22 = arith.constant 0 : index
    %18 = vector.load %arg4[%c2_20, %c0_21, %c0_22] : memref<9x128x128xbf16, #tpu.memory_space<vmem>>, vector<1x128x128xbf16>
    %19 = vector.shape_cast %18 : vector<1x128x128xbf16> to vector<128x128xbf16>
    %cst_23 = arith.constant dense<0.000000e+00> : vector<256x128xf32>
    %20 = tpu.matmul %17, %19, %cst_23 {dimension_numbers = #tpu.dot_dimension_numbers<[1], [0], [0], [1], [0, 0, 1, 1], [], []>} : vector<256x128xbf16>, vector<128x128xbf16>, vector<256x128xf32> -> vector<256x128xf32>
    %21 = arith.addf %14, %20 : vector<256x128xf32>
    %c0_24 = arith.constant 0 : index
    %c0_25 = arith.constant 0 : index
    %c1_26 = arith.constant 1 : index
    %c0_27 = arith.constant 0 : index
    %c0_28 = arith.constant 0 : index
    %22 = vector.load %arg3[%c0_24, %c0_25, %c1_26, %c0_27, %c0_28] : memref<1x1x18x18x128xbf16, #tpu.memory_space<vmem>>, vector<1x1x16x16x128xbf16>
    %23 = vector.shape_cast %22 : vector<1x1x16x16x128xbf16> to vector<16x16x128xbf16>
    %24 = vector.shape_cast %23 : vector<16x16x128xbf16> to vector<256x128xbf16>
    %c3 = arith.constant 3 : index
    %c0_29 = arith.constant 0 : index
    %c0_30 = arith.constant 0 : index
    %25 = vector.load %arg4[%c3, %c0_29, %c0_30] : memref<9x128x128xbf16, #tpu.memory_space<vmem>>, vector<1x128x128xbf16>
    %26 = vector.shape_cast %25 : vector<1x128x128xbf16> to vector<128x128xbf16>
    %cst_31 = arith.constant dense<0.000000e+00> : vector<256x128xf32>
    %27 = tpu.matmul %24, %26, %cst_31 {dimension_numbers = #tpu.dot_dimension_numbers<[1], [0], [0], [1], [0, 0, 1, 1], [], []>} : vector<256x128xbf16>, vector<128x128xbf16>, vector<256x128xf32> -> vector<256x128xf32>
    %28 = arith.addf %21, %27 : vector<256x128xf32>
    %c0_32 = arith.constant 0 : index
    %c0_33 = arith.constant 0 : index
    %c1_34 = arith.constant 1 : index
    %c1_35 = arith.constant 1 : index
    %c0_36 = arith.constant 0 : index
    %29 = vector.load %arg3[%c0_32, %c0_33, %c1_34, %c1_35, %c0_36] : memref<1x1x18x18x128xbf16, #tpu.memory_space<vmem>>, vector<1x1x16x16x128xbf16>
    %30 = vector.shape_cast %29 : vector<1x1x16x16x128xbf16> to vector<16x16x128xbf16>
    %31 = vector.shape_cast %30 : vector<16x16x128xbf16> to vector<256x128xbf16>
    %c4 = arith.constant 4 : index
    %c0_37 = arith.constant 0 : index
    %c0_38 = arith.constant 0 : index
    %32 = vector.load %arg4[%c4, %c0_37, %c0_38] : memref<9x128x128xbf16, #tpu.memory_space<vmem>>, vector<1x128x128xbf16>
    %33 = vector.shape_cast %32 : vector<1x128x128xbf16> to vector<128x128xbf16>
    %cst_39 = arith.constant dense<0.000000e+00> : vector<256x128xf32>
    %34 = tpu.matmul %31, %33, %cst_39 {dimension_numbers = #tpu.dot_dimension_numbers<[1], [0], [0], [1], [0, 0, 1, 1], [], []>} : vector<256x128xbf16>, vector<128x128xbf16>, vector<256x128xf32> -> vector<256x128xf32>
    %35 = arith.addf %28, %34 : vector<256x128xf32>
    %c0_40 = arith.constant 0 : index
    %c0_41 = arith.constant 0 : index
    %c1_42 = arith.constant 1 : index
    %c2_43 = arith.constant 2 : index
    %c0_44 = arith.constant 0 : index
    %36 = vector.load %arg3[%c0_40, %c0_41, %c1_42, %c2_43, %c0_44] : memref<1x1x18x18x128xbf16, #tpu.memory_space<vmem>>, vector<1x1x16x16x128xbf16>
    %37 = vector.shape_cast %36 : vector<1x1x16x16x128xbf16> to vector<16x16x128xbf16>
    %38 = vector.shape_cast %37 : vector<16x16x128xbf16> to vector<256x128xbf16>
    %c5 = arith.constant 5 : index
    %c0_45 = arith.constant 0 : index
    %c0_46 = arith.constant 0 : index
    %39 = vector.load %arg4[%c5, %c0_45, %c0_46] : memref<9x128x128xbf16, #tpu.memory_space<vmem>>, vector<1x128x128xbf16>
    %40 = vector.shape_cast %39 : vector<1x128x128xbf16> to vector<128x128xbf16>
    %cst_47 = arith.constant dense<0.000000e+00> : vector<256x128xf32>
    %41 = tpu.matmul %38, %40, %cst_47 {dimension_numbers = #tpu.dot_dimension_numbers<[1], [0], [0], [1], [0, 0, 1, 1], [], []>} : vector<256x128xbf16>, vector<128x128xbf16>, vector<256x128xf32> -> vector<256x128xf32>
    %42 = arith.addf %35, %41 : vector<256x128xf32>
    %c0_48 = arith.constant 0 : index
    %c0_49 = arith.constant 0 : index
    %c2_50 = arith.constant 2 : index
    %c0_51 = arith.constant 0 : index
    %c0_52 = arith.constant 0 : index
    %43 = vector.load %arg3[%c0_48, %c0_49, %c2_50, %c0_51, %c0_52] : memref<1x1x18x18x128xbf16, #tpu.memory_space<vmem>>, vector<1x1x16x16x128xbf16>
    %44 = vector.shape_cast %43 : vector<1x1x16x16x128xbf16> to vector<16x16x128xbf16>
    %45 = vector.shape_cast %44 : vector<16x16x128xbf16> to vector<256x128xbf16>
    %c6 = arith.constant 6 : index
    %c0_53 = arith.constant 0 : index
    %c0_54 = arith.constant 0 : index
    %46 = vector.load %arg4[%c6, %c0_53, %c0_54] : memref<9x128x128xbf16, #tpu.memory_space<vmem>>, vector<1x128x128xbf16>
    %47 = vector.shape_cast %46 : vector<1x128x128xbf16> to vector<128x128xbf16>
    %cst_55 = arith.constant dense<0.000000e+00> : vector<256x128xf32>
    %48 = tpu.matmul %45, %47, %cst_55 {dimension_numbers = #tpu.dot_dimension_numbers<[1], [0], [0], [1], [0, 0, 1, 1], [], []>} : vector<256x128xbf16>, vector<128x128xbf16>, vector<256x128xf32> -> vector<256x128xf32>
    %49 = arith.addf %42, %48 : vector<256x128xf32>
    %c0_56 = arith.constant 0 : index
    %c0_57 = arith.constant 0 : index
    %c2_58 = arith.constant 2 : index
    %c1_59 = arith.constant 1 : index
    %c0_60 = arith.constant 0 : index
    %50 = vector.load %arg3[%c0_56, %c0_57, %c2_58, %c1_59, %c0_60] : memref<1x1x18x18x128xbf16, #tpu.memory_space<vmem>>, vector<1x1x16x16x128xbf16>
    %51 = vector.shape_cast %50 : vector<1x1x16x16x128xbf16> to vector<16x16x128xbf16>
    %52 = vector.shape_cast %51 : vector<16x16x128xbf16> to vector<256x128xbf16>
    %c7 = arith.constant 7 : index
    %c0_61 = arith.constant 0 : index
    %c0_62 = arith.constant 0 : index
    %53 = vector.load %arg4[%c7, %c0_61, %c0_62] : memref<9x128x128xbf16, #tpu.memory_space<vmem>>, vector<1x128x128xbf16>
    %54 = vector.shape_cast %53 : vector<1x128x128xbf16> to vector<128x128xbf16>
    %cst_63 = arith.constant dense<0.000000e+00> : vector<256x128xf32>
    %55 = tpu.matmul %52, %54, %cst_63 {dimension_numbers = #tpu.dot_dimension_numbers<[1], [0], [0], [1], [0, 0, 1, 1], [], []>} : vector<256x128xbf16>, vector<128x128xbf16>, vector<256x128xf32> -> vector<256x128xf32>
    %56 = arith.addf %49, %55 : vector<256x128xf32>
    %c0_64 = arith.constant 0 : index
    %c0_65 = arith.constant 0 : index
    %c2_66 = arith.constant 2 : index
    %c2_67 = arith.constant 2 : index
    %c0_68 = arith.constant 0 : index
    %57 = vector.load %arg3[%c0_64, %c0_65, %c2_66, %c2_67, %c0_68] : memref<1x1x18x18x128xbf16, #tpu.memory_space<vmem>>, vector<1x1x16x16x128xbf16>
    %58 = vector.shape_cast %57 : vector<1x1x16x16x128xbf16> to vector<16x16x128xbf16>
    %59 = vector.shape_cast %58 : vector<16x16x128xbf16> to vector<256x128xbf16>
    %c8 = arith.constant 8 : index
    %c0_69 = arith.constant 0 : index
    %c0_70 = arith.constant 0 : index
    %60 = vector.load %arg4[%c8, %c0_69, %c0_70] : memref<9x128x128xbf16, #tpu.memory_space<vmem>>, vector<1x128x128xbf16>
    %61 = vector.shape_cast %60 : vector<1x128x128xbf16> to vector<128x128xbf16>
    %cst_71 = arith.constant dense<0.000000e+00> : vector<256x128xf32>
    %62 = tpu.matmul %59, %61, %cst_71 {dimension_numbers = #tpu.dot_dimension_numbers<[1], [0], [0], [1], [0, 0, 1, 1], [], []>} : vector<256x128xbf16>, vector<128x128xbf16>, vector<256x128xf32> -> vector<256x128xf32>
    %63 = arith.addf %56, %62 : vector<256x128xf32>
    %c0_72 = arith.constant 0 : index
    %c0_73 = arith.constant 0 : index
    %64 = vector.load %arg5[%c0_72, %c0_73] : memref<1x128xf32, #tpu.memory_space<vmem>>, vector<1x128xf32>
    %65 = vector.broadcast %64 : vector<1x128xf32> to vector<256x128xf32>
    %66 = arith.addf %63, %65 : vector<256x128xf32>
    %cst_74 = arith.constant 0.000000e+00 : f32
    %67 = vector.broadcast %cst_74 : f32 to vector<256x128xf32>
    %68 = arith.maximumf %66, %67 : vector<256x128xf32>
    %69 = arith.truncf %68 : vector<256x128xf32> to vector<256x128xbf16>
    %c0_75 = arith.constant 0 : index
    %c0_76 = arith.constant 0 : index
    %c0_77 = arith.constant 0 : index
    %c0_78 = arith.constant 0 : index
    %70 = vector.load %arg6[%c0_75, %c0_76, %c0_77, %c0_78] : memref<1x1x256x128xbf16, #tpu.memory_space<vmem>>, vector<1x1x256x128xbf16>
    %71 = vector.shape_cast %70 : vector<1x1x256x128xbf16> to vector<256x128xbf16>
    %72 = vector.shape_cast %69 : vector<256x128xbf16> to vector<1x1x256x128xbf16>
    tpu.vector_store %arg6[%c0_75, %c0_76, %c0_77, %c0_78], %72 {strides = array<i32>} : memref<1x1x256x128xbf16, #tpu.memory_space<vmem>>, vector<1x1x256x128xbf16>,
    return
  }
  func.func @transform_0(%arg0: i32, %arg1: i32, %arg2: i32) -> (i32, i32, i32, i32, i32) {
    %c0_i32 = arith.constant 0 : i32
    %c0_i32_0 = arith.constant 0 : i32
    %c0_i32_1 = arith.constant 0 : i32
    %c0_i32_2 = arith.constant 0 : i32
    return %arg0, %arg1, %c0_i32, %c0_i32_0, %c0_i32_1 : i32, i32, i32, i32, i32
  }
  func.func @transform_1(%arg0: i32, %arg1: i32, %arg2: i32) -> (i32, i32, i32) {
    %c0_i32 = arith.constant 0 : i32
    %c0_i32_0 = arith.constant 0 : i32
    %c0_i32_1 = arith.constant 0 : i32
    return %c0_i32, %c0_i32_0, %arg2 : i32, i32, i32
  }
  func.func @transform_2(%arg0: i32, %arg1: i32, %arg2: i32) -> (i32, i32) {
    %c0_i32 = arith.constant 0 : i32
    %c0_i32_0 = arith.constant 0 : i32
    return %c0_i32, %arg2 : i32, i32
  }
  func.func @transform_3(%arg0: i32, %arg1: i32, %arg2: i32) -> (i32, i32, i32, i32) {
    %c0_i32 = arith.constant 0 : i32
    %c0_i32_0 = arith.constant 0 : i32
    return %arg0, %arg1, %c0_i32, %arg2 : i32, i32, i32, i32
  }
}

</mosaic_0001>

<llo_original>
// kernel: tpu_custom_call.1
$region0: #{tpu_custom_call.1}
  #allocation0 [shape = 'u32[]', space=smem, size = 0x4, offset = 0x4, fixed_abs, tag = 'smem constant byte address 0x4 - core index']
  #allocation1 [shape = 'u32[144,128]{1,0:T(1,128)}', space=vmem, size = 0x12000, scoped, tag = 'internal scratch']
  %s0 = inlined_call_operand.vmem [shape: bf16[2,1,18,18,128], index: 0, kind: input, shape index: {}]
  %s1 = inlined_call_operand.vmem [shape: bf16[9,128,128], index: 1, kind: input, shape index: {}]
  %s2 = inlined_call_operand.vmem [shape: f32[1,128], index: 2, kind: input, shape index: {}]
  %s3 = inlined_call_operand.hbm [shape: bf16[2,1,256,128], index: 3, kind: output, shape index: {}]
  %s4 = sld [smem:[#allocation0]]
  $region45: #{tpu_custom_call.1} parent=0
    _
  %s6 = ssub.s32 1, %s4
  %s7 = scalar_select 0, %s6, %s4
  $region1: #{tpu_custom_call.1} parent=0
    #allocation2 [shape = 'u8[131072]{0}', space=vmem, size = 0x20000, scoped, tag = 'output window, operand 0']
    #allocation3 [shape = 's32[2]{0}', space=sflag, size = 0x8, scoped, tag = 'scoped memory for tpu_custom_call.1']
    %8 = vsyncpa [#allocation3], 0
    %s9 = scalar_lea.sflag [#allocation3], 1
    %10 = vsyncpa %s9, 0
    loop: start=0, step=1, limit=4
    $region2: #{tpu_custom_call.1} parent=1 // loop_pre_header
      _
    $region3: #{tpu_custom_call.1} parent=1 // loop_header
      %s12 = sphi 0, %s16
      %p13 = scmp.ge.s32.totalorder %s12, 4
      %s19 = sphi 0, %s38
      %s20 = sphi 0, %s34
      %s21 = sphi 0, %s30
      %s22 = sphi 0, %s19
      %s23 = sphi 0, %s20
      %s24 = sphi 0, %s21
      %s25 = sphi 0, %s22
      %s26 = sphi 0, %s23
      %s27 = sphi 0, %s24
      %s43 = sphi 0, %s45
      %s46 = sphi 0, %s43
      %s47 = sphi 0, %s46
      %s63 = sphi 0, %s47
      %s69 = sphi 0, %s71
      %s72 = sphi 0, %s69
      %s73 = sphi 0, %s72
      %s89 = sphi 0, %s73
      %s95 = sphi 0, %s97
      %s98 = sphi 0, %s95
      %s99 = sphi 0, %s98
      %s115 = sphi 0, %s99
      %s125 = sphi 0, %s127
      %s128 = sphi 0, %s125
      %s129 = sphi 0, %s128
      %s145 = sphi 0, %s129
    $region4: #{tpu_custom_call.1} parent=1 // loop_header_branch
      %15 = sbr.rel (%p13) target = $region8
    $region5: #{tpu_custom_call.1} parent=1 // loop_body
      %s17 = ssub.s32 %s12, 1
      %s18 = ssub.s32 %s12, 2
      %s28 = sadd.s32 1, %s21
      %p29 = scmp.ge.s32.totalorder %s28, 1
      %s30 = scalar_select %p29, 0, %s28
      %s31 = sadd.s32 1, %s20
      %s32 = scalar_select %p29, %s31, %s20
      %p33 = scmp.ge.s32.totalorder %s32, 1
      %s34 = scalar_select %p33, 0, %s32
      %s35 = sadd.s32 1, %s19
      %s36 = scalar_select %p33, %s35, %s19
      %p37 = scmp.ge.s32.totalorder %s36, 2
      %s38 = scalar_select %p37, 0, %s36
      %s39 = ssub.s32 %s19, %s38
      %s40 = ssub.s32 %s20, %s34
      %s41 = sor.u32 %s39, %s40
      %p42 = scmp.eq.s32.totalorder %s41, 0
      %s44 = sadd.s32 %s43, 1
      %s45 = scalar_select %p42, %s43, %s44
      %p48 = pneg %p42
      %p49 = scmp.eq.s32.totalorder %s12, 1
      %p50 = por %p48, %p49
      %p51 = scmp.ne.s32.totalorder %s43, %s46
      %p52 = scmp.eq.s32.totalorder %s12, 0
      %p53 = por %p51, %p52
      %p54 = scmp.ne.s32.totalorder %s43, %s46
      %p55 = scmp.eq.s32.totalorder %s17, 1
      %p56 = por %p54, %p55
      %p57 = scmp.ne.s32.totalorder %s46, %s47
      %p58 = scmp.eq.s32.totalorder %s17, 0
      %p59 = por %p57, %p58
      %p60 = scmp.ne.s32.totalorder %s46, %s47
      %p61 = scmp.eq.s32.totalorder %s18, 1
      %p62 = por %p60, %p61
      %p64 = scmp.ne.s32.totalorder %s47, %s63
      %p65 = scmp.eq.s32.totalorder %s18, 0
      %p66 = por %p64, %p65
      %s67 = ssub.s32 %s21, %s30
      %p68 = scmp.eq.s32.totalorder %s67, 0
      %s70 = sadd.s32 %s69, 1
      %s71 = scalar_select %p68, %s69, %s70
      %p74 = pneg %p68
      %p75 = scmp.eq.s32.totalorder %s12, 1
      %p76 = por %p74, %p75
      %p77 = scmp.ne.s32.totalorder %s69, %s72
      %p78 = scmp.eq.s32.totalorder %s12, 0
      %p79 = por %p77, %p78
      %p80 = scmp.ne.s32.totalorder %s69, %s72
      %p81 = scmp.eq.s32.totalorder %s17, 1
      %p82 = por %p80, %p81
      %p83 = scmp.ne.s32.totalorder %s72, %s73
      %p84 = scmp.eq.s32.totalorder %s17, 0
      %p85 = por %p83, %p84
      %p86 = scmp.ne.s32.totalorder %s72, %s73
      %p87 = scmp.eq.s32.totalorder %s18, 1
      %p88 = por %p86, %p87
      %p90 = scmp.ne.s32.totalorder %s73, %s89
      %p91 = scmp.eq.s32.totalorder %s18, 0
      %p92 = por %p90, %p91
      %s93 = ssub.s32 %s21, %s30
      %p94 = scmp.eq.s32.totalorder %s93, 0
      %s96 = sadd.s32 %s95, 1
      %s97 = scalar_select %p94, %s95, %s96
      %p100 = pneg %p94
      %p101 = scmp.eq.s32.totalorder %s12, 1
      %p102 = por %p100, %p101
      %p103 = scmp.ne.s32.totalorder %s95, %s98
      %p104 = scmp.eq.s32.totalorder %s12, 0
      %p105 = por %p103, %p104
      %p106 = scmp.ne.s32.totalorder %s95, %s98
      %p107 = scmp.eq.s32.totalorder %s17, 1
      %p108 = por %p106, %p107
      %p109 = scmp.ne.s32.totalorder %s98, %s99
      %p110 = scmp.eq.s32.totalorder %s17, 0
      %p111 = por %p109, %p110
      %p112 = scmp.ne.s32.totalorder %s98, %s99
      %p113 = scmp.eq.s32.totalorder %s18, 1
      %p114 = por %p112, %p113
      %p116 = scmp.ne.s32.totalorder %s99, %s115
      %p117 = scmp.eq.s32.totalorder %s18, 0
      %p118 = por %p116, %p117
      %s119 = ssub.s32 %s19, %s38
      %s120 = ssub.s32 %s20, %s34
      %s121 = sor.u32 %s119, %s120
      %s122 = ssub.s32 %s21, %s30
      %s123 = sor.u32 %s121, %s122
      %p124 = scmp.eq.s32.totalorder %s123, 0
      %s126 = sadd.s32 %s125, 1
      %s127 = scalar_select %p124, %s125, %s126
      %p130 = pneg %p124
      %p131 = scmp.eq.s32.totalorder %s12, 1
      %p132 = por %p130, %p131
      %p133 = scmp.ne.s32.totalorder %s125, %s128
      %p134 = scmp.eq.s32.totalorder %s12, 0
      %p135 = por %p133, %p134
      %p136 = scmp.ne.s32.totalorder %s125, %s128
      %p137 = scmp.eq.s32.totalorder %s17, 1
      %p138 = por %p136, %p137
      %p139 = scmp.ne.s32.totalorder %s128, %s129
      %p140 = scmp.eq.s32.totalorder %s17, 0
      %p141 = por %p139, %p140
      %p142 = scmp.ne.s32.totalorder %s128, %s129
      %p143 = scmp.eq.s32.totalorder %s18, 1
      %p144 = por %p142, %p143
      %p146 = scmp.ne.s32.totalorder %s129, %s145
      %p147 = scmp.eq.s32.totalorder %s18, 0
      %p148 = por %p146, %p147
      %p149 = scmp.le.s32.totalorder 1, %s12
      %p150 = scmp.lt.s32.totalorder %s12, 3
      %p151 = pnand %p149, %p150
      %p152 = pneg %p151
      // Predicated region
      $region9: #{tpu_custom_call.1} parent=5 // pred_check
        _
      $region10: #{tpu_custom_call.1} parent=5 // pred_check_branch
        %154 = sbr.rel (%p151) target = $region12
      $region11: #{tpu_custom_call.1} parent=5 // pred_region
        %s155 = ssub.s32 %s12, 1
        // Predicated region
        $region13: #{tpu_custom_call.1} parent=11 // pred_check
          %p156 = pneg %p85
        $region14: #{tpu_custom_call.1} parent=11 // pred_check_branch
          %158 = sbr.rel (%p156) target = $region16
        $region15: #{tpu_custom_call.1} parent=11 // pred_region
          %p159 = scmp.lt.s32.totalorder %s24, 0
          %s160 = scalar_select %p159, %s24, 0
          %s161 = smul.addr %s160, 4
          %s162 = scalar_lea.vmem %s1, %s161
        $region16: #{tpu_custom_call.1} parent=11 // pred_fallthru
          _
        // Predicated region
        $region17: #{tpu_custom_call.1} parent=11 // pred_check
          %p163 = pneg %p111
        $region18: #{tpu_custom_call.1} parent=11 // pred_check_branch
          %165 = sbr.rel (%p163) target = $region20
        $region19: #{tpu_custom_call.1} parent=11 // pred_region
          %p166 = scmp.lt.s32.totalorder %s24, 0
          %s167 = scalar_select %p166, %s24, 0
          %s168 = scalar_lea.vmem %s2, %s167
        $region20: #{tpu_custom_call.1} parent=11 // pred_fallthru
          _
      $region12: #{tpu_custom_call.1} parent=5 // pred_fallthru
        _
      %p169 = scmp.lt.s32.totalorder %s12, 2
      // Predicated region
      $region21: #{tpu_custom_call.1} parent=5 // pred_check
        %p170 = pneg %p169
      $region22: #{tpu_custom_call.1} parent=5 // pred_check_branch
        %172 = sbr.rel (%p170) target = $region24
      $region23: #{tpu_custom_call.1} parent=5 // pred_region
        // Predicated region
        $region25: #{tpu_custom_call.1} parent=23 // pred_check
          %p173 = pneg %p53
        $region26: #{tpu_custom_call.1} parent=23 // pred_check_branch
          %175 = sbr.rel (%p173) target = $region28
        $region27: #{tpu_custom_call.1} parent=23 // pred_region
          %p176 = scmp.lt.s32.totalorder %s19, 1
          %s177 = scalar_select %p176, %s19, 1
          %p178 = scmp.lt.s32.totalorder %s20, 0
          %s179 = scalar_select %p178, %s20, 0
          %s180 = smul.addr %s179, 54
          %s181 = smul.addr %s177, 54
          %s182 = sadd.s32 %s180, %s181
          %s183 = smul.addr %s182, 4
          %s184 = scalar_lea.vmem %s0, %s183
        $region28: #{tpu_custom_call.1} parent=23 // pred_fallthru
          _
      $region24: #{tpu_custom_call.1} parent=5 // pred_fallthru
        _
      %p185 = scmp.le.s32.totalorder 1, %s12
      %p186 = scmp.lt.s32.totalorder %s12, 3
      %p187 = pnand %p185, %p186
      %p188 = pneg %p187
      // Predicated region
      $region29: #{tpu_custom_call.1} parent=5 // pred_check
        _
      $region30: #{tpu_custom_call.1} parent=5 // pred_check_branch
        %190 = sbr.rel (%p187) target = $region32
      $region31: #{tpu_custom_call.1} parent=5 // pred_region
        %s191 = ssub.s32 %s12, 1
        %p192 = scmp.lt.s32.totalorder %s22, 1
        %s193 = scalar_select %p192, %s22, 1
        %p194 = scmp.lt.s32.totalorder %s23, 0
        %s195 = scalar_select %p194, %s23, 0
        %s196 = smul.addr %s195, 54
        %s197 = smul.addr %s193, 54
        %s198 = sadd.s32 %s196, %s197
        %s199 = smul.addr %s198, 4
        %s200 = scalar_lea.vmem %s0, %s199
        %p201 = pneg %p59
        %p202 = pneg %p56
        %p203 = scmp.lt.s32.totalorder %s24, 0
        %s204 = scalar_select %p203, %s24, 0
        %s205 = smul.addr %s204, 4
        %s206 = scalar_lea.vmem %s1, %s205
        %p207 = pneg %p85
        %p208 = pneg %p82
        %p209 = scmp.lt.s32.totalorder %s24, 0
        %s210 = scalar_select %p209, %s24, 0
        %s211 = scalar_lea.vmem %s2, %s210
        %p212 = pneg %p111
        %p213 = pneg %p108
        %p214 = pneg %p141
        %p215 = pneg %p138
        %s216 = sand.u32 %s128, 1
        %s217 = scalar_lea.sflag [#allocation3], %s216
        %s218 = sand.u32 %s128, 1
        %s219 = smul.addr %s218, 128
        %s220 = scalar_lea.vmem [#allocation2], %s219
        %p221 = scmp.lt.s32.totalorder %s22, 1
        %s222 = scalar_select %p221, %s22, 1
        %p223 = scmp.lt.s32.totalorder %s23, 0
        %s224 = scalar_select %p223, %s23, 0
        %s225 = smul.addr %s224, 54
        %s226 = smul.addr %s222, 54
        %s227 = sadd.s32 %s225, %s226
        %s228 = smul.addr %s227, 4
        %s229 = scalar_lea.vmem %s0, %s228
        %p230 = scmp.lt.s32.totalorder %s24, 0
        %s231 = scalar_select %p230, %s24, 0
        %s232 = smul.addr %s231, 4
        %s233 = scalar_lea.vmem %s1, %s232
        %p234 = scmp.lt.s32.totalorder %s24, 0
        %s235 = scalar_select %p234, %s24, 0
        %s236 = scalar_lea.vmem %s2, %s235
        %v238 = vld [vmem:[%s229] sm:$0xf]
        %v239 = vld [vmem:[%s229 + $0x4] sm:$0xf]
        %v240 = vld [vmem:[%s229 + $0xc] sm:$0xf]
        %v241 = vld [vmem:[%s229 + $0x10] sm:$0xf]
        %v242 = vld [vmem:[%s229 + $0x18] sm:$0xf]
        %v243 = vld [vmem:[%s229 + $0x1c] sm:$0xf]
        %v244 = vld [vmem:[%s229 + $0x24] sm:$0xf]
        %v245 = vld [vmem:[%s229 + $0x28] sm:$0xf]
        %v246 = vld [vmem:[%s229 + $0x30] sm:$0xf]
        %v247 = vld [vmem:[%s229 + $0x34] sm:$0xf]
        %v248 = vld [vmem:[%s229 + $0x3c] sm:$0xf]
        %v249 = vld [vmem:[%s229 + $0x40] sm:$0xf]
        %v250 = vld [vmem:[%s229 + $0x48] sm:$0xf]
        %v251 = vld [vmem:[%s229 + $0x4c] sm:$0xf]
        %v252 = vld [vmem:[%s229 + $0x54] sm:$0xf]
        %v253 = vld [vmem:[%s229 + $0x58] sm:$0xf]
        %v254 = vld [vmem:[%s229 + $0x60] sm:$0xf]
        %v255 = vld [vmem:[%s229 + $0x64] sm:$0xf]
        %v256 = vld [vmem:[%s229 + $0x6c] sm:$0xf]
        %v257 = vld [vmem:[%s229 + $0x70] sm:$0xf]
        %v258 = vld [vmem:[%s229 + $0x78] sm:$0xf]
        %v259 = vld [vmem:[%s229 + $0x7c] sm:$0xf]
        %v260 = vld [vmem:[%s229 + $0x84] sm:$0xf]
        %v261 = vld [vmem:[%s229 + $0x88] sm:$0xf]
        %v262 = vld [vmem:[%s229 + $0x90] sm:$0xf]
        %v263 = vld [vmem:[%s229 + $0x94] sm:$0xf]
        %v264 = vld [vmem:[%s229 + $0x9c] sm:$0xf]
        %v265 = vld [vmem:[%s229 + $0xa0] sm:$0xf]
        %v266 = vld [vmem:[%s229 + $0xa8] sm:$0xf]
        %v267 = vld [vmem:[%s229 + $0xac] sm:$0xf]
        %v268 = vld [vmem:[%s229 + $0xb4] sm:$0xf]
        %v269 = vld [vmem:[%s229 + $0xb8] sm:$0xf]
        %v270 = vld [vmem:[%s233] sm:$0xf]
        %v271 = vld [vmem:[%s233 + $0x4] sm:$0xf]
        %v272 = vld [vmem:[%s233 + $0x8] sm:$0xf]
        %v273 = vld [vmem:[%s233 + $0xc] sm:$0xf]
        %v274 = vld [vmem:[%s233 + $0x10] sm:$0xf]
        %v275 = vld [vmem:[%s233 + $0x14] sm:$0xf]
        %v276 = vld [vmem:[%s233 + $0x18] sm:$0xf]
        %v277 = vld [vmem:[%s233 + $0x1c] sm:$0xf]
        %v278 = vld [vmem:[%s233 + $0x20] sm:$0xf]
        %v279 = vld [vmem:[%s233 + $0x24] sm:$0xf]
        %v280 = vld [vmem:[%s233 + $0x28] sm:$0xf]
        %v281 = vld [vmem:[%s233 + $0x2c] sm:$0xf]
        %v282 = vld [vmem:[%s233 + $0x30] sm:$0xf]
        %v283 = vld [vmem:[%s233 + $0x34] sm:$0xf]
        %v284 = vld [vmem:[%s233 + $0x38] sm:$0xf]
        %v285 = vld [vmem:[%s233 + $0x3c] sm:$0xf]
        %v286 = vld [vmem:[%s229 + $0x8] sm:$0x1]
        %v287 = vld [vmem:[%s229 + $0x14] sm:$0x1]
        %v288 = vld [vmem:[%s229 + $0x20] sm:$0x1]
        %v289 = vld [vmem:[%s229 + $0x2c] sm:$0x1]
        %v290 = vld [vmem:[%s229 + $0x38] sm:$0x1]
        %v291 = vld [vmem:[%s229 + $0x44] sm:$0x1]
        %v292 = vld [vmem:[%s229 + $0x50] sm:$0x1]
        %v293 = vld [vmem:[%s229 + $0x5c] sm:$0x1]
        %v294 = vld [vmem:[%s229 + $0x68] sm:$0x1]
        %v295 = vld [vmem:[%s229 + $0x74] sm:$0x1]
        %v296 = vld [vmem:[%s229 + $0x80] sm:$0x1]
        %v297 = vld [vmem:[%s229 + $0x8c] sm:$0x1]
        %v298 = vld [vmem:[%s229 + $0x98] sm:$0x1]
        %v299 = vld [vmem:[%s229 + $0xa4] sm:$0x1]
        %v300 = vld [vmem:[%s229 + $0xb0] sm:$0x1]
        %v301 = vld [vmem:[%s229 + $0xbc] sm:$0x1]
        %vm302 = vsmask.f32 3328
        %vm303 = vsmask.f32 7440
        %vm304 = vmor %vm302, %vm303
        %v306 = vshrl.u32 %v238, 16
        %v308 = vrot.slane %v306, 4
        %v309 = vshll.u32 %v238, 16
        %v311 = vrot.slane %v309, 5
        %v312 = vor.u32 %v308, %v311
        %v313 = vrot.slane %v312, 4
        %v315 = vshll.u32 %v239, 16
        %v317 = vrot.slane %v315, 5
        %v318 = vsel %vm304, %v313, %v317
        %v319 = vshrl.u32 %v239, 16
        %v321 = vrot.slane %v319, 4
        %v322 = vor.u32 %v321, %v317
        %v323 = vrot.slane %v322, 4
        %v325 = vshll.u32 %v286, 16
        %v327 = vrot.slane %v325, 5
        %v328 = vsel %vm304, %v323, %v327
        %v330 = vshrl.u32 %v240, 16
        %v332 = vrot.slane %v330, 4
        %v333 = vshll.u32 %v240, 16
        %v335 = vrot.slane %v333, 5
        %v336 = vor.u32 %v332, %v335
        %v337 = vrot.slane %v336, 4
        %v339 = vshll.u32 %v241, 16
        %v341 = vrot.slane %v339, 5
        %v342 = vsel %vm304, %v337, %v341
        %v343 = vshrl.u32 %v241, 16
        %v345 = vrot.slane %v343, 4
        %v346 = vor.u32 %v345, %v341
        %v347 = vrot.slane %v346, 4
        %v349 = vshll.u32 %v287, 16
        %v351 = vrot.slane %v349, 5
        %v352 = vsel %vm304, %v347, %v351
        %v354 = vshrl.u32 %v242, 16
        %v356 = vrot.slane %v354, 4
        %v357 = vshll.u32 %v242, 16
        %v359 = vrot.slane %v357, 5
        %v360 = vor.u32 %v356, %v359
        %v361 = vrot.slane %v360, 4
        %v363 = vshll.u32 %v243, 16
        %v365 = vrot.slane %v363, 5
        %v366 = vsel %vm304, %v361, %v365
        %v367 = vshrl.u32 %v243, 16
        %v369 = vrot.slane %v367, 4
        %v370 = vor.u32 %v369, %v365
        %v371 = vrot.slane %v370, 4
        %v373 = vshll.u32 %v288, 16
        %v375 = vrot.slane %v373, 5
        %v376 = vsel %vm304, %v371, %v375
        %v378 = vshrl.u32 %v244, 16
        %v380 = vrot.slane %v378, 4
        %v381 = vshll.u32 %v244, 16
        %v383 = vrot.slane %v381, 5
        %v384 = vor.u32 %v380, %v383
        %v385 = vrot.slane %v384, 4
        %v387 = vshll.u32 %v245, 16
        %v389 = vrot.slane %v387, 5
        %v390 = vsel %vm304, %v385, %v389
        %v391 = vshrl.u32 %v245, 16
        %v393 = vrot.slane %v391, 4
        %v394 = vor.u32 %v393, %v389
        %v395 = vrot.slane %v394, 4
        %v397 = vshll.u32 %v289, 16
        %v399 = vrot.slane %v397, 5
        %v400 = vsel %vm304, %v395, %v399
        %v402 = vshrl.u32 %v246, 16
        %v404 = vrot.slane %v402, 4
        %v405 = vshll.u32 %v246, 16
        %v407 = vrot.slane %v405, 5
        %v408 = vor.u32 %v404, %v407
        %v409 = vrot.slane %v408, 4
        %v411 = vshll.u32 %v247, 16
        %v413 = vrot.slane %v411, 5
        %v414 = vsel %vm304, %v409, %v413
        %v415 = vshrl.u32 %v247, 16
        %v417 = vrot.slane %v415, 4
        %v418 = vor.u32 %v417, %v413
        %v419 = vrot.slane %v418, 4
        %v421 = vshll.u32 %v290, 16
        %v423 = vrot.slane %v421, 5
        %v424 = vsel %vm304, %v419, %v423
        %v426 = vshrl.u32 %v248, 16
        %v428 = vrot.slane %v426, 4
        %v429 = vshll.u32 %v248, 16
        %v431 = vrot.slane %v429, 5
        %v432 = vor.u32 %v428, %v431
        %v433 = vrot.slane %v432, 4
        %v435 = vshll.u32 %v249, 16
        %v437 = vrot.slane %v435, 5
        %v438 = vsel %vm304, %v433, %v437
        %v439 = vshrl.u32 %v249, 16
        %v441 = vrot.slane %v439, 4
        %v442 = vor.u32 %v441, %v437
        %v443 = vrot.slane %v442, 4
        %v445 = vshll.u32 %v291, 16
        %v447 = vrot.slane %v445, 5
        %v448 = vsel %vm304, %v443, %v447
        %v450 = vshrl.u32 %v250, 16
        %v452 = vrot.slane %v450, 4
        %v453 = vshll.u32 %v250, 16
        %v455 = vrot.slane %v453, 5
        %v456 = vor.u32 %v452, %v455
        %v457 = vrot.slane %v456, 4
        %v459 = vshll.u32 %v251, 16
        %v461 = vrot.slane %v459, 5
        %v462 = vsel %vm304, %v457, %v461
        %v463 = vshrl.u32 %v251, 16
        %v465 = vrot.slane %v463, 4
        %v466 = vor.u32 %v465, %v461
        %v467 = vrot.slane %v466, 4
        %v469 = vshll.u32 %v292, 16
        %v471 = vrot.slane %v469, 5
        %v472 = vsel %vm304, %v467, %v471
        %v474 = vshrl.u32 %v252, 16
        %v476 = vrot.slane %v474, 4
        %v477 = vshll.u32 %v252, 16
        %v479 = vrot.slane %v477, 5
        %v480 = vor.u32 %v476, %v479
        %v481 = vrot.slane %v480, 4
        %v483 = vshll.u32 %v253, 16
        %v485 = vrot.slane %v483, 5
        %v486 = vsel %vm304, %v481, %v485
        %v487 = vshrl.u32 %v253, 16
        %v489 = vrot.slane %v487, 4
        %v490 = vor.u32 %v489, %v485
        %v491 = vrot.slane %v490, 4
        %v493 = vshll.u32 %v293, 16
        %v495 = vrot.slane %v493, 5
        %v496 = vsel %vm304, %v491, %v495
        %v498 = vshrl.u32 %v254, 16
        %v500 = vrot.slane %v498, 4
        %v501 = vshll.u32 %v254, 16
        %v503 = vrot.slane %v501, 5
        %v504 = vor.u32 %v500, %v503
        %v505 = vrot.slane %v504, 4
        %v507 = vshll.u32 %v255, 16
        %v509 = vrot.slane %v507, 5
        %v510 = vsel %vm304, %v505, %v509
        %v511 = vshrl.u32 %v255, 16
        %v513 = vrot.slane %v511, 4
        %v514 = vor.u32 %v513, %v509
        %v515 = vrot.slane %v514, 4
        %v517 = vshll.u32 %v294, 16
        %v519 = vrot.slane %v517, 5
        %v520 = vsel %vm304, %v515, %v519
        %v522 = vshrl.u32 %v256, 16
        %v524 = vrot.slane %v522, 4
        %v525 = vshll.u32 %v256, 16
        %v527 = vrot.slane %v525, 5
        %v528 = vor.u32 %v524, %v527
        %v529 = vrot.slane %v528, 4
        %v531 = vshll.u32 %v257, 16
        %v533 = vrot.slane %v531, 5
        %v534 = vsel %vm304, %v529, %v533
        %v535 = vshrl.u32 %v257, 16
        %v537 = vrot.slane %v535, 4
        %v538 = vor.u32 %v537, %v533
        %v539 = vrot.slane %v538, 4
        %v541 = vshll.u32 %v295, 16
        %v543 = vrot.slane %v541, 5
        %v544 = vsel %vm304, %v539, %v543
        %v546 = vshrl.u32 %v258, 16
        %v548 = vrot.slane %v546, 4
        %v549 = vshll.u32 %v258, 16
        %v551 = vrot.slane %v549, 5
        %v552 = vor.u32 %v548, %v551
        %v553 = vrot.slane %v552, 4
        %v555 = vshll.u32 %v259, 16
        %v557 = vrot.slane %v555, 5
        %v558 = vsel %vm304, %v553, %v557
        %v559 = vshrl.u32 %v259, 16
        %v561 = vrot.slane %v559, 4
        %v562 = vor.u32 %v561, %v557
        %v563 = vrot.slane %v562, 4
        %v565 = vshll.u32 %v296, 16
        %v567 = vrot.slane %v565, 5
        %v568 = vsel %vm304, %v563, %v567
        %v570 = vshrl.u32 %v260, 16
        %v572 = vrot.slane %v570, 4
        %v573 = vshll.u32 %v260, 16
        %v575 = vrot.slane %v573, 5
        %v576 = vor.u32 %v572, %v575
        %v577 = vrot.slane %v576, 4
        %v579 = vshll.u32 %v261, 16
        %v581 = vrot.slane %v579, 5
        %v582 = vsel %vm304, %v577, %v581
        %v583 = vshrl.u32 %v261, 16
        %v585 = vrot.slane %v583, 4
        %v586 = vor.u32 %v585, %v581
        %v587 = vrot.slane %v586, 4
        %v589 = vshll.u32 %v297, 16
        %v591 = vrot.slane %v589, 5
        %v592 = vsel %vm304, %v587, %v591
        %v594 = vshrl.u32 %v262, 16
        %v596 = vrot.slane %v594, 4
        %v597 = vshll.u32 %v262, 16
        %v599 = vrot.slane %v597, 5
        %v600 = vor.u32 %v596, %v599
        %v601 = vrot.slane %v600, 4
        %v603 = vshll.u32 %v263, 16
        %v605 = vrot.slane %v603, 5
        %v606 = vsel %vm304, %v601, %v605
        %v607 = vshrl.u32 %v263, 16
        %v609 = vrot.slane %v607, 4
        %v610 = vor.u32 %v609, %v605
        %v611 = vrot.slane %v610, 4
        %v613 = vshll.u32 %v298, 16
        %v615 = vrot.slane %v613, 5
        %v616 = vsel %vm304, %v611, %v615
        %v618 = vshrl.u32 %v264, 16
        %v620 = vrot.slane %v618, 4
        %v621 = vshll.u32 %v264, 16
        %v623 = vrot.slane %v621, 5
        %v624 = vor.u32 %v620, %v623
        %v625 = vrot.slane %v624, 4
        %v627 = vshll.u32 %v265, 16
        %v629 = vrot.slane %v627, 5
        %v630 = vsel %vm304, %v625, %v629
        %v631 = vshrl.u32 %v265, 16
        %v633 = vrot.slane %v631, 4
        %v634 = vor.u32 %v633, %v629
        %v635 = vrot.slane %v634, 4
        %v637 = vshll.u32 %v299, 16
        %v639 = vrot.slane %v637, 5
        %v640 = vsel %vm304, %v635, %v639
        %v642 = vshrl.u32 %v266, 16
        %v644 = vrot.slane %v642, 4
        %v645 = vshll.u32 %v266, 16
        %v647 = vrot.slane %v645, 5
        %v648 = vor.u32 %v644, %v647
        %v649 = vrot.slane %v648, 4
        %v651 = vshll.u32 %v267, 16
        %v653 = vrot.slane %v651, 5
        %v654 = vsel %vm304, %v649, %v653
        %v655 = vshrl.u32 %v267, 16
        %v657 = vrot.slane %v655, 4
        %v658 = vor.u32 %v657, %v653
        %v659 = vrot.slane %v658, 4
        %v661 = vshll.u32 %v300, 16
        %v663 = vrot.slane %v661, 5
        %v664 = vsel %vm304, %v659, %v663
        %v666 = vshrl.u32 %v268, 16
        %v668 = vrot.slane %v666, 4
        %v669 = vshll.u32 %v268, 16
        %v671 = vrot.slane %v669, 5
        %v672 = vor.u32 %v668, %v671
        %v673 = vrot.slane %v672, 4
        %v675 = vshll.u32 %v269, 16
        %v677 = vrot.slane %v675, 5
        %v678 = vsel %vm304, %v673, %v677
        %v679 = vshrl.u32 %v269, 16
        %v681 = vrot.slane %v679, 4
        %v682 = vor.u32 %v681, %v677
        %v683 = vrot.slane %v682, 4
        %v685 = vshll.u32 %v301, 16
        %v687 = vrot.slane %v685, 5
        %v688 = vsel %vm304, %v683, %v687
        %s689 = scalar_lea.vmem %s233, 64
        %v690 = vld [vmem:[%s689] sm:$0xf]
        %v691 = vld [vmem:[%s689 + $0x4] sm:$0xf]
        %v692 = vld [vmem:[%s689 + $0x8] sm:$0xf]
        %v693 = vld [vmem:[%s689 + $0xc] sm:$0xf]
        %v694 = vld [vmem:[%s689 + $0x10] sm:$0xf]
        %v695 = vld [vmem:[%s689 + $0x14] sm:$0xf]
        %v696 = vld [vmem:[%s689 + $0x18] sm:$0xf]
        %v697 = vld [vmem:[%s689 + $0x1c] sm:$0xf]
        %v698 = vld [vmem:[%s689 + $0x20] sm:$0xf]
        %v699 = vld [vmem:[%s689 + $0x24] sm:$0xf]
        %v700 = vld [vmem:[%s689 + $0x28] sm:$0xf]
        %v701 = vld [vmem:[%s689 + $0x2c] sm:$0xf]
        %v702 = vld [vmem:[%s689 + $0x30] sm:$0xf]
        %v703 = vld [vmem:[%s689 + $0x34] sm:$0xf]
        %v704 = vld [vmem:[%s689 + $0x38] sm:$0xf]
        %v705 = vld [vmem:[%s689 + $0x3c] sm:$0xf]
        %v706 = vunpack.c.l.b16 %v318
        %v707 = vunpack.c.l.b16 %v328
        %v708 = vunpack.c.l.b16 %v342
        %v709 = vunpack.c.l.b16 %v352
        %v710 = vunpack.c.l.b16 %v366
        %v711 = vunpack.c.l.b16 %v376
        %v712 = vunpack.c.l.b16 %v390
        %v713 = vunpack.c.l.b16 %v400
        %v714 = vunpack.c.l.b16 %v414
        %v715 = vunpack.c.l.b16 %v424
        %v716 = vunpack.c.l.b16 %v438
        %v717 = vunpack.c.l.b16 %v448
        %v718 = vunpack.c.l.b16 %v462
        %v719 = vunpack.c.l.b16 %v472
        %v720 = vunpack.c.l.b16 %v486
        %v721 = vunpack.c.l.b16 %v496
        %v722 = vunpack.c.l.b16 %v510
        %v723 = vunpack.c.l.b16 %v520
        %v724 = vunpack.c.l.b16 %v534
        %v725 = vunpack.c.l.b16 %v544
        %v726 = vunpack.c.l.b16 %v558
        %v727 = vunpack.c.l.b16 %v568
        %v728 = vunpack.c.l.b16 %v582
        %v729 = vunpack.c.l.b16 %v592
        %v730 = vunpack.c.l.b16 %v606
        %v731 = vunpack.c.l.b16 %v616
        %v732 = vunpack.c.l.b16 %v630
        %v733 = vunpack.c.l.b16 %v640
        %v734 = vunpack.c.l.b16 %v654
        %v735 = vunpack.c.l.b16 %v664
        %v736 = vunpack.c.l.b16 %v678
        %v737 = vunpack.c.l.b16 %v688
        %v738 = vpack.c.b16 %v707, %v706
        %v739 = vpack.c.b16 %v709, %v708
        %v740 = vpack.c.b16 %v711, %v710
        %v741 = vpack.c.b16 %v713, %v712
        %v742 = vpack.c.b16 %v715, %v714
        %v743 = vpack.c.b16 %v717, %v716
        %v744 = vpack.c.b16 %v719, %v718
        %v745 = vpack.c.b16 %v721, %v720
        %v746 = vpack.c.b16 %v723, %v722
        %v747 = vpack.c.b16 %v725, %v724
        %v748 = vpack.c.b16 %v727, %v726
        %v749 = vpack.c.b16 %v729, %v728
        %v750 = vpack.c.b16 %v731, %v730
        %v751 = vpack.c.b16 %v733, %v732
        %v752 = vpack.c.b16 %v735, %v734
        %v753 = vpack.c.b16 %v737, %v736
        %v786 = vunpack.c.l.b16 %v690
        %v787 = vunpack.c.l.b16 %v691
        %v788 = vunpack.c.l.b16 %v692
        %v789 = vunpack.c.l.b16 %v693
        %v790 = vunpack.c.l.b16 %v694
        %v791 = vunpack.c.l.b16 %v695
        %v792 = vunpack.c.l.b16 %v696
        %v793 = vunpack.c.l.b16 %v697
        %v794 = vunpack.c.l.b16 %v698
        %v795 = vunpack.c.l.b16 %v699
        %v796 = vunpack.c.l.b16 %v700
        %v797 = vunpack.c.l.b16 %v701
        %v798 = vunpack.c.l.b16 %v702
        %v799 = vunpack.c.l.b16 %v703
        %v800 = vunpack.c.l.b16 %v704
        %v801 = vunpack.c.l.b16 %v705
        %v802 = vpack.c.b16 %v787, %v786
        %v803 = vpack.c.b16 %v789, %v788
        %v804 = vpack.c.b16 %v791, %v790
        %v805 = vpack.c.b16 %v793, %v792
        %v806 = vpack.c.b16 %v795, %v794
        %v807 = vpack.c.b16 %v797, %v796
        %v808 = vpack.c.b16 %v799, %v798
        %v809 = vpack.c.b16 %v801, %v800
        %818 = vmatprep.subr.bf16.mxu0 0
        %819 = vmatpush1.bf16.msra.mxu0 %v802
        %820 = vmatprep.subr.bf16.mxu0 0
        %821 = vmatpush1.bf16.msra.mxu0 %v803
        %822 = vmatprep.subr.bf16.mxu0 0
        %823 = vmatpush1.bf16.msra.mxu0 %v804
        %824 = vmatprep.subr.bf16.mxu0 0
        %825 = vmatpush1.bf16.msra.mxu0 %v805
        %826 = vmatprep.subr.bf16.mxu0 0
        %827 = vmatpush1.bf16.msra.mxu0 %v806
        %828 = vmatprep.subr.bf16.mxu0 0
        %829 = vmatpush1.bf16.msra.mxu0 %v807
        %830 = vmatprep.subr.bf16.mxu0 0
        %831 = vmatpush1.bf16.msra.mxu0 %v808
        %832 = vmatprep.subr.bf16.mxu0 0
        %833 = vmatpush1.bf16.msra.mxu0 %v809
        %834 = vmatprep.subr.bf16.mxu0 0
        %835 = vmatpush1.bf16.msra.mxu0 0
        %836 = vmatprep.subr.bf16.mxu0 0
        %837 = vmatpush1.bf16.msra.mxu0 0
        %838 = vmatprep.subr.bf16.mxu0 0
        %839 = vmatpush1.bf16.msra.mxu0 0
        %840 = vmatprep.subr.bf16.mxu0 0
        %841 = vmatpush1.bf16.msra.mxu0 0
        %842 = vmatprep.subr.bf16.mxu0 0
        %843 = vmatpush1.bf16.msra.mxu0 0
        %844 = vmatprep.subr.bf16.mxu0 0
        %845 = vmatpush1.bf16.msra.mxu0 0
        %846 = vmatprep.subr.bf16.mxu0 0
        %847 = vmatpush1.bf16.msra.mxu0 0
        %848 = vmatprep.subr.bf16.mxu0 0
        %849 = vmatpush1.bf16.msra.mxu0 0
        %850 = vmatprep.mubr.bf16.mxu0 0
        %851 = vmatmul.mubr.bf16.gmra.mrb[0].mxu0 %v738
        %v852 = vpop.f32.mrb[0].mxu0
        %v853 = vadd.f32 0.0, %v852
        %v854 = vpop.f32.mrb[0].mxu0
        %v855 = vpop.f32.mrb[0].mxu0
        %v856 = vadd.f32 0.0, %v855
        %v857 = vpop.f32.mrb[0].mxu0
        %858 = vmatprep.mubr.bf16.mxu0 0
        %859 = vmatmul.mubr.bf16.gmra.mrb[0].mxu0 %v739
        %v860 = vpop.f32.mrb[0].mxu0
        %v861 = vadd.f32 0.0, %v860
        %v862 = vpop.f32.mrb[0].mxu0
        %v863 = vpop.f32.mrb[0].mxu0
        %v864 = vadd.f32 0.0, %v863
        %v865 = vpop.f32.mrb[0].mxu0
        %866 = vmatprep.mubr.bf16.mxu0 0
        %867 = vmatmul.mubr.bf16.gmra.mrb[0].mxu0 %v740
        %v868 = vpop.f32.mrb[0].mxu0
        %v869 = vadd.f32 0.0, %v868
        %v870 = vpop.f32.mrb[0].mxu0
        %v871 = vpop.f32.mrb[0].mxu0
        %v872 = vadd.f32 0.0, %v871
        %v873 = vpop.f32.mrb[0].mxu0
        %874 = vmatprep.mubr.bf16.mxu0 0
        %875 = vmatmul.mubr.bf16.gmra.mrb[0].mxu0 %v741
        %v876 = vpop.f32.mrb[0].mxu0
        %v877 = vadd.f32 0.0, %v876
        %v878 = vpop.f32.mrb[0].mxu0
        %v879 = vpop.f32.mrb[0].mxu0
        %v880 = vadd.f32 0.0, %v879
        %v881 = vpop.f32.mrb[0].mxu0
        %882 = vmatprep.mubr.bf16.mxu0 0
        %883 = vmatmul.mubr.bf16.gmra.mrb[0].mxu0 %v742
        %v884 = vpop.f32.mrb[0].mxu0
        %v885 = vadd.f32 0.0, %v884
        %v886 = vpop.f32.mrb[0].mxu0
        %v887 = vpop.f32.mrb[0].mxu0
        %v888 = vadd.f32 0.0, %v887
        %v889 = vpop.f32.mrb[0].mxu0
        %890 = vmatprep.mubr.bf16.mxu0 0
        %891 = vmatmul.mubr.bf16.gmra.mrb[0].mxu0 %v743
        %v892 = vpop.f32.mrb[0].mxu0
        %v893 = vadd.f32 0.0, %v892
        %v894 = vpop.f32.mrb[0].mxu0
        %v895 = vpop.f32.mrb[0].mxu0
        %v896 = vadd.f32 0.0, %v895
        %v897 = vpop.f32.mrb[0].mxu0
        %898 = vmatprep.mubr.bf16.mxu0 0
        %899 = vmatmul.mubr.bf16.gmra.mrb[0].mxu0 %v744
        %v900 = vpop.f32.mrb[0].mxu0
        %v901 = vadd.f32 0.0, %v900
        %v902 = vpop.f32.mrb[0].mxu0
        %v903 = vpop.f32.mrb[0].mxu0
        %v904 = vadd.f32 0.0, %v903
        %v905 = vpop.f32.mrb[0].mxu0
        %906 = vmatprep.mubr.bf16.mxu0 0
        %907 = vmatmul.mubr.bf16.gmra.mrb[0].mxu0 %v745
        %v908 = vpop.f32.mrb[0].mxu0
        %v909 = vadd.f32 0.0, %v908
        %v910 = vpop.f32.mrb[0].mxu0
        %v911 = vpop.f32.mrb[0].mxu0
        %v912 = vadd.f32 0.0, %v911
        %v913 = vpop.f32.mrb[0].mxu0
        %914 = vmatprep.mubr.bf16.mxu0 0
        %915 = vmatmul.mubr.bf16.gmra.mrb[0].mxu0 %v746
        %v916 = vpop.f32.mrb[0].mxu0
        %v917 = vadd.f32 0.0, %v916
        %v918 = vpop.f32.mrb[0].mxu0
        %v919 = vpop.f32.mrb[0].mxu0
        %v920 = vadd.f32 0.0, %v919
        %v921 = vpop.f32.mrb[0].mxu0
        %922 = vmatprep.mubr.bf16.mxu0 0
        %923 = vmatmul.mubr.bf16.gmra.mrb[0].mxu0 %v747
        %v924 = vpop.f32.mrb[0].mxu0
        %v925 = vadd.f32 0.0, %v924
        %v926 = vpop.f32.mrb[0].mxu0
        %v927 = vpop.f32.mrb[0].mxu0
        %v928 = vadd.f32 0.0, %v927
        %v929 = vpop.f32.mrb[0].mxu0
        %930 = vmatprep.mubr.bf16.mxu0 0
        %931 = vmatmul.mubr.bf16.gmra.mrb[0].mxu0 %v748
        %v932 = vpop.f32.mrb[0].mxu0
        %v933 = vadd.f32 0.0, %v932
        %v934 = vpop.f32.mrb[0].mxu0
        %v935 = vpop.f32.mrb[0].mxu0
        %v936 = vadd.f32 0.0, %v935
        %v937 = vpop.f32.mrb[0].mxu0
        %938 = vmatprep.mubr.bf16.mxu0 0
        %939 = vmatmul.mubr.bf16.gmra.mrb[0].mxu0 %v749
        %v940 = vpop.f32.mrb[0].mxu0
        %v941 = vadd.f32 0.0, %v940
        %v942 = vpop.f32.mrb[0].mxu0
        %v943 = vpop.f32.mrb[0].mxu0
        %v944 = vadd.f32 0.0, %v943
        %v945 = vpop.f32.mrb[0].mxu0
        %946 = vmatprep.mubr.bf16.mxu0 0
        %947 = vmatmul.mubr.bf16.gmra.mrb[0].mxu0 %v750
        %v948 = vpop.f32.mrb[0].mxu0
        %v949 = vadd.f32 0.0, %v948
        %v950 = vpop.f32.mrb[0].mxu0
        %v951 = vpop.f32.mrb[0].mxu0
        %v952 = vadd.f32 0.0, %v951
        %v953 = vpop.f32.mrb[0].mxu0
        %954 = vmatprep.mubr.bf16.mxu0 0
        %955 = vmatmul.mubr.bf16.gmra.mrb[0].mxu0 %v751
        %v956 = vpop.f32.mrb[0].mxu0
        %v957 = vadd.f32 0.0, %v956
        %v958 = vpop.f32.mrb[0].mxu0
        %v959 = vpop.f32.mrb[0].mxu0
        %v960 = vadd.f32 0.0, %v959
        %v961 = vpop.f32.mrb[0].mxu0
        %962 = vmatprep.mubr.bf16.mxu0 0
        %963 = vmatmul.mubr.bf16.gmra.mrb[0].mxu0 %v752
        %v964 = vpop.f32.mrb[0].mxu0
        %v965 = vadd.f32 0.0, %v964
        %v966 = vpop.f32.mrb[0].mxu0
        %v967 = vpop.f32.mrb[0].mxu0
        %v968 = vadd.f32 0.0, %v967
        %v969 = vpop.f32.mrb[0].mxu0
        %970 = vmatprep.mubr.bf16.mxu0 0
        %971 = vmatmul.mubr.bf16.gmra.mrb[0].mxu0 %v753
        %v972 = vpop.f32.mrb[0].mxu0
        %v973 = vadd.f32 0.0, %v972
        %v974 = vpop.f32.mrb[0].mxu0
        %v975 = vpop.f32.mrb[0].mxu0
        %v976 = vadd.f32 0.0, %v975
        %v977 = vpop.f32.mrb[0].mxu0
        %978 = vdwg.mxu0
        %v1011 = vunpack.c.l.b16 %v238
        %v1012 = vunpack.c.l.b16 %v239
        %v1013 = vunpack.c.l.b16 %v240
        %v1014 = vunpack.c.l.b16 %v241
        %v1015 = vunpack.c.l.b16 %v242
        %v1016 = vunpack.c.l.b16 %v243
        %v1017 = vunpack.c.l.b16 %v244
        %v1018 = vunpack.c.l.b16 %v245
        %v1019 = vunpack.c.l.b16 %v246
        %v1020 = vunpack.c.l.b16 %v247
        %v1021 = vunpack.c.l.b16 %v248
        %v1022 = vunpack.c.l.b16 %v249
        %v1023 = vunpack.c.l.b16 %v250
        %v1024 = vunpack.c.l.b16 %v251
        %v1025 = vunpack.c.l.b16 %v252
        %v1026 = vunpack.c.l.b16 %v253
        %v1027 = vunpack.c.l.b16 %v254
        %v1028 = vunpack.c.l.b16 %v255
        %v1029 = vunpack.c.l.b16 %v256
        %v1030 = vunpack.c.l.b16 %v257
        %v1031 = vunpack.c.l.b16 %v258
        %v1032 = vunpack.c.l.b16 %v259
        %v1033 = vunpack.c.l.b16 %v260
        %v1034 = vunpack.c.l.b16 %v261
        %v1035 = vunpack.c.l.b16 %v262
        %v1036 = vunpack.c.l.b16 %v263
        %v1037 = vunpack.c.l.b16 %v264
        %v1038 = vunpack.c.l.b16 %v265
        %v1039 = vunpack.c.l.b16 %v266
        %v1040 = vunpack.c.l.b16 %v267
        %v1041 = vunpack.c.l.b16 %v268
        %v1042 = vunpack.c.l.b16 %v269
        %v1043 = vpack.c.b16 %v1012, %v1011
        %v1044 = vpack.c.b16 %v1014, %v1013
        %v1045 = vpack.c.b16 %v1016, %v1015
        %v1046 = vpack.c.b16 %v1018, %v1017
        %v1047 = vpack.c.b16 %v1020, %v1019
        %v1048 = vpack.c.b16 %v1022, %v1021
        %v1049 = vpack.c.b16 %v1024, %v1023
        %v1050 = vpack.c.b16 %v1026, %v1025
        %v1051 = vpack.c.b16 %v1028, %v1027
        %v1052 = vpack.c.b16 %v1030, %v1029
        %v1053 = vpack.c.b16 %v1032, %v1031
        %v1054 = vpack.c.b16 %v1034, %v1033
        %v1055 = vpack.c.b16 %v1036, %v1035
        %v1056 = vpack.c.b16 %v1038, %v1037
        %v1057 = vpack.c.b16 %v1040, %v1039
        %v1058 = vpack.c.b16 %v1042, %v1041
        %v1091 = vunpack.c.l.b16 %v270
        %v1092 = vunpack.c.l.b16 %v271
        %v1093 = vunpack.c.l.b16 %v272
        %v1094 = vunpack.c.l.b16 %v273
        %v1095 = vunpack.c.l.b16 %v274
        %v1096 = vunpack.c.l.b16 %v275
        %v1097 = vunpack.c.l.b16 %v276
        %v1098 = vunpack.c.l.b16 %v277
        %v1099 = vunpack.c.l.b16 %v278
        %v1100 = vunpack.c.l.b16 %v279
        %v1101 = vunpack.c.l.b16 %v280
        %v1102 = vunpack.c.l.b16 %v281
        %v1103 = vunpack.c.l.b16 %v282
        %v1104 = vunpack.c.l.b16 %v283
        %v1105 = vunpack.c.l.b16 %v284
        %v1106 = vunpack.c.l.b16 %v285
        %v1107 = vpack.c.b16 %v1092, %v1091
        %v1108 = vpack.c.b16 %v1094, %v1093
        %v1109 = vpack.c.b16 %v1096, %v1095
        %v1110 = vpack.c.b16 %v1098, %v1097
        %v1111 = vpack.c.b16 %v1100, %v1099
        %v1112 = vpack.c.b16 %v1102, %v1101
        %v1113 = vpack.c.b16 %v1104, %v1103
        %v1114 = vpack.c.b16 %v1106, %v1105
        %1123 = vmatprep.subr.bf16.mxu0 0
        %1124 = vmatpush1.bf16.msra.mxu0 %v1107
        %1125 = vmatprep.subr.bf16.mxu0 0
        %1126 = vmatpush1.bf16.msra.mxu0 %v1108
        %1127 = vmatprep.subr.bf16.mxu0 0
        %1128 = vmatpush1.bf16.msra.mxu0 %v1109
        %1129 = vmatprep.subr.bf16.mxu0 0
        %1130 = vmatpush1.bf16.msra.mxu0 %v1110
        %1131 = vmatprep.subr.bf16.mxu0 0
        %1132 = vmatpush1.bf16.msra.mxu0 %v1111
        %1133 = vmatprep.subr.bf16.mxu0 0
        %1134 = vmatpush1.bf16.msra.mxu0 %v1112
        %1135 = vmatprep.subr.bf16.mxu0 0
        %1136 = vmatpush1.bf16.msra.mxu0 %v1113
        %1137 = vmatprep.subr.bf16.mxu0 0
        %1138 = vmatpush1.bf16.msra.mxu0 %v1114
        %1139 = vmatprep.subr.bf16.mxu0 0
        %1140 = vmatpush1.bf16.msra.mxu0 0
        %1141 = vmatprep.subr.bf16.mxu0 0
        %1142 = vmatpush1.bf16.msra.mxu0 0
        %1143 = vmatprep.subr.bf16.mxu0 0
        %1144 = vmatpush1.bf16.msra.mxu0 0
        %1145 = vmatprep.subr.bf16.mxu0 0
        %1146 = vmatpush1.bf16.msra.mxu0 0
        %1147 = vmatprep.subr.bf16.mxu0 0
        %1148 = vmatpush1.bf16.msra.mxu0 0
        %1149 = vmatprep.subr.bf16.mxu0 0
        %1150 = vmatpush1.bf16.msra.mxu0 0
        %1151 = vmatprep.subr.bf16.mxu0 0
        %1152 = vmatpush1.bf16.msra.mxu0 0
        %1153 = vmatprep.subr.bf16.mxu0 0
        %1154 = vmatpush1.bf16.msra.mxu0 0
        %1155 = vmatprep.mubr.bf16.mxu0 0
        %1156 = vmatmul.mubr.bf16.gmra.mrb[0].mxu0 %v1043
        %v1157 = vpop.f32.mrb[0].mxu0
        %v1158 = vadd.f32 %v853, %v1157
        %v1159 = vpop.f32.mrb[0].mxu0
        %v1160 = vpop.f32.mrb[0].mxu0
        %v1161 = vadd.f32 %v856, %v1160
        %v1162 = vpop.f32.mrb[0].mxu0
        %1163 = vmatprep.mubr.bf16.mxu0 0
        %1164 = vmatmul.mubr.bf16.gmra.mrb[0].mxu0 %v1044
        %v1165 = vpop.f32.mrb[0].mxu0
        %v1166 = vadd.f32 %v861, %v1165
        %v1167 = vpop.f32.mrb[0].mxu0
        %v1168 = vpop.f32.mrb[0].mxu0
        %v1169 = vadd.f32 %v864, %v1168
        %v1170 = vpop.f32.mrb[0].mxu0
        %1171 = vmatprep.mubr.bf16.mxu0 0
        %1172 = vmatmul.mubr.bf16.gmra.mrb[0].mxu0 %v1045
        %v1173 = vpop.f32.mrb[0].mxu0
        %v1174 = vadd.f32 %v869, %v1173
        %v1175 = vpop.f32.mrb[0].mxu0
        %v1176 = vpop.f32.mrb[0].mxu0
        %v1177 = vadd.f32 %v872, %v1176
        %v1178 = vpop.f32.mrb[0].mxu0
        %1179 = vmatprep.mubr.bf16.mxu0 0
        %1180 = vmatmul.mubr.bf16.gmra.mrb[0].mxu0 %v1046
        %v1181 = vpop.f32.mrb[0].mxu0
        %v1182 = vadd.f32 %v877, %v1181
        %v1183 = vpop.f32.mrb[0].mxu0
        %v1184 = vpop.f32.mrb[0].mxu0
        %v1185 = vadd.f32 %v880, %v1184
        %v1186 = vpop.f32.mrb[0].mxu0
        %1187 = vmatprep.mubr.bf16.mxu0 0
        %1188 = vmatmul.mubr.bf16.gmra.mrb[0].mxu0 %v1047
        %v1189 = vpop.f32.mrb[0].mxu0
        %v1190 = vadd.f32 %v885, %v1189
        %v1191 = vpop.f32.mrb[0].mxu0
        %v1192 = vpop.f32.mrb[0].mxu0
        %v1193 = vadd.f32 %v888, %v1192
        %v1194 = vpop.f32.mrb[0].mxu0
        %1195 = vmatprep.mubr.bf16.mxu0 0
        %1196 = vmatmul.mubr.bf16.gmra.mrb[0].mxu0 %v1048
        %v1197 = vpop.f32.mrb[0].mxu0
        %v1198 = vadd.f32 %v893, %v1197
        %v1199 = vpop.f32.mrb[0].mxu0
        %v1200 = vpop.f32.mrb[0].mxu0
        %v1201 = vadd.f32 %v896, %v1200
        %v1202 = vpop.f32.mrb[0].mxu0
        %1203 = vmatprep.mubr.bf16.mxu0 0
        %1204 = vmatmul.mubr.bf16.gmra.mrb[0].mxu0 %v1049
        %v1205 = vpop.f32.mrb[0].mxu0
        %v1206 = vadd.f32 %v901, %v1205
        %v1207 = vpop.f32.mrb[0].mxu0
        %v1208 = vpop.f32.mrb[0].mxu0
        %v1209 = vadd.f32 %v904, %v1208
        %v1210 = vpop.f32.mrb[0].mxu0
        %1211 = vmatprep.mubr.bf16.mxu0 0
        %1212 = vmatmul.mubr.bf16.gmra.mrb[0].mxu0 %v1050
        %v1213 = vpop.f32.mrb[0].mxu0
        %v1214 = vadd.f32 %v909, %v1213
        %v1215 = vpop.f32.mrb[0].mxu0
        %v1216 = vpop.f32.mrb[0].mxu0
        %v1217 = vadd.f32 %v912, %v1216
        %v1218 = vpop.f32.mrb[0].mxu0
        %1219 = vmatprep.mubr.bf16.mxu0 0
        %1220 = vmatmul.mubr.bf16.gmra.mrb[0].mxu0 %v1051
        %v1221 = vpop.f32.mrb[0].mxu0
        %v1222 = vadd.f32 %v917, %v1221
        %v1223 = vpop.f32.mrb[0].mxu0
        %v1224 = vpop.f32.mrb[0].mxu0
        %v1225 = vadd.f32 %v920, %v1224
        %v1226 = vpop.f32.mrb[0].mxu0
        %1227 = vmatprep.mubr.bf16.mxu0 0
        %1228 = vmatmul.mubr.bf16.gmra.mrb[0].mxu0 %v1052
        %v1229 = vpop.f32.mrb[0].mxu0
        %v1230 = vadd.f32 %v925, %v1229
        %v1231 = vpop.f32.mrb[0].mxu0
        %v1232 = vpop.f32.mrb[0].mxu0
        %v1233 = vadd.f32 %v928, %v1232
        %v1234 = vpop.f32.mrb[0].mxu0
        %1235 = vmatprep.mubr.bf16.mxu0 0
        %1236 = vmatmul.mubr.bf16.gmra.mrb[0].mxu0 %v1053
        %v1237 = vpop.f32.mrb[0].mxu0
        %v1238 = vadd.f32 %v933, %v1237
        %v1239 = vpop.f32.mrb[0].mxu0
        %v1240 = vpop.f32.mrb[0].mxu0
        %v1241 = vadd.f32 %v936, %v1240
        %v1242 = vpop.f32.mrb[0].mxu0
        %1243 = vmatprep.mubr.bf16.mxu0 0
        %1244 = vmatmul.mubr.bf16.gmra.mrb[0].mxu0 %v1054
        %v1245 = vpop.f32.mrb[0].mxu0
        %v1246 = vadd.f32 %v941, %v1245
        %v1247 = vpop.f32.mrb[0].mxu0
        %v1248 = vpop.f32.mrb[0].mxu0
        %v1249 = vadd.f32 %v944, %v1248
        %v1250 = vpop.f32.mrb[0].mxu0
        %1251 = vmatprep.mubr.bf16.mxu0 0
        %1252 = vmatmul.mubr.bf16.gmra.mrb[0].mxu0 %v1055
        %v1253 = vpop.f32.mrb[0].mxu0
        %v1254 = vadd.f32 %v949, %v1253
        %v1255 = vpop.f32.mrb[0].mxu0
        %v1256 = vpop.f32.mrb[0].mxu0
        %v1257 = vadd.f32 %v952, %v1256
        %v1258 = vpop.f32.mrb[0].mxu0
        %1259 = vmatprep.mubr.bf16.mxu0 0
        %1260 = vmatmul.mubr.bf16.gmra.mrb[0].mxu0 %v1056
        %v1261 = vpop.f32.mrb[0].mxu0
        %v1262 = vadd.f32 %v957, %v1261
        %v1263 = vpop.f32.mrb[0].mxu0
        %v1264 = vpop.f32.mrb[0].mxu0
        %v1265 = vadd.f32 %v960, %v1264
        %v1266 = vpop.f32.mrb[0].mxu0
        %1267 = vmatprep.mubr.bf16.mxu0 0
        %1268 = vmatmul.mubr.bf16.gmra.mrb[0].mxu0 %v1057
        %v1269 = vpop.f32.mrb[0].mxu0
        %v1270 = vadd.f32 %v965, %v1269
        %v1271 = vpop.f32.mrb[0].mxu0
        %v1272 = vpop.f32.mrb[0].mxu0
        %v1273 = vadd.f32 %v968, %v1272
        %v1274 = vpop.f32.mrb[0].mxu0
        %1275 = vmatprep.mubr.bf16.mxu0 0
        %1276 = vmatmul.mubr.bf16.gmra.mrb[0].mxu0 %v1058
        %v1277 = vpop.f32.mrb[0].mxu0
        %v1278 = vadd.f32 %v973, %v1277
        %v1279 = vpop.f32.mrb[0].mxu0
        %v1280 = vpop.f32.mrb[0].mxu0
        %v1281 = vadd.f32 %v976, %v1280
        %v1282 = vpop.f32.mrb[0].mxu0
        %1283 = vdwg.mxu0
        %v1284 = vld [vmem:[%s229] sm:$0xe]
        %v1285 = vld [vmem:[%s229 + $0xc] sm:$0xe]
        %v1286 = vld [vmem:[%s229 + $0x18] sm:$0xe]
        %v1287 = vld [vmem:[%s229 + $0x24] sm:$0xe]
        %v1288 = vld [vmem:[%s229 + $0x30] sm:$0xe]
        %v1289 = vld [vmem:[%s229 + $0x3c] sm:$0xe]
        %v1290 = vld [vmem:[%s229 + $0x48] sm:$0xe]
        %v1291 = vld [vmem:[%s229 + $0x54] sm:$0xe]
        %v1292 = vld [vmem:[%s229 + $0x60] sm:$0xe]
        %v1293 = vld [vmem:[%s229 + $0x6c] sm:$0xe]
        %v1294 = vld [vmem:[%s229 + $0x78] sm:$0xe]
        %v1295 = vld [vmem:[%s229 + $0x84] sm:$0xe]
        %v1296 = vld [vmem:[%s229 + $0x90] sm:$0xe]
        %v1297 = vld [vmem:[%s229 + $0x9c] sm:$0xe]
        %v1298 = vld [vmem:[%s229 + $0xa8] sm:$0xe]
        %v1299 = vld [vmem:[%s229 + $0xb4] sm:$0xe]
        %vm1332 = vcmask 1042432
        %vm1333 = vcmask 1046532
        %vm1334 = vmor %vm1332, %vm1333
        %v1335 = vrot.slane %v1284, 5
        %v1336 = vrot.slane %v1335, 4
        %v1337 = vrot.slane %v239, 5
        %v1338 = vsel %vm1334, %v1336, %v1337
        %v1339 = vrot.slane %v1337, 4
        %v1340 = vrot.slane %v286, 5
        %v1341 = vsel %vm1334, %v1339, %v1340
        %v1342 = vrot.slane %v1285, 5
        %v1343 = vrot.slane %v1342, 4
        %v1344 = vrot.slane %v241, 5
        %v1345 = vsel %vm1334, %v1343, %v1344
        %v1346 = vrot.slane %v1344, 4
        %v1347 = vrot.slane %v287, 5
        %v1348 = vsel %vm1334, %v1346, %v1347
        %v1349 = vrot.slane %v1286, 5
        %v1350 = vrot.slane %v1349, 4
        %v1351 = vrot.slane %v243, 5
        %v1352 = vsel %vm1334, %v1350, %v1351
        %v1353 = vrot.slane %v1351, 4
        %v1354 = vrot.slane %v288, 5
        %v1355 = vsel %vm1334, %v1353, %v1354
        %v1356 = vrot.slane %v1287, 5
        %v1357 = vrot.slane %v1356, 4
        %v1358 = vrot.slane %v245, 5
        %v1359 = vsel %vm1334, %v1357, %v1358
        %v1360 = vrot.slane %v1358, 4
        %v1361 = vrot.slane %v289, 5
        %v1362 = vsel %vm1334, %v1360, %v1361
        %v1363 = vrot.slane %v1288, 5
        %v1364 = vrot.slane %v1363, 4
        %v1365 = vrot.slane %v247, 5
        %v1366 = vsel %vm1334, %v1364, %v1365
        %v1367 = vrot.slane %v1365, 4
        %v1368 = vrot.slane %v290, 5
        %v1369 = vsel %vm1334, %v1367, %v1368
        %v1370 = vrot.slane %v1289, 5
        %v1371 = vrot.slane %v1370, 4
        %v1372 = vrot.slane %v249, 5
        %v1373 = vsel %vm1334, %v1371, %v1372
        %v1374 = vrot.slane %v1372, 4
        %v1375 = vrot.slane %v291, 5
        %v1376 = vsel %vm1334, %v1374, %v1375
        %v1377 = vrot.slane %v1290, 5
        %v1378 = vrot.slane %v1377, 4
        %v1379 = vrot.slane %v251, 5
        %v1380 = vsel %vm1334, %v1378, %v1379
        %v1381 = vrot.slane %v1379, 4
        %v1382 = vrot.slane %v292, 5
        %v1383 = vsel %vm1334, %v1381, %v1382
        %v1384 = vrot.slane %v1291, 5
        %v1385 = vrot.slane %v1384, 4
        %v1386 = vrot.slane %v253, 5
        %v1387 = vsel %vm1334, %v1385, %v1386
        %v1388 = vrot.slane %v1386, 4
        %v1389 = vrot.slane %v293, 5
        %v1390 = vsel %vm1334, %v1388, %v1389
        %v1391 = vrot.slane %v1292, 5
        %v1392 = vrot.slane %v1391, 4
        %v1393 = vrot.slane %v255, 5
        %v1394 = vsel %vm1334, %v1392, %v1393
        %v1395 = vrot.slane %v1393, 4
        %v1396 = vrot.slane %v294, 5
        %v1397 = vsel %vm1334, %v1395, %v1396
        %v1398 = vrot.slane %v1293, 5
        %v1399 = vrot.slane %v1398, 4
        %v1400 = vrot.slane %v257, 5
        %v1401 = vsel %vm1334, %v1399, %v1400
        %v1402 = vrot.slane %v1400, 4
        %v1403 = vrot.slane %v295, 5
        %v1404 = vsel %vm1334, %v1402, %v1403
        %v1405 = vrot.slane %v1294, 5
        %v1406 = vrot.slane %v1405, 4
        %v1407 = vrot.slane %v259, 5
        %v1408 = vsel %vm1334, %v1406, %v1407
        %v1409 = vrot.slane %v1407, 4
        %v1410 = vrot.slane %v296, 5
        %v1411 = vsel %vm1334, %v1409, %v1410
        %v1412 = vrot.slane %v1295, 5
        %v1413 = vrot.slane %v1412, 4
        %v1414 = vrot.slane %v261, 5
        %v1415 = vsel %vm1334, %v1413, %v1414
        %v1416 = vrot.slane %v1414, 4
        %v1417 = vrot.slane %v297, 5
        %v1418 = vsel %vm1334, %v1416, %v1417
        %v1419 = vrot.slane %v1296, 5
        %v1420 = vrot.slane %v1419, 4
        %v1421 = vrot.slane %v263, 5
        %v1422 = vsel %vm1334, %v1420, %v1421
        %v1423 = vrot.slane %v1421, 4
        %v1424 = vrot.slane %v298, 5
        %v1425 = vsel %vm1334, %v1423, %v1424
        %v1426 = vrot.slane %v1297, 5
        %v1427 = vrot.slane %v1426, 4
        %v1428 = vrot.slane %v265, 5
        %v1429 = vsel %vm1334, %v1427, %v1428
        %v1430 = vrot.slane %v1428, 4
        %v1431 = vrot.slane %v299, 5
        %v1432 = vsel %vm1334, %v1430, %v1431
        %v1433 = vrot.slane %v1298, 5
        %v1434 = vrot.slane %v1433, 4
        %v1435 = vrot.slane %v267, 5
        %v1436 = vsel %vm1334, %v1434, %v1435
        %v1437 = vrot.slane %v1435, 4
        %v1438 = vrot.slane %v300, 5
        %v1439 = vsel %vm1334, %v1437, %v1438
        %v1440 = vrot.slane %v1299, 5
        %v1441 = vrot.slane %v1440, 4
        %v1442 = vrot.slane %v269, 5
        %v1443 = vsel %vm1334, %v1441, %v1442
        %v1444 = vrot.slane %v1442, 4
        %v1445 = vrot.slane %v301, 5
        %v1446 = vsel %vm1334, %v1444, %v1445
        %s1447 = scalar_lea.vmem %s233, 128
        %v1448 = vld [vmem:[%s1447] sm:$0xf]
        %v1449 = vld [vmem:[%s1447 + $0x4] sm:$0xf]
        %v1450 = vld [vmem:[%s1447 + $0x8] sm:$0xf]
        %v1451 = vld [vmem:[%s1447 + $0xc] sm:$0xf]
        %v1452 = vld [vmem:[%s1447 + $0x10] sm:$0xf]
        %v1453 = vld [vmem:[%s1447 + $0x14] sm:$0xf]
        %v1454 = vld [vmem:[%s1447 + $0x18] sm:$0xf]
        %v1455 = vld [vmem:[%s1447 + $0x1c] sm:$0xf]
        %v1456 = vld [vmem:[%s1447 + $0x20] sm:$0xf]
        %v1457 = vld [vmem:[%s1447 + $0x24] sm:$0xf]
        %v1458 = vld [vmem:[%s1447 + $0x28] sm:$0xf]
        %v1459 = vld [vmem:[%s1447 + $0x2c] sm:$0xf]
        %v1460 = vld [vmem:[%s1447 + $0x30] sm:$0xf]
        %v1461 = vld [vmem:[%s1447 + $0x34] sm:$0xf]
        %v1462 = vld [vmem:[%s1447 + $0x38] sm:$0xf]
        %v1463 = vld [vmem:[%s1447 + $0x3c] sm:$0xf]
        %v1464 = vunpack.c.l.b16 %v1338
        %v1465 = vunpack.c.l.b16 %v1341
        %v1466 = vunpack.c.l.b16 %v1345
        %v1467 = vunpack.c.l.b16 %v1348
        %v1468 = vunpack.c.l.b16 %v1352
        %v1469 = vunpack.c.l.b16 %v1355
        %v1470 = vunpack.c.l.b16 %v1359
        %v1471 = vunpack.c.l.b16 %v1362
        %v1472 = vunpack.c.l.b16 %v1366
        %v1473 = vunpack.c.l.b16 %v1369
        %v1474 = vunpack.c.l.b16 %v1373
        %v1475 = vunpack.c.l.b16 %v1376
        %v1476 = vunpack.c.l.b16 %v1380
        %v1477 = vunpack.c.l.b16 %v1383
        %v1478 = vunpack.c.l.b16 %v1387
        %v1479 = vunpack.c.l.b16 %v1390
        %v1480 = vunpack.c.l.b16 %v1394
        %v1481 = vunpack.c.l.b16 %v1397
        %v1482 = vunpack.c.l.b16 %v1401
        %v1483 = vunpack.c.l.b16 %v1404
        %v1484 = vunpack.c.l.b16 %v1408
        %v1485 = vunpack.c.l.b16 %v1411
        %v1486 = vunpack.c.l.b16 %v1415
        %v1487 = vunpack.c.l.b16 %v1418
        %v1488 = vunpack.c.l.b16 %v1422
        %v1489 = vunpack.c.l.b16 %v1425
        %v1490 = vunpack.c.l.b16 %v1429
        %v1491 = vunpack.c.l.b16 %v1432
        %v1492 = vunpack.c.l.b16 %v1436
        %v1493 = vunpack.c.l.b16 %v1439
        %v1494 = vunpack.c.l.b16 %v1443
        %v1495 = vunpack.c.l.b16 %v1446
        %v1496 = vpack.c.b16 %v1465, %v1464
        %v1497 = vpack.c.b16 %v1467, %v1466
        %v1498 = vpack.c.b16 %v1469, %v1468
        %v1499 = vpack.c.b16 %v1471, %v1470
        %v1500 = vpack.c.b16 %v1473, %v1472
        %v1501 = vpack.c.b16 %v1475, %v1474
        %v1502 = vpack.c.b16 %v1477, %v1476
        %v1503 = vpack.c.b16 %v1479, %v1478
        %v1504 = vpack.c.b16 %v1481, %v1480
        %v1505 = vpack.c.b16 %v1483, %v1482
        %v1506 = vpack.c.b16 %v1485, %v1484
        %v1507 = vpack.c.b16 %v1487, %v1486
        %v1508 = vpack.c.b16 %v1489, %v1488
        %v1509 = vpack.c.b16 %v1491, %v1490
        %v1510 = vpack.c.b16 %v1493, %v1492
        %v1511 = vpack.c.b16 %v1495, %v1494
        %v1544 = vunpack.c.l.b16 %v1448
        %v1545 = vunpack.c.l.b16 %v1449
        %v1546 = vunpack.c.l.b16 %v1450
        %v1547 = vunpack.c.l.b16 %v1451
        %v1548 = vunpack.c.l.b16 %v1452
        %v1549 = vunpack.c.l.b16 %v1453
        %v1550 = vunpack.c.l.b16 %v1454
        %v1551 = vunpack.c.l.b16 %v1455
        %v1552 = vunpack.c.l.b16 %v1456
        %v1553 = vunpack.c.l.b16 %v1457
        %v1554 = vunpack.c.l.b16 %v1458
        %v1555 = vunpack.c.l.b16 %v1459
        %v1556 = vunpack.c.l.b16 %v1460
        %v1557 = vunpack.c.l.b16 %v1461
        %v1558 = vunpack.c.l.b16 %v1462
        %v1559 = vunpack.c.l.b16 %v1463
        %v1560 = vpack.c.b16 %v1545, %v1544
        %v1561 = vpack.c.b16 %v1547, %v1546
        %v1562 = vpack.c.b16 %v1549, %v1548
        %v1563 = vpack.c.b16 %v1551, %v1550
        %v1564 = vpack.c.b16 %v1553, %v1552
        %v1565 = vpack.c.b16 %v1555, %v1554
        %v1566 = vpack.c.b16 %v1557, %v1556
        %v1567 = vpack.c.b16 %v1559, %v1558
        %1576 = vmatprep.subr.bf16.mxu0 0
        %1577 = vmatpush1.bf16.msra.mxu0 %v1560
        %1578 = vmatprep.subr.bf16.mxu0 0
        %1579 = vmatpush1.bf16.msra.mxu0 %v1561
        %1580 = vmatprep.subr.bf16.mxu0 0
        %1581 = vmatpush1.bf16.msra.mxu0 %v1562
        %1582 = vmatprep.subr.bf16.mxu0 0
        %1583 = vmatpush1.bf16.msra.mxu0 %v1563
        %1584 = vmatprep.subr.bf16.mxu0 0
        %1585 = vmatpush1.bf16.msra.mxu0 %v1564
        %1586 = vmatprep.subr.bf16.mxu0 0
        %1587 = vmatpush1.bf16.msra.mxu0 %v1565
        %1588 = vmatprep.subr.bf16.mxu0 0
        %1589 = vmatpush1.bf16.msra.mxu0 %v1566
        %1590 = vmatprep.subr.bf16.mxu0 0
        %1591 = vmatpush1.bf16.msra.mxu0 %v1567
        %1592 = vmatprep.subr.bf16.mxu0 0
        %1593 = vmatpush1.bf16.msra.mxu0 0
        %1594 = vmatprep.subr.bf16.mxu0 0
        %1595 = vmatpush1.bf16.msra.mxu0 0
        %1596 = vmatprep.subr.bf16.mxu0 0
        %1597 = vmatpush1.bf16.msra.mxu0 0
        %1598 = vmatprep.subr.bf16.mxu0 0
        %1599 = vmatpush1.bf16.msra.mxu0 0
        %1600 = vmatprep.subr.bf16.mxu0 0
        %1601 = vmatpush1.bf16.msra.mxu0 0
        %1602 = vmatprep.subr.bf16.mxu0 0
        %1603 = vmatpush1.bf16.msra.mxu0 0
        %1604 = vmatprep.subr.bf16.mxu0 0
        %1605 = vmatpush1.bf16.msra.mxu0 0
        %1606 = vmatprep.subr.bf16.mxu0 0
        %1607 = vmatpush1.bf16.msra.mxu0 0
        %1608 = vmatprep.mubr.bf16.mxu0 0
        %1609 = vmatmul.mubr.bf16.gmra.mrb[0].mxu0 %v1496
        %v1610 = vpop.f32.mrb[0].mxu0
        %v1611 = vadd.f32 0.0, %v1610
        %v1612 = vpop.f32.mrb[0].mxu0
        %v1613 = vpop.f32.mrb[0].mxu0
        %v1614 = vadd.f32 0.0, %v1613
        %v1615 = vpop.f32.mrb[0].mxu0
        %1616 = vmatprep.mubr.bf16.mxu0 0
        %1617 = vmatmul.mubr.bf16.gmra.mrb[0].mxu0 %v1497
        %v1618 = vpop.f32.mrb[0].mxu0
        %v1619 = vadd.f32 0.0, %v1618
        %v1620 = vpop.f32.mrb[0].mxu0
        %v1621 = vpop.f32.mrb[0].mxu0
        %v1622 = vadd.f32 0.0, %v1621
        %v1623 = vpop.f32.mrb[0].mxu0
        %1624 = vmatprep.mubr.bf16.mxu0 0
        %1625 = vmatmul.mubr.bf16.gmra.mrb[0].mxu0 %v1498
        %v1626 = vpop.f32.mrb[0].mxu0
        %v1627 = vadd.f32 0.0, %v1626
        %v1628 = vpop.f32.mrb[0].mxu0
        %v1629 = vpop.f32.mrb[0].mxu0
        %v1630 = vadd.f32 0.0, %v1629
        %v1631 = vpop.f32.mrb[0].mxu0
        %1632 = vmatprep.mubr.bf16.mxu0 0
        %1633 = vmatmul.mubr.bf16.gmra.mrb[0].mxu0 %v1499
        %v1634 = vpop.f32.mrb[0].mxu0
        %v1635 = vadd.f32 0.0, %v1634
        %v1636 = vpop.f32.mrb[0].mxu0
        %v1637 = vpop.f32.mrb[0].mxu0
        %v1638 = vadd.f32 0.0, %v1637
        %v1639 = vpop.f32.mrb[0].mxu0
        %1640 = vmatprep.mubr.bf16.mxu0 0
        %1641 = vmatmul.mubr.bf16.gmra.mrb[0].mxu0 %v1500
        %v1642 = vpop.f32.mrb[0].mxu0
        %v1643 = vadd.f32 0.0, %v1642
        %v1644 = vpop.f32.mrb[0].mxu0
        %v1645 = vpop.f32.mrb[0].mxu0
        %v1646 = vadd.f32 0.0, %v1645
        %v1647 = vpop.f32.mrb[0].mxu0
        %1648 = vmatprep.mubr.bf16.mxu0 0
        %1649 = vmatmul.mubr.bf16.gmra.mrb[0].mxu0 %v1501
        %v1650 = vpop.f32.mrb[0].mxu0
        %v1651 = vadd.f32 0.0, %v1650
        %v1652 = vpop.f32.mrb[0].mxu0
        %v1653 = vpop.f32.mrb[0].mxu0
        %v1654 = vadd.f32 0.0, %v1653
        %v1655 = vpop.f32.mrb[0].mxu0
        %1656 = vmatprep.mubr.bf16.mxu0 0
        %1657 = vmatmul.mubr.bf16.gmra.mrb[0].mxu0 %v1502
        %v1658 = vpop.f32.mrb[0].mxu0
        %v1659 = vadd.f32 0.0, %v1658
        %v1660 = vpop.f32.mrb[0].mxu0
        %v1661 = vpop.f32.mrb[0].mxu0
        %v1662 = vadd.f32 0.0, %v1661
        %v1663 = vpop.f32.mrb[0].mxu0
        %1664 = vmatprep.mubr.bf16.mxu0 0
        %1665 = vmatmul.mubr.bf16.gmra.mrb[0].mxu0 %v1503
        %v1666 = vpop.f32.mrb[0].mxu0
        %v1667 = vadd.f32 0.0, %v1666
        %v1668 = vpop.f32.mrb[0].mxu0
        %v1669 = vpop.f32.mrb[0].mxu0
        %v1670 = vadd.f32 0.0, %v1669
        %v1671 = vpop.f32.mrb[0].mxu0
        %1672 = vmatprep.mubr.bf16.mxu0 0
        %1673 = vmatmul.mubr.bf16.gmra.mrb[0].mxu0 %v1504
        %v1674 = vpop.f32.mrb[0].mxu0
        %v1675 = vadd.f32 0.0, %v1674
        %v1676 = vpop.f32.mrb[0].mxu0
        %v1677 = vpop.f32.mrb[0].mxu0
        %v1678 = vadd.f32 0.0, %v1677
        %v1679 = vpop.f32.mrb[0].mxu0
        %1680 = vmatprep.mubr.bf16.mxu0 0
        %1681 = vmatmul.mubr.bf16.gmra.mrb[0].mxu0 %v1505
        %v1682 = vpop.f32.mrb[0].mxu0
        %v1683 = vadd.f32 0.0, %v1682
        %v1684 = vpop.f32.mrb[0].mxu0
        %v1685 = vpop.f32.mrb[0].mxu0
        %v1686 = vadd.f32 0.0, %v1685
        %v1687 = vpop.f32.mrb[0].mxu0
        %1688 = vmatprep.mubr.bf16.mxu0 0
        %1689 = vmatmul.mubr.bf16.gmra.mrb[0].mxu0 %v1506
        %v1690 = vpop.f32.mrb[0].mxu0
        %v1691 = vadd.f32 0.0, %v1690
        %v1692 = vpop.f32.mrb[0].mxu0
        %v1693 = vpop.f32.mrb[0].mxu0
        %v1694 = vadd.f32 0.0, %v1693
        %v1695 = vpop.f32.mrb[0].mxu0
        %1696 = vmatprep.mubr.bf16.mxu0 0
        %1697 = vmatmul.mubr.bf16.gmra.mrb[0].mxu0 %v1507
        %v1698 = vpop.f32.mrb[0].mxu0
        %v1699 = vadd.f32 0.0, %v1698
        %v1700 = vpop.f32.mrb[0].mxu0
        %v1701 = vpop.f32.mrb[0].mxu0
        %v1702 = vadd.f32 0.0, %v1701
        %v1703 = vpop.f32.mrb[0].mxu0
        %1704 = vmatprep.mubr.bf16.mxu0 0
        %1705 = vmatmul.mubr.bf16.gmra.mrb[0].mxu0 %v1508
        %v1706 = vpop.f32.mrb[0].mxu0
        %v1707 = vadd.f32 0.0, %v1706
        %v1708 = vpop.f32.mrb[0].mxu0
        %v1709 = vpop.f32.mrb[0].mxu0
        %v1710 = vadd.f32 0.0, %v1709
        %v1711 = vpop.f32.mrb[0].mxu0
        %1712 = vmatprep.mubr.bf16.mxu0 0
        %1713 = vmatmul.mubr.bf16.gmra.mrb[0].mxu0 %v1509
        %v1714 = vpop.f32.mrb[0].mxu0
        %v1715 = vadd.f32 0.0, %v1714
        %v1716 = vpop.f32.mrb[0].mxu0
        %v1717 = vpop.f32.mrb[0].mxu0
        %v1718 = vadd.f32 0.0, %v1717
        %v1719 = vpop.f32.mrb[0].mxu0
        %1720 = vmatprep.mubr.bf16.mxu0 0
        %1721 = vmatmul.mubr.bf16.gmra.mrb[0].mxu0 %v1510
        %v1722 = vpop.f32.mrb[0].mxu0
        %v1723 = vadd.f32 0.0, %v1722
        %v1724 = vpop.f32.mrb[0].mxu0
        %v1725 = vpop.f32.mrb[0].mxu0
        %v1726 = vadd.f32 0.0, %v1725
        %v1727 = vpop.f32.mrb[0].mxu0
        %1728 = vmatprep.mubr.bf16.mxu0 0
        %1729 = vmatmul.mubr.bf16.gmra.mrb[0].mxu0 %v1511
        %v1730 = vpop.f32.mrb[0].mxu0
        %v1731 = vadd.f32 0.0, %v1730
        %v1732 = vpop.f32.mrb[0].mxu0
        %v1733 = vpop.f32.mrb[0].mxu0
        %v1734 = vadd.f32 0.0, %v1733
        %v1735 = vpop.f32.mrb[0].mxu0
        %1736 = vdwg.mxu0
        %v1737 = vadd.f32 %v1158, %v1611
        %v1738 = vadd.f32 %v1161, %v1614
        %v1739 = vadd.f32 %v1166, %v1619
        %v1740 = vadd.f32 %v1169, %v1622
        %v1741 = vadd.f32 %v1174, %v1627
        %v1742 = vadd.f32 %v1177, %v1630
        %v1743 = vadd.f32 %v1182, %v1635
        %v1744 = vadd.f32 %v1185, %v1638
        %v1745 = vadd.f32 %v1190, %v1643
        %v1746 = vadd.f32 %v1193, %v1646
        %v1747 = vadd.f32 %v1198, %v1651
        %v1748 = vadd.f32 %v1201, %v1654
        %v1749 = vadd.f32 %v1206, %v1659
        %v1750 = vadd.f32 %v1209, %v1662
        %v1751 = vadd.f32 %v1214, %v1667
        %v1752 = vadd.f32 %v1217, %v1670
        %v1753 = vadd.f32 %v1222, %v1675
        %v1754 = vadd.f32 %v1225, %v1678
        %v1755 = vadd.f32 %v1230, %v1683
        %v1756 = vadd.f32 %v1233, %v1686
        %v1757 = vadd.f32 %v1238, %v1691
        %v1758 = vadd.f32 %v1241, %v1694
        %v1759 = vadd.f32 %v1246, %v1699
        %v1760 = vadd.f32 %v1249, %v1702
        %v1761 = vadd.f32 %v1254, %v1707
        %v1762 = vadd.f32 %v1257, %v1710
        %v1763 = vadd.f32 %v1262, %v1715
        %v1764 = vadd.f32 %v1265, %v1718
        %v1765 = vadd.f32 %v1270, %v1723
        %v1766 = vadd.f32 %v1273, %v1726
        %v1767 = vadd.f32 %v1278, %v1731
        %v1768 = vadd.f32 %v1281, %v1734
        %s1769 = scalar_lea.vmem %s229, 12
        %v1770 = vld [vmem:[%s1769] sm:$0xf]
        %v1771 = vld [vmem:[%s1769 + $0x4] sm:$0xf]
        %v1772 = vld [vmem:[%s1769 + $0xc] sm:$0xf]
        %v1773 = vld [vmem:[%s1769 + $0x10] sm:$0xf]
        %v1774 = vld [vmem:[%s1769 + $0x18] sm:$0xf]
        %v1775 = vld [vmem:[%s1769 + $0x1c] sm:$0xf]
        %v1776 = vld [vmem:[%s1769 + $0x24] sm:$0xf]
        %v1777 = vld [vmem:[%s1769 + $0x28] sm:$0xf]
        %v1778 = vld [vmem:[%s1769 + $0x30] sm:$0xf]
        %v1779 = vld [vmem:[%s1769 + $0x34] sm:$0xf]
        %v1780 = vld [vmem:[%s1769 + $0x3c] sm:$0xf]
        %v1781 = vld [vmem:[%s1769 + $0x40] sm:$0xf]
        %v1782 = vld [vmem:[%s1769 + $0x48] sm:$0xf]
        %v1783 = vld [vmem:[%s1769 + $0x4c] sm:$0xf]
        %v1784 = vld [vmem:[%s1769 + $0x54] sm:$0xf]
        %v1785 = vld [vmem:[%s1769 + $0x58] sm:$0xf]
        %v1786 = vld [vmem:[%s1769 + $0x60] sm:$0xf]
        %v1787 = vld [vmem:[%s1769 + $0x64] sm:$0xf]
        %v1788 = vld [vmem:[%s1769 + $0x6c] sm:$0xf]
        %v1789 = vld [vmem:[%s1769 + $0x70] sm:$0xf]
        %v1790 = vld [vmem:[%s1769 + $0x78] sm:$0xf]
        %v1791 = vld [vmem:[%s1769 + $0x7c] sm:$0xf]
        %v1792 = vld [vmem:[%s1769 + $0x84] sm:$0xf]
        %v1793 = vld [vmem:[%s1769 + $0x88] sm:$0xf]
        %v1794 = vld [vmem:[%s1769 + $0x90] sm:$0xf]
        %v1795 = vld [vmem:[%s1769 + $0x94] sm:$0xf]
        %v1796 = vld [vmem:[%s1769 + $0x9c] sm:$0xf]
        %v1797 = vld [vmem:[%s1769 + $0xa0] sm:$0xf]
        %v1798 = vld [vmem:[%s1769 + $0xa8] sm:$0xf]
        %v1799 = vld [vmem:[%s1769 + $0xac] sm:$0xf]
        %v1800 = vld [vmem:[%s1769 + $0xb4] sm:$0xf]
        %v1801 = vld [vmem:[%s1769 + $0xb8] sm:$0xf]
        %s1802 = scalar_lea.vmem %s233, 192
        %v1803 = vld [vmem:[%s1802] sm:$0xf]
        %v1804 = vld [vmem:[%s1802 + $0x4] sm:$0xf]
        %v1805 = vld [vmem:[%s1802 + $0x8] sm:$0xf]
        %v1806 = vld [vmem:[%s1802 + $0xc] sm:$0xf]
        %v1807 = vld [vmem:[%s1802 + $0x10] sm:$0xf]
        %v1808 = vld [vmem:[%s1802 + $0x14] sm:$0xf]
        %v1809 = vld [vmem:[%s1802 + $0x18] sm:$0xf]
        %v1810 = vld [vmem:[%s1802 + $0x1c] sm:$0xf]
        %v1811 = vld [vmem:[%s1802 + $0x20] sm:$0xf]
        %v1812 = vld [vmem:[%s1802 + $0x24] sm:$0xf]
        %v1813 = vld [vmem:[%s1802 + $0x28] sm:$0xf]
        %v1814 = vld [vmem:[%s1802 + $0x2c] sm:$0xf]
        %v1815 = vld [vmem:[%s1802 + $0x30] sm:$0xf]
        %v1816 = vld [vmem:[%s1802 + $0x34] sm:$0xf]
        %v1817 = vld [vmem:[%s1802 + $0x38] sm:$0xf]
        %v1818 = vld [vmem:[%s1802 + $0x3c] sm:$0xf]
        %v1851 = vunpack.c.l.b16 %v1770
        %v1852 = vunpack.c.l.b16 %v1771
        %v1853 = vunpack.c.l.b16 %v1772
        %v1854 = vunpack.c.l.b16 %v1773
        %v1855 = vunpack.c.l.b16 %v1774
        %v1856 = vunpack.c.l.b16 %v1775
        %v1857 = vunpack.c.l.b16 %v1776
        %v1858 = vunpack.c.l.b16 %v1777
        %v1859 = vunpack.c.l.b16 %v1778
        %v1860 = vunpack.c.l.b16 %v1779
        %v1861 = vunpack.c.l.b16 %v1780
        %v1862 = vunpack.c.l.b16 %v1781
        %v1863 = vunpack.c.l.b16 %v1782
        %v1864 = vunpack.c.l.b16 %v1783
        %v1865 = vunpack.c.l.b16 %v1784
        %v1866 = vunpack.c.l.b16 %v1785
        %v1867 = vunpack.c.l.b16 %v1786
        %v1868 = vunpack.c.l.b16 %v1787
        %v1869 = vunpack.c.l.b16 %v1788
        %v1870 = vunpack.c.l.b16 %v1789
        %v1871 = vunpack.c.l.b16 %v1790
        %v1872 = vunpack.c.l.b16 %v1791
        %v1873 = vunpack.c.l.b16 %v1792
        %v1874 = vunpack.c.l.b16 %v1793
        %v1875 = vunpack.c.l.b16 %v1794
        %v1876 = vunpack.c.l.b16 %v1795
        %v1877 = vunpack.c.l.b16 %v1796
        %v1878 = vunpack.c.l.b16 %v1797
        %v1879 = vunpack.c.l.b16 %v1798
        %v1880 = vunpack.c.l.b16 %v1799
        %v1881 = vunpack.c.l.b16 %v1800
        %v1882 = vunpack.c.l.b16 %v1801
        %v1883 = vpack.c.b16 %v1852, %v1851
        %v1884 = vpack.c.b16 %v1854, %v1853
        %v1885 = vpack.c.b16 %v1856, %v1855
        %v1886 = vpack.c.b16 %v1858, %v1857
        %v1887 = vpack.c.b16 %v1860, %v1859
        %v1888 = vpack.c.b16 %v1862, %v1861
        %v1889 = vpack.c.b16 %v1864, %v1863
        %v1890 = vpack.c.b16 %v1866, %v1865
        %v1891 = vpack.c.b16 %v1868, %v1867
        %v1892 = vpack.c.b16 %v1870, %v1869
        %v1893 = vpack.c.b16 %v1872, %v1871
        %v1894 = vpack.c.b16 %v1874, %v1873
        %v1895 = vpack.c.b16 %v1876, %v1875
        %v1896 = vpack.c.b16 %v1878, %v1877
        %v1897 = vpack.c.b16 %v1880, %v1879
        %v1898 = vpack.c.b16 %v1882, %v1881
        %v1931 = vunpack.c.l.b16 %v1803
        %v1932 = vunpack.c.l.b16 %v1804
        %v1933 = vunpack.c.l.b16 %v1805
        %v1934 = vunpack.c.l.b16 %v1806
        %v1935 = vunpack.c.l.b16 %v1807
        %v1936 = vunpack.c.l.b16 %v1808
        %v1937 = vunpack.c.l.b16 %v1809
        %v1938 = vunpack.c.l.b16 %v1810
        %v1939 = vunpack.c.l.b16 %v1811
        %v1940 = vunpack.c.l.b16 %v1812
        %v1941 = vunpack.c.l.b16 %v1813
        %v1942 = vunpack.c.l.b16 %v1814
        %v1943 = vunpack.c.l.b16 %v1815
        %v1944 = vunpack.c.l.b16 %v1816
        %v1945 = vunpack.c.l.b16 %v1817
        %v1946 = vunpack.c.l.b16 %v1818
        %v1947 = vpack.c.b16 %v1932, %v1931
        %v1948 = vpack.c.b16 %v1934, %v1933
        %v1949 = vpack.c.b16 %v1936, %v1935
        %v1950 = vpack.c.b16 %v1938, %v1937
        %v1951 = vpack.c.b16 %v1940, %v1939
        %v1952 = vpack.c.b16 %v1942, %v1941
        %v1953 = vpack.c.b16 %v1944, %v1943
        %v1954 = vpack.c.b16 %v1946, %v1945
        %1963 = vmatprep.subr.bf16.mxu0 0
        %1964 = vmatpush1.bf16.msra.mxu0 %v1947
        %1965 = vmatprep.subr.bf16.mxu0 0
        %1966 = vmatpush1.bf16.msra.mxu0 %v1948
        %1967 = vmatprep.subr.bf16.mxu0 0
        %1968 = vmatpush1.bf16.msra.mxu0 %v1949
        %1969 = vmatprep.subr.bf16.mxu0 0
        %1970 = vmatpush1.bf16.msra.mxu0 %v1950
        %1971 = vmatprep.subr.bf16.mxu0 0
        %1972 = vmatpush1.bf16.msra.mxu0 %v1951
        %1973 = vmatprep.subr.bf16.mxu0 0
        %1974 = vmatpush1.bf16.msra.mxu0 %v1952
        %1975 = vmatprep.subr.bf16.mxu0 0
        %1976 = vmatpush1.bf16.msra.mxu0 %v1953
        %1977 = vmatprep.subr.bf16.mxu0 0
        %1978 = vmatpush1.bf16.msra.mxu0 %v1954
        %1979 = vmatprep.subr.bf16.mxu0 0
        %1980 = vmatpush1.bf16.msra.mxu0 0
        %1981 = vmatprep.subr.bf16.mxu0 0
        %1982 = vmatpush1.bf16.msra.mxu0 0
        %1983 = vmatprep.subr.bf16.mxu0 0
        %1984 = vmatpush1.bf16.msra.mxu0 0
        %1985 = vmatprep.subr.bf16.mxu0 0
        %1986 = vmatpush1.bf16.msra.mxu0 0
        %1987 = vmatprep.subr.bf16.mxu0 0
        %1988 = vmatpush1.bf16.msra.mxu0 0
        %1989 = vmatprep.subr.bf16.mxu0 0
        %1990 = vmatpush1.bf16.msra.mxu0 0
        %1991 = vmatprep.subr.bf16.mxu0 0
        %1992 = vmatpush1.bf16.msra.mxu0 0
        %1993 = vmatprep.subr.bf16.mxu0 0
        %1994 = vmatpush1.bf16.msra.mxu0 0
        %1995 = vmatprep.mubr.bf16.mxu0 0
        %1996 = vmatmul.mubr.bf16.gmra.mrb[0].mxu0 %v1883
        %v1997 = vpop.f32.mrb[0].mxu0
        %v1998 = vadd.f32 0.0, %v1997
        %v1999 = vpop.f32.mrb[0].mxu0
        %v2000 = vpop.f32.mrb[0].mxu0
        %v2001 = vadd.f32 0.0, %v2000
        %v2002 = vpop.f32.mrb[0].mxu0
        %2003 = vmatprep.mubr.bf16.mxu0 0
        %2004 = vmatmul.mubr.bf16.gmra.mrb[0].mxu0 %v1884
        %v2005 = vpop.f32.mrb[0].mxu0
        %v2006 = vadd.f32 0.0, %v2005
        %v2007 = vpop.f32.mrb[0].mxu0
        %v2008 = vpop.f32.mrb[0].mxu0
        %v2009 = vadd.f32 0.0, %v2008
        %v2010 = vpop.f32.mrb[0].mxu0
        %2011 = vmatprep.mubr.bf16.mxu0 0
        %2012 = vmatmul.mubr.bf16.gmra.mrb[0].mxu0 %v1885
        %v2013 = vpop.f32.mrb[0].mxu0
        %v2014 = vadd.f32 0.0, %v2013
        %v2015 = vpop.f32.mrb[0].mxu0
        %v2016 = vpop.f32.mrb[0].mxu0
        %v2017 = vadd.f32 0.0, %v2016
        %v2018 = vpop.f32.mrb[0].mxu0
        %2019 = vmatprep.mubr.bf16.mxu0 0
        %2020 = vmatmul.mubr.bf16.gmra.mrb[0].mxu0 %v1886
        %v2021 = vpop.f32.mrb[0].mxu0
        %v2022 = vadd.f32 0.0, %v2021
        %v2023 = vpop.f32.mrb[0].mxu0
        %v2024 = vpop.f32.mrb[0].mxu0
        %v2025 = vadd.f32 0.0, %v2024
        %v2026 = vpop.f32.mrb[0].mxu0
        %2027 = vmatprep.mubr.bf16.mxu0 0
        %2028 = vmatmul.mubr.bf16.gmra.mrb[0].mxu0 %v1887
        %v2029 = vpop.f32.mrb[0].mxu0
        %v2030 = vadd.f32 0.0, %v2029
        %v2031 = vpop.f32.mrb[0].mxu0
        %v2032 = vpop.f32.mrb[0].mxu0
        %v2033 = vadd.f32 0.0, %v2032
        %v2034 = vpop.f32.mrb[0].mxu0
        %2035 = vmatprep.mubr.bf16.mxu0 0
        %2036 = vmatmul.mubr.bf16.gmra.mrb[0].mxu0 %v1888
        %v2037 = vpop.f32.mrb[0].mxu0
        %v2038 = vadd.f32 0.0, %v2037
        %v2039 = vpop.f32.mrb[0].mxu0
        %v2040 = vpop.f32.mrb[0].mxu0
        %v2041 = vadd.f32 0.0, %v2040
        %v2042 = vpop.f32.mrb[0].mxu0
        %2043 = vmatprep.mubr.bf16.mxu0 0
        %2044 = vmatmul.mubr.bf16.gmra.mrb[0].mxu0 %v1889
        %v2045 = vpop.f32.mrb[0].mxu0
        %v2046 = vadd.f32 0.0, %v2045
        %v2047 = vpop.f32.mrb[0].mxu0
        %v2048 = vpop.f32.mrb[0].mxu0
        %v2049 = vadd.f32 0.0, %v2048
        %v2050 = vpop.f32.mrb[0].mxu0
        %2051 = vmatprep.mubr.bf16.mxu0 0
        %2052 = vmatmul.mubr.bf16.gmra.mrb[0].mxu0 %v1890
        %v2053 = vpop.f32.mrb[0].mxu0
        %v2054 = vadd.f32 0.0, %v2053
        %v2055 = vpop.f32.mrb[0].mxu0
        %v2056 = vpop.f32.mrb[0].mxu0
        %v2057 = vadd.f32 0.0, %v2056
        %v2058 = vpop.f32.mrb[0].mxu0
        %2059 = vmatprep.mubr.bf16.mxu0 0
        %2060 = vmatmul.mubr.bf16.gmra.mrb[0].mxu0 %v1891
        %v2061 = vpop.f32.mrb[0].mxu0
        %v2062 = vadd.f32 0.0, %v2061
        %v2063 = vpop.f32.mrb[0].mxu0
        %v2064 = vpop.f32.mrb[0].mxu0
        %v2065 = vadd.f32 0.0, %v2064
        %v2066 = vpop.f32.mrb[0].mxu0
        %2067 = vmatprep.mubr.bf16.mxu0 0
        %2068 = vmatmul.mubr.bf16.gmra.mrb[0].mxu0 %v1892
        %v2069 = vpop.f32.mrb[0].mxu0
        %v2070 = vadd.f32 0.0, %v2069
        %v2071 = vpop.f32.mrb[0].mxu0
        %v2072 = vpop.f32.mrb[0].mxu0
        %v2073 = vadd.f32 0.0, %v2072
        %v2074 = vpop.f32.mrb[0].mxu0
        %2075 = vmatprep.mubr.bf16.mxu0 0
        %2076 = vmatmul.mubr.bf16.gmra.mrb[0].mxu0 %v1893
        %v2077 = vpop.f32.mrb[0].mxu0
        %v2078 = vadd.f32 0.0, %v2077
        %v2079 = vpop.f32.mrb[0].mxu0
        %v2080 = vpop.f32.mrb[0].mxu0
        %v2081 = vadd.f32 0.0, %v2080
        %v2082 = vpop.f32.mrb[0].mxu0
        %2083 = vmatprep.mubr.bf16.mxu0 0
        %2084 = vmatmul.mubr.bf16.gmra.mrb[0].mxu0 %v1894
        %v2085 = vpop.f32.mrb[0].mxu0
        %v2086 = vadd.f32 0.0, %v2085
        %v2087 = vpop.f32.mrb[0].mxu0
        %v2088 = vpop.f32.mrb[0].mxu0
        %v2089 = vadd.f32 0.0, %v2088
        %v2090 = vpop.f32.mrb[0].mxu0
        %2091 = vmatprep.mubr.bf16.mxu0 0
        %2092 = vmatmul.mubr.bf16.gmra.mrb[0].mxu0 %v1895
        %v2093 = vpop.f32.mrb[0].mxu0
        %v2094 = vadd.f32 0.0, %v2093
        %v2095 = vpop.f32.mrb[0].mxu0
        %v2096 = vpop.f32.mrb[0].mxu0
        %v2097 = vadd.f32 0.0, %v2096
        %v2098 = vpop.f32.mrb[0].mxu0
        %2099 = vmatprep.mubr.bf16.mxu0 0
        %2100 = vmatmul.mubr.bf16.gmra.mrb[0].mxu0 %v1896
        %v2101 = vpop.f32.mrb[0].mxu0
        %v2102 = vadd.f32 0.0, %v2101
        %v2103 = vpop.f32.mrb[0].mxu0
        %v2104 = vpop.f32.mrb[0].mxu0
        %v2105 = vadd.f32 0.0, %v2104
        %v2106 = vpop.f32.mrb[0].mxu0
        %2107 = vmatprep.mubr.bf16.mxu0 0
        %2108 = vmatmul.mubr.bf16.gmra.mrb[0].mxu0 %v1897
        %v2109 = vpop.f32.mrb[0].mxu0
        %v2110 = vadd.f32 0.0, %v2109
        %v2111 = vpop.f32.mrb[0].mxu0
        %v2112 = vpop.f32.mrb[0].mxu0
        %v2113 = vadd.f32 0.0, %v2112
        %v2114 = vpop.f32.mrb[0].mxu0
        %2115 = vmatprep.mubr.bf16.mxu0 0
        %2116 = vmatmul.mubr.bf16.gmra.mrb[0].mxu0 %v1898
        %v2117 = vpop.f32.mrb[0].mxu0
        %v2118 = vadd.f32 0.0, %v2117
        %v2119 = vpop.f32.mrb[0].mxu0
        %v2120 = vpop.f32.mrb[0].mxu0
        %v2121 = vadd.f32 0.0, %v2120
        %v2122 = vpop.f32.mrb[0].mxu0
        %2123 = vdwg.mxu0
        %v2124 = vadd.f32 %v1737, %v1998
        %v2125 = vadd.f32 %v1738, %v2001
        %v2126 = vadd.f32 %v1739, %v2006
        %v2127 = vadd.f32 %v1740, %v2009
        %v2128 = vadd.f32 %v1741, %v2014
        %v2129 = vadd.f32 %v1742, %v2017
        %v2130 = vadd.f32 %v1743, %v2022
        %v2131 = vadd.f32 %v1744, %v2025
        %v2132 = vadd.f32 %v1745, %v2030
        %v2133 = vadd.f32 %v1746, %v2033
        %v2134 = vadd.f32 %v1747, %v2038
        %v2135 = vadd.f32 %v1748, %v2041
        %v2136 = vadd.f32 %v1749, %v2046
        %v2137 = vadd.f32 %v1750, %v2049
        %v2138 = vadd.f32 %v1751, %v2054
        %v2139 = vadd.f32 %v1752, %v2057
        %v2140 = vadd.f32 %v1753, %v2062
        %v2141 = vadd.f32 %v1754, %v2065
        %v2142 = vadd.f32 %v1755, %v2070
        %v2143 = vadd.f32 %v1756, %v2073
        %v2144 = vadd.f32 %v1757, %v2078
        %v2145 = vadd.f32 %v1758, %v2081
        %v2146 = vadd.f32 %v1759, %v2086
        %v2147 = vadd.f32 %v1760, %v2089
        %v2148 = vadd.f32 %v1761, %v2094
        %v2149 = vadd.f32 %v1762, %v2097
        %v2150 = vadd.f32 %v1763, %v2102
        %v2151 = vadd.f32 %v1764, %v2105
        %v2152 = vadd.f32 %v1765, %v2110
        %v2153 = vadd.f32 %v1766, %v2113
        %v2154 = vadd.f32 %v1767, %v2118
        %v2155 = vadd.f32 %v1768, %v2121
        %v2156 = vld [vmem:[%s1769] sm:$0xf]
        %v2157 = vld [vmem:[%s1769 + $0x4] sm:$0xf]
        %v2158 = vld [vmem:[%s1769 + $0x8] sm:$0x1]
        %v2159 = vld [vmem:[%s1769 + $0xc] sm:$0xf]
        %v2160 = vld [vmem:[%s1769 + $0x10] sm:$0xf]
        %v2161 = vld [vmem:[%s1769 + $0x14] sm:$0x1]
        %v2162 = vld [vmem:[%s1769 + $0x18] sm:$0xf]
        %v2163 = vld [vmem:[%s1769 + $0x1c] sm:$0xf]
        %v2164 = vld [vmem:[%s1769 + $0x20] sm:$0x1]
        %v2165 = vld [vmem:[%s1769 + $0x24] sm:$0xf]
        %v2166 = vld [vmem:[%s1769 + $0x28] sm:$0xf]
        %v2167 = vld [vmem:[%s1769 + $0x2c] sm:$0x1]
        %v2168 = vld [vmem:[%s1769 + $0x30] sm:$0xf]
        %v2169 = vld [vmem:[%s1769 + $0x34] sm:$0xf]
        %v2170 = vld [vmem:[%s1769 + $0x38] sm:$0x1]
        %v2171 = vld [vmem:[%s1769 + $0x3c] sm:$0xf]
        %v2172 = vld [vmem:[%s1769 + $0x40] sm:$0xf]
        %v2173 = vld [vmem:[%s1769 + $0x44] sm:$0x1]
        %v2174 = vld [vmem:[%s1769 + $0x48] sm:$0xf]
        %v2175 = vld [vmem:[%s1769 + $0x4c] sm:$0xf]
        %v2176 = vld [vmem:[%s1769 + $0x50] sm:$0x1]
        %v2177 = vld [vmem:[%s1769 + $0x54] sm:$0xf]
        %v2178 = vld [vmem:[%s1769 + $0x58] sm:$0xf]
        %v2179 = vld [vmem:[%s1769 + $0x5c] sm:$0x1]
        %v2180 = vld [vmem:[%s1769 + $0x60] sm:$0xf]
        %v2181 = vld [vmem:[%s1769 + $0x64] sm:$0xf]
        %v2182 = vld [vmem:[%s1769 + $0x68] sm:$0x1]
        %v2183 = vld [vmem:[%s1769 + $0x6c] sm:$0xf]
        %v2184 = vld [vmem:[%s1769 + $0x70] sm:$0xf]
        %v2185 = vld [vmem:[%s1769 + $0x74] sm:$0x1]
        %v2186 = vld [vmem:[%s1769 + $0x78] sm:$0xf]
        %v2187 = vld [vmem:[%s1769 + $0x7c] sm:$0xf]
        %v2188 = vld [vmem:[%s1769 + $0x80] sm:$0x1]
        %v2189 = vld [vmem:[%s1769 + $0x84] sm:$0xf]
        %v2190 = vld [vmem:[%s1769 + $0x88] sm:$0xf]
        %v2191 = vld [vmem:[%s1769 + $0x8c] sm:$0x1]
        %v2192 = vld [vmem:[%s1769 + $0x90] sm:$0xf]
        %v2193 = vld [vmem:[%s1769 + $0x94] sm:$0xf]
        %v2194 = vld [vmem:[%s1769 + $0x98] sm:$0x1]
        %v2195 = vld [vmem:[%s1769 + $0x9c] sm:$0xf]
        %v2196 = vld [vmem:[%s1769 + $0xa0] sm:$0xf]
        %v2197 = vld [vmem:[%s1769 + $0xa4] sm:$0x1]
        %v2198 = vld [vmem:[%s1769 + $0xa8] sm:$0xf]
        %v2199 = vld [vmem:[%s1769 + $0xac] sm:$0xf]
        %v2200 = vld [vmem:[%s1769 + $0xb0] sm:$0x1]
        %v2201 = vld [vmem:[%s1769 + $0xb4] sm:$0xf]
        %v2202 = vld [vmem:[%s1769 + $0xb8] sm:$0xf]
        %v2203 = vld [vmem:[%s1769 + $0xbc] sm:$0x1]
        %v2205 = vshrl.u32 %v2156, 16
        %v2207 = vrot.slane %v2205, 4
        %v2208 = vshll.u32 %v2156, 16
        %v2210 = vrot.slane %v2208, 5
        %v2211 = vor.u32 %v2207, %v2210
        %v2212 = vrot.slane %v2211, 4
        %v2214 = vshll.u32 %v2157, 16
        %v2216 = vrot.slane %v2214, 5
        %v2217 = vsel %vm304, %v2212, %v2216
        %v2218 = vshrl.u32 %v2157, 16
        %v2220 = vrot.slane %v2218, 4
        %v2221 = vor.u32 %v2220, %v2216
        %v2222 = vrot.slane %v2221, 4
        %v2224 = vshll.u32 %v2158, 16
        %v2226 = vrot.slane %v2224, 5
        %v2227 = vsel %vm304, %v2222, %v2226
        %v2229 = vshrl.u32 %v2159, 16
        %v2231 = vrot.slane %v2229, 4
        %v2232 = vshll.u32 %v2159, 16
        %v2234 = vrot.slane %v2232, 5
        %v2235 = vor.u32 %v2231, %v2234
        %v2236 = vrot.slane %v2235, 4
        %v2238 = vshll.u32 %v2160, 16
        %v2240 = vrot.slane %v2238, 5
        %v2241 = vsel %vm304, %v2236, %v2240
        %v2242 = vshrl.u32 %v2160, 16
        %v2244 = vrot.slane %v2242, 4
        %v2245 = vor.u32 %v2244, %v2240
        %v2246 = vrot.slane %v2245, 4
        %v2248 = vshll.u32 %v2161, 16
        %v2250 = vrot.slane %v2248, 5
        %v2251 = vsel %vm304, %v2246, %v2250
        %v2253 = vshrl.u32 %v2162, 16
        %v2255 = vrot.slane %v2253, 4
        %v2256 = vshll.u32 %v2162, 16
        %v2258 = vrot.slane %v2256, 5
        %v2259 = vor.u32 %v2255, %v2258
        %v2260 = vrot.slane %v2259, 4
        %v2262 = vshll.u32 %v2163, 16
        %v2264 = vrot.slane %v2262, 5
        %v2265 = vsel %vm304, %v2260, %v2264
        %v2266 = vshrl.u32 %v2163, 16
        %v2268 = vrot.slane %v2266, 4
        %v2269 = vor.u32 %v2268, %v2264
        %v2270 = vrot.slane %v2269, 4
        %v2272 = vshll.u32 %v2164, 16
        %v2274 = vrot.slane %v2272, 5
        %v2275 = vsel %vm304, %v2270, %v2274
        %v2277 = vshrl.u32 %v2165, 16
        %v2279 = vrot.slane %v2277, 4
        %v2280 = vshll.u32 %v2165, 16
        %v2282 = vrot.slane %v2280, 5
        %v2283 = vor.u32 %v2279, %v2282
        %v2284 = vrot.slane %v2283, 4
        %v2286 = vshll.u32 %v2166, 16
        %v2288 = vrot.slane %v2286, 5
        %v2289 = vsel %vm304, %v2284, %v2288
        %v2290 = vshrl.u32 %v2166, 16
        %v2292 = vrot.slane %v2290, 4
        %v2293 = vor.u32 %v2292, %v2288
        %v2294 = vrot.slane %v2293, 4
        %v2296 = vshll.u32 %v2167, 16
        %v2298 = vrot.slane %v2296, 5
        %v2299 = vsel %vm304, %v2294, %v2298
        %v2301 = vshrl.u32 %v2168, 16
        %v2303 = vrot.slane %v2301, 4
        %v2304 = vshll.u32 %v2168, 16
        %v2306 = vrot.slane %v2304, 5
        %v2307 = vor.u32 %v2303, %v2306
        %v2308 = vrot.slane %v2307, 4
        %v2310 = vshll.u32 %v2169, 16
        %v2312 = vrot.slane %v2310, 5
        %v2313 = vsel %vm304, %v2308, %v2312
        %v2314 = vshrl.u32 %v2169, 16
        %v2316 = vrot.slane %v2314, 4
        %v2317 = vor.u32 %v2316, %v2312
        %v2318 = vrot.slane %v2317, 4
        %v2320 = vshll.u32 %v2170, 16
        %v2322 = vrot.slane %v2320, 5
        %v2323 = vsel %vm304, %v2318, %v2322
        %v2325 = vshrl.u32 %v2171, 16
        %v2327 = vrot.slane %v2325, 4
        %v2328 = vshll.u32 %v2171, 16
        %v2330 = vrot.slane %v2328, 5
        %v2331 = vor.u32 %v2327, %v2330
        %v2332 = vrot.slane %v2331, 4
        %v2334 = vshll.u32 %v2172, 16
        %v2336 = vrot.slane %v2334, 5
        %v2337 = vsel %vm304, %v2332, %v2336
        %v2338 = vshrl.u32 %v2172, 16
        %v2340 = vrot.slane %v2338, 4
        %v2341 = vor.u32 %v2340, %v2336
        %v2342 = vrot.slane %v2341, 4
        %v2344 = vshll.u32 %v2173, 16
        %v2346 = vrot.slane %v2344, 5
        %v2347 = vsel %vm304, %v2342, %v2346
        %v2349 = vshrl.u32 %v2174, 16
        %v2351 = vrot.slane %v2349, 4
        %v2352 = vshll.u32 %v2174, 16
        %v2354 = vrot.slane %v2352, 5
        %v2355 = vor.u32 %v2351, %v2354
        %v2356 = vrot.slane %v2355, 4
        %v2358 = vshll.u32 %v2175, 16
        %v2360 = vrot.slane %v2358, 5
        %v2361 = vsel %vm304, %v2356, %v2360
        %v2362 = vshrl.u32 %v2175, 16
        %v2364 = vrot.slane %v2362, 4
        %v2365 = vor.u32 %v2364, %v2360
        %v2366 = vrot.slane %v2365, 4
        %v2368 = vshll.u32 %v2176, 16
        %v2370 = vrot.slane %v2368, 5
        %v2371 = vsel %vm304, %v2366, %v2370
        %v2373 = vshrl.u32 %v2177, 16
        %v2375 = vrot.slane %v2373, 4
        %v2376 = vshll.u32 %v2177, 16
        %v2378 = vrot.slane %v2376, 5
        %v2379 = vor.u32 %v2375, %v2378
        %v2380 = vrot.slane %v2379, 4
        %v2382 = vshll.u32 %v2178, 16
        %v2384 = vrot.slane %v2382, 5
        %v2385 = vsel %vm304, %v2380, %v2384
        %v2386 = vshrl.u32 %v2178, 16
        %v2388 = vrot.slane %v2386, 4
        %v2389 = vor.u32 %v2388, %v2384
        %v2390 = vrot.slane %v2389, 4
        %v2392 = vshll.u32 %v2179, 16
        %v2394 = vrot.slane %v2392, 5
        %v2395 = vsel %vm304, %v2390, %v2394
        %v2397 = vshrl.u32 %v2180, 16
        %v2399 = vrot.slane %v2397, 4
        %v2400 = vshll.u32 %v2180, 16
        %v2402 = vrot.slane %v2400, 5
        %v2403 = vor.u32 %v2399, %v2402
        %v2404 = vrot.slane %v2403, 4
        %v2406 = vshll.u32 %v2181, 16
        %v2408 = vrot.slane %v2406, 5
        %v2409 = vsel %vm304, %v2404, %v2408
        %v2410 = vshrl.u32 %v2181, 16
        %v2412 = vrot.slane %v2410, 4
        %v2413 = vor.u32 %v2412, %v2408
        %v2414 = vrot.slane %v2413, 4
        %v2416 = vshll.u32 %v2182, 16
        %v2418 = vrot.slane %v2416, 5
        %v2419 = vsel %vm304, %v2414, %v2418
        %v2421 = vshrl.u32 %v2183, 16
        %v2423 = vrot.slane %v2421, 4
        %v2424 = vshll.u32 %v2183, 16
        %v2426 = vrot.slane %v2424, 5
        %v2427 = vor.u32 %v2423, %v2426
        %v2428 = vrot.slane %v2427, 4
        %v2430 = vshll.u32 %v2184, 16
        %v2432 = vrot.slane %v2430, 5
        %v2433 = vsel %vm304, %v2428, %v2432
        %v2434 = vshrl.u32 %v2184, 16
        %v2436 = vrot.slane %v2434, 4
        %v2437 = vor.u32 %v2436, %v2432
        %v2438 = vrot.slane %v2437, 4
        %v2440 = vshll.u32 %v2185, 16
        %v2442 = vrot.slane %v2440, 5
        %v2443 = vsel %vm304, %v2438, %v2442
        %v2445 = vshrl.u32 %v2186, 16
        %v2447 = vrot.slane %v2445, 4
        %v2448 = vshll.u32 %v2186, 16
        %v2450 = vrot.slane %v2448, 5
        %v2451 = vor.u32 %v2447, %v2450
        %v2452 = vrot.slane %v2451, 4
        %v2454 = vshll.u32 %v2187, 16
        %v2456 = vrot.slane %v2454, 5
        %v2457 = vsel %vm304, %v2452, %v2456
        %v2458 = vshrl.u32 %v2187, 16
        %v2460 = vrot.slane %v2458, 4
        %v2461 = vor.u32 %v2460, %v2456
        %v2462 = vrot.slane %v2461, 4
        %v2464 = vshll.u32 %v2188, 16
        %v2466 = vrot.slane %v2464, 5
        %v2467 = vsel %vm304, %v2462, %v2466
        %v2469 = vshrl.u32 %v2189, 16
        %v2471 = vrot.slane %v2469, 4
        %v2472 = vshll.u32 %v2189, 16
        %v2474 = vrot.slane %v2472, 5
        %v2475 = vor.u32 %v2471, %v2474
        %v2476 = vrot.slane %v2475, 4
        %v2478 = vshll.u32 %v2190, 16
        %v2480 = vrot.slane %v2478, 5
        %v2481 = vsel %vm304, %v2476, %v2480
        %v2482 = vshrl.u32 %v2190, 16
        %v2484 = vrot.slane %v2482, 4
        %v2485 = vor.u32 %v2484, %v2480
        %v2486 = vrot.slane %v2485, 4
        %v2488 = vshll.u32 %v2191, 16
        %v2490 = vrot.slane %v2488, 5
        %v2491 = vsel %vm304, %v2486, %v2490
        %v2493 = vshrl.u32 %v2192, 16
        %v2495 = vrot.slane %v2493, 4
        %v2496 = vshll.u32 %v2192, 16
        %v2498 = vrot.slane %v2496, 5
        %v2499 = vor.u32 %v2495, %v2498
        %v2500 = vrot.slane %v2499, 4
        %v2502 = vshll.u32 %v2193, 16
        %v2504 = vrot.slane %v2502, 5
        %v2505 = vsel %vm304, %v2500, %v2504
        %v2506 = vshrl.u32 %v2193, 16
        %v2508 = vrot.slane %v2506, 4
        %v2509 = vor.u32 %v2508, %v2504
        %v2510 = vrot.slane %v2509, 4
        %v2512 = vshll.u32 %v2194, 16
        %v2514 = vrot.slane %v2512, 5
        %v2515 = vsel %vm304, %v2510, %v2514
        %v2517 = vshrl.u32 %v2195, 16
        %v2519 = vrot.slane %v2517, 4
        %v2520 = vshll.u32 %v2195, 16
        %v2522 = vrot.slane %v2520, 5
        %v2523 = vor.u32 %v2519, %v2522
        %v2524 = vrot.slane %v2523, 4
        %v2526 = vshll.u32 %v2196, 16
        %v2528 = vrot.slane %v2526, 5
        %v2529 = vsel %vm304, %v2524, %v2528
        %v2530 = vshrl.u32 %v2196, 16
        %v2532 = vrot.slane %v2530, 4
        %v2533 = vor.u32 %v2532, %v2528
        %v2534 = vrot.slane %v2533, 4
        %v2536 = vshll.u32 %v2197, 16
        %v2538 = vrot.slane %v2536, 5
        %v2539 = vsel %vm304, %v2534, %v2538
        %v2541 = vshrl.u32 %v2198, 16
        %v2543 = vrot.slane %v2541, 4
        %v2544 = vshll.u32 %v2198, 16
        %v2546 = vrot.slane %v2544, 5
        %v2547 = vor.u32 %v2543, %v2546
        %v2548 = vrot.slane %v2547, 4
        %v2550 = vshll.u32 %v2199, 16
        %v2552 = vrot.slane %v2550, 5
        %v2553 = vsel %vm304, %v2548, %v2552
        %v2554 = vshrl.u32 %v2199, 16
        %v2556 = vrot.slane %v2554, 4
        %v2557 = vor.u32 %v2556, %v2552
        %v2558 = vrot.slane %v2557, 4
        %v2560 = vshll.u32 %v2200, 16
        %v2562 = vrot.slane %v2560, 5
        %v2563 = vsel %vm304, %v2558, %v2562
        %v2565 = vshrl.u32 %v2201, 16
        %v2567 = vrot.slane %v2565, 4
        %v2568 = vshll.u32 %v2201, 16
        %v2570 = vrot.slane %v2568, 5
        %v2571 = vor.u32 %v2567, %v2570
        %v2572 = vrot.slane %v2571, 4
        %v2574 = vshll.u32 %v2202, 16
        %v2576 = vrot.slane %v2574, 5
        %v2577 = vsel %vm304, %v2572, %v2576
        %v2578 = vshrl.u32 %v2202, 16
        %v2580 = vrot.slane %v2578, 4
        %v2581 = vor.u32 %v2580, %v2576
        %v2582 = vrot.slane %v2581, 4
        %v2584 = vshll.u32 %v2203, 16
        %v2586 = vrot.slane %v2584, 5
        %v2587 = vsel %vm304, %v2582, %v2586
        %s2588 = scalar_lea.vmem %s233, 256
        %v2589 = vld [vmem:[%s2588] sm:$0xf]
        %v2590 = vld [vmem:[%s2588 + $0x4] sm:$0xf]
        %v2591 = vld [vmem:[%s2588 + $0x8] sm:$0xf]
        %v2592 = vld [vmem:[%s2588 + $0xc] sm:$0xf]
        %v2593 = vld [vmem:[%s2588 + $0x10] sm:$0xf]
        %v2594 = vld [vmem:[%s2588 + $0x14] sm:$0xf]
        %v2595 = vld [vmem:[%s2588 + $0x18] sm:$0xf]
        %v2596 = vld [vmem:[%s2588 + $0x1c] sm:$0xf]
        %v2597 = vld [vmem:[%s2588 + $0x20] sm:$0xf]
        %v2598 = vld [vmem:[%s2588 + $0x24] sm:$0xf]
        %v2599 = vld [vmem:[%s2588 + $0x28] sm:$0xf]
        %v2600 = vld [vmem:[%s2588 + $0x2c] sm:$0xf]
        %v2601 = vld [vmem:[%s2588 + $0x30] sm:$0xf]
        %v2602 = vld [vmem:[%s2588 + $0x34] sm:$0xf]
        %v2603 = vld [vmem:[%s2588 + $0x38] sm:$0xf]
        %v2604 = vld [vmem:[%s2588 + $0x3c] sm:$0xf]
        %v2605 = vunpack.c.l.b16 %v2217
        %v2606 = vunpack.c.l.b16 %v2227
        %v2607 = vunpack.c.l.b16 %v2241
        %v2608 = vunpack.c.l.b16 %v2251
        %v2609 = vunpack.c.l.b16 %v2265
        %v2610 = vunpack.c.l.b16 %v2275
        %v2611 = vunpack.c.l.b16 %v2289
        %v2612 = vunpack.c.l.b16 %v2299
        %v2613 = vunpack.c.l.b16 %v2313
        %v2614 = vunpack.c.l.b16 %v2323
        %v2615 = vunpack.c.l.b16 %v2337
        %v2616 = vunpack.c.l.b16 %v2347
        %v2617 = vunpack.c.l.b16 %v2361
        %v2618 = vunpack.c.l.b16 %v2371
        %v2619 = vunpack.c.l.b16 %v2385
        %v2620 = vunpack.c.l.b16 %v2395
        %v2621 = vunpack.c.l.b16 %v2409
        %v2622 = vunpack.c.l.b16 %v2419
        %v2623 = vunpack.c.l.b16 %v2433
        %v2624 = vunpack.c.l.b16 %v2443
        %v2625 = vunpack.c.l.b16 %v2457
        %v2626 = vunpack.c.l.b16 %v2467
        %v2627 = vunpack.c.l.b16 %v2481
        %v2628 = vunpack.c.l.b16 %v2491
        %v2629 = vunpack.c.l.b16 %v2505
        %v2630 = vunpack.c.l.b16 %v2515
        %v2631 = vunpack.c.l.b16 %v2529
        %v2632 = vunpack.c.l.b16 %v2539
        %v2633 = vunpack.c.l.b16 %v2553
        %v2634 = vunpack.c.l.b16 %v2563
        %v2635 = vunpack.c.l.b16 %v2577
        %v2636 = vunpack.c.l.b16 %v2587
        %v2637 = vpack.c.b16 %v2606, %v2605
        %v2638 = vpack.c.b16 %v2608, %v2607
        %v2639 = vpack.c.b16 %v2610, %v2609
        %v2640 = vpack.c.b16 %v2612, %v2611
        %v2641 = vpack.c.b16 %v2614, %v2613
        %v2642 = vpack.c.b16 %v2616, %v2615
        %v2643 = vpack.c.b16 %v2618, %v2617
        %v2644 = vpack.c.b16 %v2620, %v2619
        %v2645 = vpack.c.b16 %v2622, %v2621
        %v2646 = vpack.c.b16 %v2624, %v2623
        %v2647 = vpack.c.b16 %v2626, %v2625
        %v2648 = vpack.c.b16 %v2628, %v2627
        %v2649 = vpack.c.b16 %v2630, %v2629
        %v2650 = vpack.c.b16 %v2632, %v2631
        %v2651 = vpack.c.b16 %v2634, %v2633
        %v2652 = vpack.c.b16 %v2636, %v2635
        %v2685 = vunpack.c.l.b16 %v2589
        %v2686 = vunpack.c.l.b16 %v2590
        %v2687 = vunpack.c.l.b16 %v2591
        %v2688 = vunpack.c.l.b16 %v2592
        %v2689 = vunpack.c.l.b16 %v2593
        %v2690 = vunpack.c.l.b16 %v2594
        %v2691 = vunpack.c.l.b16 %v2595
        %v2692 = vunpack.c.l.b16 %v2596
        %v2693 = vunpack.c.l.b16 %v2597
        %v2694 = vunpack.c.l.b16 %v2598
        %v2695 = vunpack.c.l.b16 %v2599
        %v2696 = vunpack.c.l.b16 %v2600
        %v2697 = vunpack.c.l.b16 %v2601
        %v2698 = vunpack.c.l.b16 %v2602
        %v2699 = vunpack.c.l.b16 %v2603
        %v2700 = vunpack.c.l.b16 %v2604
        %v2701 = vpack.c.b16 %v2686, %v2685
        %v2702 = vpack.c.b16 %v2688, %v2687
        %v2703 = vpack.c.b16 %v2690, %v2689
        %v2704 = vpack.c.b16 %v2692, %v2691
        %v2705 = vpack.c.b16 %v2694, %v2693
        %v2706 = vpack.c.b16 %v2696, %v2695
        %v2707 = vpack.c.b16 %v2698, %v2697
        %v2708 = vpack.c.b16 %v2700, %v2699
        %2717 = vmatprep.subr.bf16.mxu0 0
        %2718 = vmatpush1.bf16.msra.mxu0 %v2701
        %2719 = vmatprep.subr.bf16.mxu0 0
        %2720 = vmatpush1.bf16.msra.mxu0 %v2702
        %2721 = vmatprep.subr.bf16.mxu0 0
        %2722 = vmatpush1.bf16.msra.mxu0 %v2703
        %2723 = vmatprep.subr.bf16.mxu0 0
        %2724 = vmatpush1.bf16.msra.mxu0 %v2704
        %2725 = vmatprep.subr.bf16.mxu0 0
        %2726 = vmatpush1.bf16.msra.mxu0 %v2705
        %2727 = vmatprep.subr.bf16.mxu0 0
        %2728 = vmatpush1.bf16.msra.mxu0 %v2706
        %2729 = vmatprep.subr.bf16.mxu0 0
        %2730 = vmatpush1.bf16.msra.mxu0 %v2707
        %2731 = vmatprep.subr.bf16.mxu0 0
        %2732 = vmatpush1.bf16.msra.mxu0 %v2708
        %2733 = vmatprep.subr.bf16.mxu0 0
        %2734 = vmatpush1.bf16.msra.mxu0 0
        %2735 = vmatprep.subr.bf16.mxu0 0
        %2736 = vmatpush1.bf16.msra.mxu0 0
        %2737 = vmatprep.subr.bf16.mxu0 0
        %2738 = vmatpush1.bf16.msra.mxu0 0
        %2739 = vmatprep.subr.bf16.mxu0 0
        %2740 = vmatpush1.bf16.msra.mxu0 0
        %2741 = vmatprep.subr.bf16.mxu0 0
        %2742 = vmatpush1.bf16.msra.mxu0 0
        %2743 = vmatprep.subr.bf16.mxu0 0
        %2744 = vmatpush1.bf16.msra.mxu0 0
        %2745 = vmatprep.subr.bf16.mxu0 0
        %2746 = vmatpush1.bf16.msra.mxu0 0
        %2747 = vmatprep.subr.bf16.mxu0 0
        %2748 = vmatpush1.bf16.msra.mxu0 0
        %2749 = vmatprep.mubr.bf16.mxu0 0
        %2750 = vmatmul.mubr.bf16.gmra.mrb[0].mxu0 %v2637
        %v2751 = vpop.f32.mrb[0].mxu0
        %v2752 = vadd.f32 0.0, %v2751
        %v2753 = vpop.f32.mrb[0].mxu0
        %v2754 = vpop.f32.mrb[0].mxu0
        %v2755 = vadd.f32 0.0, %v2754
        %v2756 = vpop.f32.mrb[0].mxu0
        %2757 = vmatprep.mubr.bf16.mxu0 0
        %2758 = vmatmul.mubr.bf16.gmra.mrb[0].mxu0 %v2638
        %v2759 = vpop.f32.mrb[0].mxu0
        %v2760 = vadd.f32 0.0, %v2759
        %v2761 = vpop.f32.mrb[0].mxu0
        %v2762 = vpop.f32.mrb[0].mxu0
        %v2763 = vadd.f32 0.0, %v2762
        %v2764 = vpop.f32.mrb[0].mxu0
        %2765 = vmatprep.mubr.bf16.mxu0 0
        %2766 = vmatmul.mubr.bf16.gmra.mrb[0].mxu0 %v2639
        %v2767 = vpop.f32.mrb[0].mxu0
        %v2768 = vadd.f32 0.0, %v2767
        %v2769 = vpop.f32.mrb[0].mxu0
        %v2770 = vpop.f32.mrb[0].mxu0
        %v2771 = vadd.f32 0.0, %v2770
        %v2772 = vpop.f32.mrb[0].mxu0
        %2773 = vmatprep.mubr.bf16.mxu0 0
        %2774 = vmatmul.mubr.bf16.gmra.mrb[0].mxu0 %v2640
        %v2775 = vpop.f32.mrb[0].mxu0
        %v2776 = vadd.f32 0.0, %v2775
        %v2777 = vpop.f32.mrb[0].mxu0
        %v2778 = vpop.f32.mrb[0].mxu0
        %v2779 = vadd.f32 0.0, %v2778
        %v2780 = vpop.f32.mrb[0].mxu0
        %2781 = vmatprep.mubr.bf16.mxu0 0
        %2782 = vmatmul.mubr.bf16.gmra.mrb[0].mxu0 %v2641
        %v2783 = vpop.f32.mrb[0].mxu0
        %v2784 = vadd.f32 0.0, %v2783
        %v2785 = vpop.f32.mrb[0].mxu0
        %v2786 = vpop.f32.mrb[0].mxu0
        %v2787 = vadd.f32 0.0, %v2786
        %v2788 = vpop.f32.mrb[0].mxu0
        %2789 = vmatprep.mubr.bf16.mxu0 0
        %2790 = vmatmul.mubr.bf16.gmra.mrb[0].mxu0 %v2642
        %v2791 = vpop.f32.mrb[0].mxu0
        %v2792 = vadd.f32 0.0, %v2791
        %v2793 = vpop.f32.mrb[0].mxu0
        %v2794 = vpop.f32.mrb[0].mxu0
        %v2795 = vadd.f32 0.0, %v2794
        %v2796 = vpop.f32.mrb[0].mxu0
        %2797 = vmatprep.mubr.bf16.mxu0 0
        %2798 = vmatmul.mubr.bf16.gmra.mrb[0].mxu0 %v2643
        %v2799 = vpop.f32.mrb[0].mxu0
        %v2800 = vadd.f32 0.0, %v2799
        %v2801 = vpop.f32.mrb[0].mxu0
        %v2802 = vpop.f32.mrb[0].mxu0
        %v2803 = vadd.f32 0.0, %v2802
        %v2804 = vpop.f32.mrb[0].mxu0
        %2805 = vmatprep.mubr.bf16.mxu0 0
        %2806 = vmatmul.mubr.bf16.gmra.mrb[0].mxu0 %v2644
        %v2807 = vpop.f32.mrb[0].mxu0
        %v2808 = vadd.f32 0.0, %v2807
        %v2809 = vpop.f32.mrb[0].mxu0
        %v2810 = vpop.f32.mrb[0].mxu0
        %v2811 = vadd.f32 0.0, %v2810
        %v2812 = vpop.f32.mrb[0].mxu0
        %2813 = vmatprep.mubr.bf16.mxu0 0
        %2814 = vmatmul.mubr.bf16.gmra.mrb[0].mxu0 %v2645
        %v2815 = vpop.f32.mrb[0].mxu0
        %v2816 = vadd.f32 0.0, %v2815
        %v2817 = vpop.f32.mrb[0].mxu0
        %v2818 = vpop.f32.mrb[0].mxu0
        %v2819 = vadd.f32 0.0, %v2818
        %v2820 = vpop.f32.mrb[0].mxu0
        %2821 = vmatprep.mubr.bf16.mxu0 0
        %2822 = vmatmul.mubr.bf16.gmra.mrb[0].mxu0 %v2646
        %v2823 = vpop.f32.mrb[0].mxu0
        %v2824 = vadd.f32 0.0, %v2823
        %v2825 = vpop.f32.mrb[0].mxu0
        %v2826 = vpop.f32.mrb[0].mxu0
        %v2827 = vadd.f32 0.0, %v2826
        %v2828 = vpop.f32.mrb[0].mxu0
        %2829 = vmatprep.mubr.bf16.mxu0 0
        %2830 = vmatmul.mubr.bf16.gmra.mrb[0].mxu0 %v2647
        %v2831 = vpop.f32.mrb[0].mxu0
        %v2832 = vadd.f32 0.0, %v2831
        %v2833 = vpop.f32.mrb[0].mxu0
        %v2834 = vpop.f32.mrb[0].mxu0
        %v2835 = vadd.f32 0.0, %v2834
        %v2836 = vpop.f32.mrb[0].mxu0
        %2837 = vmatprep.mubr.bf16.mxu0 0
        %2838 = vmatmul.mubr.bf16.gmra.mrb[0].mxu0 %v2648
        %v2839 = vpop.f32.mrb[0].mxu0
        %v2840 = vadd.f32 0.0, %v2839
        %v2841 = vpop.f32.mrb[0].mxu0
        %v2842 = vpop.f32.mrb[0].mxu0
        %v2843 = vadd.f32 0.0, %v2842
        %v2844 = vpop.f32.mrb[0].mxu0
        %2845 = vmatprep.mubr.bf16.mxu0 0
        %2846 = vmatmul.mubr.bf16.gmra.mrb[0].mxu0 %v2649
        %v2847 = vpop.f32.mrb[0].mxu0
        %v2848 = vadd.f32 0.0, %v2847
        %v2849 = vpop.f32.mrb[0].mxu0
        %v2850 = vpop.f32.mrb[0].mxu0
        %v2851 = vadd.f32 0.0, %v2850
        %v2852 = vpop.f32.mrb[0].mxu0
        %2853 = vmatprep.mubr.bf16.mxu0 0
        %2854 = vmatmul.mubr.bf16.gmra.mrb[0].mxu0 %v2650
        %v2855 = vpop.f32.mrb[0].mxu0
        %v2856 = vadd.f32 0.0, %v2855
        %v2857 = vpop.f32.mrb[0].mxu0
        %v2858 = vpop.f32.mrb[0].mxu0
        %v2859 = vadd.f32 0.0, %v2858
        %v2860 = vpop.f32.mrb[0].mxu0
        %2861 = vmatprep.mubr.bf16.mxu0 0
        %2862 = vmatmul.mubr.bf16.gmra.mrb[0].mxu0 %v2651
        %v2863 = vpop.f32.mrb[0].mxu0
        %v2864 = vadd.f32 0.0, %v2863
        %v2865 = vpop.f32.mrb[0].mxu0
        %v2866 = vpop.f32.mrb[0].mxu0
        %v2867 = vadd.f32 0.0, %v2866
        %v2868 = vpop.f32.mrb[0].mxu0
        %2869 = vmatprep.mubr.bf16.mxu0 0
        %2870 = vmatmul.mubr.bf16.gmra.mrb[0].mxu0 %v2652
        %v2871 = vpop.f32.mrb[0].mxu0
        %v2872 = vadd.f32 0.0, %v2871
        %v2873 = vpop.f32.mrb[0].mxu0
        %v2874 = vpop.f32.mrb[0].mxu0
        %v2875 = vadd.f32 0.0, %v2874
        %v2876 = vpop.f32.mrb[0].mxu0
        %2877 = vdwg.mxu0
        %v2878 = vadd.f32 %v2124, %v2752
        %v2879 = vadd.f32 %v2125, %v2755
        %v2880 = vadd.f32 %v2126, %v2760
        %v2881 = vadd.f32 %v2127, %v2763
        %v2882 = vadd.f32 %v2128, %v2768
        %v2883 = vadd.f32 %v2129, %v2771
        %v2884 = vadd.f32 %v2130, %v2776
        %v2885 = vadd.f32 %v2131, %v2779
        %v2886 = vadd.f32 %v2132, %v2784
        %v2887 = vadd.f32 %v2133, %v2787
        %v2888 = vadd.f32 %v2134, %v2792
        %v2889 = vadd.f32 %v2135, %v2795
        %v2890 = vadd.f32 %v2136, %v2800
        %v2891 = vadd.f32 %v2137, %v2803
        %v2892 = vadd.f32 %v2138, %v2808
        %v2893 = vadd.f32 %v2139, %v2811
        %v2894 = vadd.f32 %v2140, %v2816
        %v2895 = vadd.f32 %v2141, %v2819
        %v2896 = vadd.f32 %v2142, %v2824
        %v2897 = vadd.f32 %v2143, %v2827
        %v2898 = vadd.f32 %v2144, %v2832
        %v2899 = vadd.f32 %v2145, %v2835
        %v2900 = vadd.f32 %v2146, %v2840
        %v2901 = vadd.f32 %v2147, %v2843
        %v2902 = vadd.f32 %v2148, %v2848
        %v2903 = vadd.f32 %v2149, %v2851
        %v2904 = vadd.f32 %v2150, %v2856
        %v2905 = vadd.f32 %v2151, %v2859
        %v2906 = vadd.f32 %v2152, %v2864
        %v2907 = vadd.f32 %v2153, %v2867
        %v2908 = vadd.f32 %v2154, %v2872
        %v2909 = vadd.f32 %v2155, %v2875
        %v2910 = vld [vmem:[%s1769] sm:$0xe]
        %v2911 = vld [vmem:[%s1769 + $0xc] sm:$0xe]
        %v2912 = vld [vmem:[%s1769 + $0x18] sm:$0xe]
        %v2913 = vld [vmem:[%s1769 + $0x24] sm:$0xe]
        %v2914 = vld [vmem:[%s1769 + $0x30] sm:$0xe]
        %v2915 = vld [vmem:[%s1769 + $0x3c] sm:$0xe]
        %v2916 = vld [vmem:[%s1769 + $0x48] sm:$0xe]
        %v2917 = vld [vmem:[%s1769 + $0x54] sm:$0xe]
        %v2918 = vld [vmem:[%s1769 + $0x60] sm:$0xe]
        %v2919 = vld [vmem:[%s1769 + $0x6c] sm:$0xe]
        %v2920 = vld [vmem:[%s1769 + $0x78] sm:$0xe]
        %v2921 = vld [vmem:[%s1769 + $0x84] sm:$0xe]
        %v2922 = vld [vmem:[%s1769 + $0x90] sm:$0xe]
        %v2923 = vld [vmem:[%s1769 + $0x9c] sm:$0xe]
        %v2924 = vld [vmem:[%s1769 + $0xa8] sm:$0xe]
        %v2925 = vld [vmem:[%s1769 + $0xb4] sm:$0xe]
        %v2974 = vrot.slane %v2910, 5
        %v2975 = vrot.slane %v2974, 4
        %v2976 = vrot.slane %v2157, 5
        %v2977 = vsel %vm1334, %v2975, %v2976
        %v2978 = vrot.slane %v2976, 4
        %v2979 = vrot.slane %v2158, 5
        %v2980 = vsel %vm1334, %v2978, %v2979
        %v2981 = vrot.slane %v2911, 5
        %v2982 = vrot.slane %v2981, 4
        %v2983 = vrot.slane %v2160, 5
        %v2984 = vsel %vm1334, %v2982, %v2983
        %v2985 = vrot.slane %v2983, 4
        %v2986 = vrot.slane %v2161, 5
        %v2987 = vsel %vm1334, %v2985, %v2986
        %v2988 = vrot.slane %v2912, 5
        %v2989 = vrot.slane %v2988, 4
        %v2990 = vrot.slane %v2163, 5
        %v2991 = vsel %vm1334, %v2989, %v2990
        %v2992 = vrot.slane %v2990, 4
        %v2993 = vrot.slane %v2164, 5
        %v2994 = vsel %vm1334, %v2992, %v2993
        %v2995 = vrot.slane %v2913, 5
        %v2996 = vrot.slane %v2995, 4
        %v2997 = vrot.slane %v2166, 5
        %v2998 = vsel %vm1334, %v2996, %v2997
        %v2999 = vrot.slane %v2997, 4
        %v3000 = vrot.slane %v2167, 5
        %v3001 = vsel %vm1334, %v2999, %v3000
        %v3002 = vrot.slane %v2914, 5
        %v3003 = vrot.slane %v3002, 4
        %v3004 = vrot.slane %v2169, 5
        %v3005 = vsel %vm1334, %v3003, %v3004
        %v3006 = vrot.slane %v3004, 4
        %v3007 = vrot.slane %v2170, 5
        %v3008 = vsel %vm1334, %v3006, %v3007
        %v3009 = vrot.slane %v2915, 5
        %v3010 = vrot.slane %v3009, 4
        %v3011 = vrot.slane %v2172, 5
        %v3012 = vsel %vm1334, %v3010, %v3011
        %v3013 = vrot.slane %v3011, 4
        %v3014 = vrot.slane %v2173, 5
        %v3015 = vsel %vm1334, %v3013, %v3014
        %v3016 = vrot.slane %v2916, 5
        %v3017 = vrot.slane %v3016, 4
        %v3018 = vrot.slane %v2175, 5
        %v3019 = vsel %vm1334, %v3017, %v3018
        %v3020 = vrot.slane %v3018, 4
        %v3021 = vrot.slane %v2176, 5
        %v3022 = vsel %vm1334, %v3020, %v3021
        %v3023 = vrot.slane %v2917, 5
        %v3024 = vrot.slane %v3023, 4
        %v3025 = vrot.slane %v2178, 5
        %v3026 = vsel %vm1334, %v3024, %v3025
        %v3027 = vrot.slane %v3025, 4
        %v3028 = vrot.slane %v2179, 5
        %v3029 = vsel %vm1334, %v3027, %v3028
        %v3030 = vrot.slane %v2918, 5
        %v3031 = vrot.slane %v3030, 4
        %v3032 = vrot.slane %v2181, 5
        %v3033 = vsel %vm1334, %v3031, %v3032
        %v3034 = vrot.slane %v3032, 4
        %v3035 = vrot.slane %v2182, 5
        %v3036 = vsel %vm1334, %v3034, %v3035
        %v3037 = vrot.slane %v2919, 5
        %v3038 = vrot.slane %v3037, 4
        %v3039 = vrot.slane %v2184, 5
        %v3040 = vsel %vm1334, %v3038, %v3039
        %v3041 = vrot.slane %v3039, 4
        %v3042 = vrot.slane %v2185, 5
        %v3043 = vsel %vm1334, %v3041, %v3042
        %v3044 = vrot.slane %v2920, 5
        %v3045 = vrot.slane %v3044, 4
        %v3046 = vrot.slane %v2187, 5
        %v3047 = vsel %vm1334, %v3045, %v3046
        %v3048 = vrot.slane %v3046, 4
        %v3049 = vrot.slane %v2188, 5
        %v3050 = vsel %vm1334, %v3048, %v3049
        %v3051 = vrot.slane %v2921, 5
        %v3052 = vrot.slane %v3051, 4
        %v3053 = vrot.slane %v2190, 5
        %v3054 = vsel %vm1334, %v3052, %v3053
        %v3055 = vrot.slane %v3053, 4
        %v3056 = vrot.slane %v2191, 5
        %v3057 = vsel %vm1334, %v3055, %v3056
        %v3058 = vrot.slane %v2922, 5
        %v3059 = vrot.slane %v3058, 4
        %v3060 = vrot.slane %v2193, 5
        %v3061 = vsel %vm1334, %v3059, %v3060
        %v3062 = vrot.slane %v3060, 4
        %v3063 = vrot.slane %v2194, 5
        %v3064 = vsel %vm1334, %v3062, %v3063
        %v3065 = vrot.slane %v2923, 5
        %v3066 = vrot.slane %v3065, 4
        %v3067 = vrot.slane %v2196, 5
        %v3068 = vsel %vm1334, %v3066, %v3067
        %v3069 = vrot.slane %v3067, 4
        %v3070 = vrot.slane %v2197, 5
        %v3071 = vsel %vm1334, %v3069, %v3070
        %v3072 = vrot.slane %v2924, 5
        %v3073 = vrot.slane %v3072, 4
        %v3074 = vrot.slane %v2199, 5
        %v3075 = vsel %vm1334, %v3073, %v3074
        %v3076 = vrot.slane %v3074, 4
        %v3077 = vrot.slane %v2200, 5
        %v3078 = vsel %vm1334, %v3076, %v3077
        %v3079 = vrot.slane %v2925, 5
        %v3080 = vrot.slane %v3079, 4
        %v3081 = vrot.slane %v2202, 5
        %v3082 = vsel %vm1334, %v3080, %v3081
        %v3083 = vrot.slane %v3081, 4
        %v3084 = vrot.slane %v2203, 5
        %v3085 = vsel %vm1334, %v3083, %v3084
        %s3086 = scalar_lea.vmem %s233, 320
        %v3087 = vld [vmem:[%s3086] sm:$0xf]
        %v3088 = vld [vmem:[%s3086 + $0x4] sm:$0xf]
        %v3089 = vld [vmem:[%s3086 + $0x8] sm:$0xf]
        %v3090 = vld [vmem:[%s3086 + $0xc] sm:$0xf]
        %v3091 = vld [vmem:[%s3086 + $0x10] sm:$0xf]
        %v3092 = vld [vmem:[%s3086 + $0x14] sm:$0xf]
        %v3093 = vld [vmem:[%s3086 + $0x18] sm:$0xf]
        %v3094 = vld [vmem:[%s3086 + $0x1c] sm:$0xf]
        %v3095 = vld [vmem:[%s3086 + $0x20] sm:$0xf]
        %v3096 = vld [vmem:[%s3086 + $0x24] sm:$0xf]
        %v3097 = vld [vmem:[%s3086 + $0x28] sm:$0xf]
        %v3098 = vld [vmem:[%s3086 + $0x2c] sm:$0xf]
        %v3099 = vld [vmem:[%s3086 + $0x30] sm:$0xf]
        %v3100 = vld [vmem:[%s3086 + $0x34] sm:$0xf]
        %v3101 = vld [vmem:[%s3086 + $0x38] sm:$0xf]
        %v3102 = vld [vmem:[%s3086 + $0x3c] sm:$0xf]
        %v3103 = vunpack.c.l.b16 %v2977
        %v3104 = vunpack.c.l.b16 %v2980
        %v3105 = vunpack.c.l.b16 %v2984
        %v3106 = vunpack.c.l.b16 %v2987
        %v3107 = vunpack.c.l.b16 %v2991
        %v3108 = vunpack.c.l.b16 %v2994
        %v3109 = vunpack.c.l.b16 %v2998
        %v3110 = vunpack.c.l.b16 %v3001
        %v3111 = vunpack.c.l.b16 %v3005
        %v3112 = vunpack.c.l.b16 %v3008
        %v3113 = vunpack.c.l.b16 %v3012
        %v3114 = vunpack.c.l.b16 %v3015
        %v3115 = vunpack.c.l.b16 %v3019
        %v3116 = vunpack.c.l.b16 %v3022
        %v3117 = vunpack.c.l.b16 %v3026
        %v3118 = vunpack.c.l.b16 %v3029
        %v3119 = vunpack.c.l.b16 %v3033
        %v3120 = vunpack.c.l.b16 %v3036
        %v3121 = vunpack.c.l.b16 %v3040
        %v3122 = vunpack.c.l.b16 %v3043
        %v3123 = vunpack.c.l.b16 %v3047
        %v3124 = vunpack.c.l.b16 %v3050
        %v3125 = vunpack.c.l.b16 %v3054
        %v3126 = vunpack.c.l.b16 %v3057
        %v3127 = vunpack.c.l.b16 %v3061
        %v3128 = vunpack.c.l.b16 %v3064
        %v3129 = vunpack.c.l.b16 %v3068
        %v3130 = vunpack.c.l.b16 %v3071
        %v3131 = vunpack.c.l.b16 %v3075
        %v3132 = vunpack.c.l.b16 %v3078
        %v3133 = vunpack.c.l.b16 %v3082
        %v3134 = vunpack.c.l.b16 %v3085
        %v3135 = vpack.c.b16 %v3104, %v3103
        %v3136 = vpack.c.b16 %v3106, %v3105
        %v3137 = vpack.c.b16 %v3108, %v3107
        %v3138 = vpack.c.b16 %v3110, %v3109
        %v3139 = vpack.c.b16 %v3112, %v3111
        %v3140 = vpack.c.b16 %v3114, %v3113
        %v3141 = vpack.c.b16 %v3116, %v3115
        %v3142 = vpack.c.b16 %v3118, %v3117
        %v3143 = vpack.c.b16 %v3120, %v3119
        %v3144 = vpack.c.b16 %v3122, %v3121
        %v3145 = vpack.c.b16 %v3124, %v3123
        %v3146 = vpack.c.b16 %v3126, %v3125
        %v3147 = vpack.c.b16 %v3128, %v3127
        %v3148 = vpack.c.b16 %v3130, %v3129
        %v3149 = vpack.c.b16 %v3132, %v3131
        %v3150 = vpack.c.b16 %v3134, %v3133
        %v3183 = vunpack.c.l.b16 %v3087
        %v3184 = vunpack.c.l.b16 %v3088
        %v3185 = vunpack.c.l.b16 %v3089
        %v3186 = vunpack.c.l.b16 %v3090
        %v3187 = vunpack.c.l.b16 %v3091
        %v3188 = vunpack.c.l.b16 %v3092
        %v3189 = vunpack.c.l.b16 %v3093
        %v3190 = vunpack.c.l.b16 %v3094
        %v3191 = vunpack.c.l.b16 %v3095
        %v3192 = vunpack.c.l.b16 %v3096
        %v3193 = vunpack.c.l.b16 %v3097
        %v3194 = vunpack.c.l.b16 %v3098
        %v3195 = vunpack.c.l.b16 %v3099
        %v3196 = vunpack.c.l.b16 %v3100
        %v3197 = vunpack.c.l.b16 %v3101
        %v3198 = vunpack.c.l.b16 %v3102
        %v3199 = vpack.c.b16 %v3184, %v3183
        %v3200 = vpack.c.b16 %v3186, %v3185
        %v3201 = vpack.c.b16 %v3188, %v3187
        %v3202 = vpack.c.b16 %v3190, %v3189
        %v3203 = vpack.c.b16 %v3192, %v3191
        %v3204 = vpack.c.b16 %v3194, %v3193
        %v3205 = vpack.c.b16 %v3196, %v3195
        %v3206 = vpack.c.b16 %v3198, %v3197
        %3215 = vmatprep.subr.bf16.mxu0 0
        %3216 = vmatpush1.bf16.msra.mxu0 %v3199
        %3217 = vmatprep.subr.bf16.mxu0 0
        %3218 = vmatpush1.bf16.msra.mxu0 %v3200
        %3219 = vmatprep.subr.bf16.mxu0 0
        %3220 = vmatpush1.bf16.msra.mxu0 %v3201
        %3221 = vmatprep.subr.bf16.mxu0 0
        %3222 = vmatpush1.bf16.msra.mxu0 %v3202
        %3223 = vmatprep.subr.bf16.mxu0 0
        %3224 = vmatpush1.bf16.msra.mxu0 %v3203
        %3225 = vmatprep.subr.bf16.mxu0 0
        %3226 = vmatpush1.bf16.msra.mxu0 %v3204
        %3227 = vmatprep.subr.bf16.mxu0 0
        %3228 = vmatpush1.bf16.msra.mxu0 %v3205
        %3229 = vmatprep.subr.bf16.mxu0 0
        %3230 = vmatpush1.bf16.msra.mxu0 %v3206
        %3231 = vmatprep.subr.bf16.mxu0 0
        %3232 = vmatpush1.bf16.msra.mxu0 0
        %3233 = vmatprep.subr.bf16.mxu0 0
        %3234 = vmatpush1.bf16.msra.mxu0 0
        %3235 = vmatprep.subr.bf16.mxu0 0
        %3236 = vmatpush1.bf16.msra.mxu0 0
        %3237 = vmatprep.subr.bf16.mxu0 0
        %3238 = vmatpush1.bf16.msra.mxu0 0
        %3239 = vmatprep.subr.bf16.mxu0 0
        %3240 = vmatpush1.bf16.msra.mxu0 0
        %3241 = vmatprep.subr.bf16.mxu0 0
        %3242 = vmatpush1.bf16.msra.mxu0 0
        %3243 = vmatprep.subr.bf16.mxu0 0
        %3244 = vmatpush1.bf16.msra.mxu0 0
        %3245 = vmatprep.subr.bf16.mxu0 0
        %3246 = vmatpush1.bf16.msra.mxu0 0
        %3247 = vmatprep.mubr.bf16.mxu0 0
        %3248 = vmatmul.mubr.bf16.gmra.mrb[0].mxu0 %v3135
        %v3249 = vpop.f32.mrb[0].mxu0
        %v3250 = vadd.f32 0.0, %v3249
        %v3251 = vpop.f32.mrb[0].mxu0
        %v3252 = vpop.f32.mrb[0].mxu0
        %v3253 = vadd.f32 0.0, %v3252
        %v3254 = vpop.f32.mrb[0].mxu0
        %3255 = vmatprep.mubr.bf16.mxu0 0
        %3256 = vmatmul.mubr.bf16.gmra.mrb[0].mxu0 %v3136
        %v3257 = vpop.f32.mrb[0].mxu0
        %v3258 = vadd.f32 0.0, %v3257
        %v3259 = vpop.f32.mrb[0].mxu0
        %v3260 = vpop.f32.mrb[0].mxu0
        %v3261 = vadd.f32 0.0, %v3260
        %v3262 = vpop.f32.mrb[0].mxu0
        %3263 = vmatprep.mubr.bf16.mxu0 0
        %3264 = vmatmul.mubr.bf16.gmra.mrb[0].mxu0 %v3137
        %v3265 = vpop.f32.mrb[0].mxu0
        %v3266 = vadd.f32 0.0, %v3265
        %v3267 = vpop.f32.mrb[0].mxu0
        %v3268 = vpop.f32.mrb[0].mxu0
        %v3269 = vadd.f32 0.0, %v3268
        %v3270 = vpop.f32.mrb[0].mxu0
        %3271 = vmatprep.mubr.bf16.mxu0 0
        %3272 = vmatmul.mubr.bf16.gmra.mrb[0].mxu0 %v3138
        %v3273 = vpop.f32.mrb[0].mxu0
        %v3274 = vadd.f32 0.0, %v3273
        %v3275 = vpop.f32.mrb[0].mxu0
        %v3276 = vpop.f32.mrb[0].mxu0
        %v3277 = vadd.f32 0.0, %v3276
        %v3278 = vpop.f32.mrb[0].mxu0
        %3279 = vmatprep.mubr.bf16.mxu0 0
        %3280 = vmatmul.mubr.bf16.gmra.mrb[0].mxu0 %v3139
        %v3281 = vpop.f32.mrb[0].mxu0
        %v3282 = vadd.f32 0.0, %v3281
        %v3283 = vpop.f32.mrb[0].mxu0
        %v3284 = vpop.f32.mrb[0].mxu0
        %v3285 = vadd.f32 0.0, %v3284
        %v3286 = vpop.f32.mrb[0].mxu0
        %3287 = vmatprep.mubr.bf16.mxu0 0
        %3288 = vmatmul.mubr.bf16.gmra.mrb[0].mxu0 %v3140
        %v3289 = vpop.f32.mrb[0].mxu0
        %v3290 = vadd.f32 0.0, %v3289
        %v3291 = vpop.f32.mrb[0].mxu0
        %v3292 = vpop.f32.mrb[0].mxu0
        %v3293 = vadd.f32 0.0, %v3292
        %v3294 = vpop.f32.mrb[0].mxu0
        %3295 = vmatprep.mubr.bf16.mxu0 0
        %3296 = vmatmul.mubr.bf16.gmra.mrb[0].mxu0 %v3141
        %v3297 = vpop.f32.mrb[0].mxu0
        %v3298 = vadd.f32 0.0, %v3297
        %v3299 = vpop.f32.mrb[0].mxu0
        %v3300 = vpop.f32.mrb[0].mxu0
        %v3301 = vadd.f32 0.0, %v3300
        %v3302 = vpop.f32.mrb[0].mxu0
        %3303 = vmatprep.mubr.bf16.mxu0 0
        %3304 = vmatmul.mubr.bf16.gmra.mrb[0].mxu0 %v3142
        %v3305 = vpop.f32.mrb[0].mxu0
        %v3306 = vadd.f32 0.0, %v3305
        %v3307 = vpop.f32.mrb[0].mxu0
        %v3308 = vpop.f32.mrb[0].mxu0
        %v3309 = vadd.f32 0.0, %v3308
        %v3310 = vpop.f32.mrb[0].mxu0
        %3311 = vmatprep.mubr.bf16.mxu0 0
        %3312 = vmatmul.mubr.bf16.gmra.mrb[0].mxu0 %v3143
        %v3313 = vpop.f32.mrb[0].mxu0
        %v3314 = vadd.f32 0.0, %v3313
        %v3315 = vpop.f32.mrb[0].mxu0
        %v3316 = vpop.f32.mrb[0].mxu0
        %v3317 = vadd.f32 0.0, %v3316
        %v3318 = vpop.f32.mrb[0].mxu0
        %3319 = vmatprep.mubr.bf16.mxu0 0
        %3320 = vmatmul.mubr.bf16.gmra.mrb[0].mxu0 %v3144
        %v3321 = vpop.f32.mrb[0].mxu0
        %v3322 = vadd.f32 0.0, %v3321
        %v3323 = vpop.f32.mrb[0].mxu0
        %v3324 = vpop.f32.mrb[0].mxu0
        %v3325 = vadd.f32 0.0, %v3324
        %v3326 = vpop.f32.mrb[0].mxu0
        %3327 = vmatprep.mubr.bf16.mxu0 0
        %3328 = vmatmul.mubr.bf16.gmra.mrb[0].mxu0 %v3145
        %v3329 = vpop.f32.mrb[0].mxu0
        %v3330 = vadd.f32 0.0, %v3329
        %v3331 = vpop.f32.mrb[0].mxu0
        %v3332 = vpop.f32.mrb[0].mxu0
        %v3333 = vadd.f32 0.0, %v3332
        %v3334 = vpop.f32.mrb[0].mxu0
        %3335 = vmatprep.mubr.bf16.mxu0 0
        %3336 = vmatmul.mubr.bf16.gmra.mrb[0].mxu0 %v3146
        %v3337 = vpop.f32.mrb[0].mxu0
        %v3338 = vadd.f32 0.0, %v3337
        %v3339 = vpop.f32.mrb[0].mxu0
        %v3340 = vpop.f32.mrb[0].mxu0
        %v3341 = vadd.f32 0.0, %v3340
        %v3342 = vpop.f32.mrb[0].mxu0
        %3343 = vmatprep.mubr.bf16.mxu0 0
        %3344 = vmatmul.mubr.bf16.gmra.mrb[0].mxu0 %v3147
        %v3345 = vpop.f32.mrb[0].mxu0
        %v3346 = vadd.f32 0.0, %v3345
        %v3347 = vpop.f32.mrb[0].mxu0
        %v3348 = vpop.f32.mrb[0].mxu0
        %v3349 = vadd.f32 0.0, %v3348
        %v3350 = vpop.f32.mrb[0].mxu0
        %3351 = vmatprep.mubr.bf16.mxu0 0
        %3352 = vmatmul.mubr.bf16.gmra.mrb[0].mxu0 %v3148
        %v3353 = vpop.f32.mrb[0].mxu0
        %v3354 = vadd.f32 0.0, %v3353
        %v3355 = vpop.f32.mrb[0].mxu0
        %v3356 = vpop.f32.mrb[0].mxu0
        %v3357 = vadd.f32 0.0, %v3356
        %v3358 = vpop.f32.mrb[0].mxu0
        %3359 = vmatprep.mubr.bf16.mxu0 0
        %3360 = vmatmul.mubr.bf16.gmra.mrb[0].mxu0 %v3149
        %v3361 = vpop.f32.mrb[0].mxu0
        %v3362 = vadd.f32 0.0, %v3361
        %v3363 = vpop.f32.mrb[0].mxu0
        %v3364 = vpop.f32.mrb[0].mxu0
        %v3365 = vadd.f32 0.0, %v3364
        %v3366 = vpop.f32.mrb[0].mxu0
        %3367 = vmatprep.mubr.bf16.mxu0 0
        %3368 = vmatmul.mubr.bf16.gmra.mrb[0].mxu0 %v3150
        %v3369 = vpop.f32.mrb[0].mxu0
        %v3370 = vadd.f32 0.0, %v3369
        %v3371 = vpop.f32.mrb[0].mxu0
        %v3372 = vpop.f32.mrb[0].mxu0
        %v3373 = vadd.f32 0.0, %v3372
        %v3374 = vpop.f32.mrb[0].mxu0
        %3375 = vdwg.mxu0
        %v3376 = vadd.f32 %v2878, %v3250
        %v3377 = vadd.f32 %v2879, %v3253
        %v3378 = vadd.f32 %v2880, %v3258
        %v3379 = vadd.f32 %v2881, %v3261
        %v3380 = vadd.f32 %v2882, %v3266
        %v3381 = vadd.f32 %v2883, %v3269
        %v3382 = vadd.f32 %v2884, %v3274
        %v3383 = vadd.f32 %v2885, %v3277
        %v3384 = vadd.f32 %v2886, %v3282
        %v3385 = vadd.f32 %v2887, %v3285
        %v3386 = vadd.f32 %v2888, %v3290
        %v3387 = vadd.f32 %v2889, %v3293
        %v3388 = vadd.f32 %v2890, %v3298
        %v3389 = vadd.f32 %v2891, %v3301
        %v3390 = vadd.f32 %v2892, %v3306
        %v3391 = vadd.f32 %v2893, %v3309
        %v3392 = vadd.f32 %v2894, %v3314
        %v3393 = vadd.f32 %v2895, %v3317
        %v3394 = vadd.f32 %v2896, %v3322
        %v3395 = vadd.f32 %v2897, %v3325
        %v3396 = vadd.f32 %v2898, %v3330
        %v3397 = vadd.f32 %v2899, %v3333
        %v3398 = vadd.f32 %v2900, %v3338
        %v3399 = vadd.f32 %v2901, %v3341
        %v3400 = vadd.f32 %v2902, %v3346
        %v3401 = vadd.f32 %v2903, %v3349
        %v3402 = vadd.f32 %v2904, %v3354
        %v3403 = vadd.f32 %v2905, %v3357
        %v3404 = vadd.f32 %v2906, %v3362
        %v3405 = vadd.f32 %v2907, %v3365
        %v3406 = vadd.f32 %v2908, %v3370
        %v3407 = vadd.f32 %v2909, %v3373
        %s3408 = scalar_lea.vmem %s229, 24
        %v3409 = vld [vmem:[%s3408] sm:$0xf]
        %v3410 = vld [vmem:[%s3408 + $0x4] sm:$0xf]
        %v3411 = vld [vmem:[%s3408 + $0xc] sm:$0xf]
        %v3412 = vld [vmem:[%s3408 + $0x10] sm:$0xf]
        %v3413 = vld [vmem:[%s3408 + $0x18] sm:$0xf]
        %v3414 = vld [vmem:[%s3408 + $0x1c] sm:$0xf]
        %v3415 = vld [vmem:[%s3408 + $0x24] sm:$0xf]
        %v3416 = vld [vmem:[%s3408 + $0x28] sm:$0xf]
        %v3417 = vld [vmem:[%s3408 + $0x30] sm:$0xf]
        %v3418 = vld [vmem:[%s3408 + $0x34] sm:$0xf]
        %v3419 = vld [vmem:[%s3408 + $0x3c] sm:$0xf]
        %v3420 = vld [vmem:[%s3408 + $0x40] sm:$0xf]
        %v3421 = vld [vmem:[%s3408 + $0x48] sm:$0xf]
        %v3422 = vld [vmem:[%s3408 + $0x4c] sm:$0xf]
        %v3423 = vld [vmem:[%s3408 + $0x54] sm:$0xf]
        %v3424 = vld [vmem:[%s3408 + $0x58] sm:$0xf]
        %v3425 = vld [vmem:[%s3408 + $0x60] sm:$0xf]
        %v3426 = vld [vmem:[%s3408 + $0x64] sm:$0xf]
        %v3427 = vld [vmem:[%s3408 + $0x6c] sm:$0xf]
        %v3428 = vld [vmem:[%s3408 + $0x70] sm:$0xf]
        %v3429 = vld [vmem:[%s3408 + $0x78] sm:$0xf]
        %v3430 = vld [vmem:[%s3408 + $0x7c] sm:$0xf]
        %v3431 = vld [vmem:[%s3408 + $0x84] sm:$0xf]
        %v3432 = vld [vmem:[%s3408 + $0x88] sm:$0xf]
        %v3433 = vld [vmem:[%s3408 + $0x90] sm:$0xf]
        %v3434 = vld [vmem:[%s3408 + $0x94] sm:$0xf]
        %v3435 = vld [vmem:[%s3408 + $0x9c] sm:$0xf]
        %v3436 = vld [vmem:[%s3408 + $0xa0] sm:$0xf]
        %v3437 = vld [vmem:[%s3408 + $0xa8] sm:$0xf]
        %v3438 = vld [vmem:[%s3408 + $0xac] sm:$0xf]
        %v3439 = vld [vmem:[%s3408 + $0xb4] sm:$0xf]
        %v3440 = vld [vmem:[%s3408 + $0xb8] sm:$0xf]
        %s3441 = scalar_lea.vmem %s233, 384
        %v3442 = vld [vmem:[%s3441] sm:$0xf]
        %v3443 = vld [vmem:[%s3441 + $0x4] sm:$0xf]
        %v3444 = vld [vmem:[%s3441 + $0x8] sm:$0xf]
        %v3445 = vld [vmem:[%s3441 + $0xc] sm:$0xf]
        %v3446 = vld [vmem:[%s3441 + $0x10] sm:$0xf]
        %v3447 = vld [vmem:[%s3441 + $0x14] sm:$0xf]
        %v3448 = vld [vmem:[%s3441 + $0x18] sm:$0xf]
        %v3449 = vld [vmem:[%s3441 + $0x1c] sm:$0xf]
        %v3450 = vld [vmem:[%s3441 + $0x20] sm:$0xf]
        %v3451 = vld [vmem:[%s3441 + $0x24] sm:$0xf]
        %v3452 = vld [vmem:[%s3441 + $0x28] sm:$0xf]
        %v3453 = vld [vmem:[%s3441 + $0x2c] sm:$0xf]
        %v3454 = vld [vmem:[%s3441 + $0x30] sm:$0xf]
        %v3455 = vld [vmem:[%s3441 + $0x34] sm:$0xf]
        %v3456 = vld [vmem:[%s3441 + $0x38] sm:$0xf]
        %v3457 = vld [vmem:[%s3441 + $0x3c] sm:$0xf]
        %v3490 = vunpack.c.l.b16 %v3409
        %v3491 = vunpack.c.l.b16 %v3410
        %v3492 = vunpack.c.l.b16 %v3411
        %v3493 = vunpack.c.l.b16 %v3412
        %v3494 = vunpack.c.l.b16 %v3413
        %v3495 = vunpack.c.l.b16 %v3414
        %v3496 = vunpack.c.l.b16 %v3415
        %v3497 = vunpack.c.l.b16 %v3416
        %v3498 = vunpack.c.l.b16 %v3417
        %v3499 = vunpack.c.l.b16 %v3418
        %v3500 = vunpack.c.l.b16 %v3419
        %v3501 = vunpack.c.l.b16 %v3420
        %v3502 = vunpack.c.l.b16 %v3421
        %v3503 = vunpack.c.l.b16 %v3422
        %v3504 = vunpack.c.l.b16 %v3423
        %v3505 = vunpack.c.l.b16 %v3424
        %v3506 = vunpack.c.l.b16 %v3425
        %v3507 = vunpack.c.l.b16 %v3426
        %v3508 = vunpack.c.l.b16 %v3427
        %v3509 = vunpack.c.l.b16 %v3428
        %v3510 = vunpack.c.l.b16 %v3429
        %v3511 = vunpack.c.l.b16 %v3430
        %v3512 = vunpack.c.l.b16 %v3431
        %v3513 = vunpack.c.l.b16 %v3432
        %v3514 = vunpack.c.l.b16 %v3433
        %v3515 = vunpack.c.l.b16 %v3434
        %v3516 = vunpack.c.l.b16 %v3435
        %v3517 = vunpack.c.l.b16 %v3436
        %v3518 = vunpack.c.l.b16 %v3437
        %v3519 = vunpack.c.l.b16 %v3438
        %v3520 = vunpack.c.l.b16 %v3439
        %v3521 = vunpack.c.l.b16 %v3440
        %v3522 = vpack.c.b16 %v3491, %v3490
        %v3523 = vpack.c.b16 %v3493, %v3492
        %v3524 = vpack.c.b16 %v3495, %v3494
        %v3525 = vpack.c.b16 %v3497, %v3496
        %v3526 = vpack.c.b16 %v3499, %v3498
        %v3527 = vpack.c.b16 %v3501, %v3500
        %v3528 = vpack.c.b16 %v3503, %v3502
        %v3529 = vpack.c.b16 %v3505, %v3504
        %v3530 = vpack.c.b16 %v3507, %v3506
        %v3531 = vpack.c.b16 %v3509, %v3508
        %v3532 = vpack.c.b16 %v3511, %v3510
        %v3533 = vpack.c.b16 %v3513, %v3512
        %v3534 = vpack.c.b16 %v3515, %v3514
        %v3535 = vpack.c.b16 %v3517, %v3516
        %v3536 = vpack.c.b16 %v3519, %v3518
        %v3537 = vpack.c.b16 %v3521, %v3520
        %v3570 = vunpack.c.l.b16 %v3442
        %v3571 = vunpack.c.l.b16 %v3443
        %v3572 = vunpack.c.l.b16 %v3444
        %v3573 = vunpack.c.l.b16 %v3445
        %v3574 = vunpack.c.l.b16 %v3446
        %v3575 = vunpack.c.l.b16 %v3447
        %v3576 = vunpack.c.l.b16 %v3448
        %v3577 = vunpack.c.l.b16 %v3449
        %v3578 = vunpack.c.l.b16 %v3450
        %v3579 = vunpack.c.l.b16 %v3451
        %v3580 = vunpack.c.l.b16 %v3452
        %v3581 = vunpack.c.l.b16 %v3453
        %v3582 = vunpack.c.l.b16 %v3454
        %v3583 = vunpack.c.l.b16 %v3455
        %v3584 = vunpack.c.l.b16 %v3456
        %v3585 = vunpack.c.l.b16 %v3457
        %v3586 = vpack.c.b16 %v3571, %v3570
        %v3587 = vpack.c.b16 %v3573, %v3572
        %v3588 = vpack.c.b16 %v3575, %v3574
        %v3589 = vpack.c.b16 %v3577, %v3576
        %v3590 = vpack.c.b16 %v3579, %v3578
        %v3591 = vpack.c.b16 %v3581, %v3580
        %v3592 = vpack.c.b16 %v3583, %v3582
        %v3593 = vpack.c.b16 %v3585, %v3584
        %3602 = vmatprep.subr.bf16.mxu0 0
        %3603 = vmatpush1.bf16.msra.mxu0 %v3586
        %3604 = vmatprep.subr.bf16.mxu0 0
        %3605 = vmatpush1.bf16.msra.mxu0 %v3587
        %3606 = vmatprep.subr.bf16.mxu0 0
        %3607 = vmatpush1.bf16.msra.mxu0 %v3588
        %3608 = vmatprep.subr.bf16.mxu0 0
        %3609 = vmatpush1.bf16.msra.mxu0 %v3589
        %3610 = vmatprep.subr.bf16.mxu0 0
        %3611 = vmatpush1.bf16.msra.mxu0 %v3590
        %3612 = vmatprep.subr.bf16.mxu0 0
        %3613 = vmatpush1.bf16.msra.mxu0 %v3591
        %3614 = vmatprep.subr.bf16.mxu0 0
        %3615 = vmatpush1.bf16.msra.mxu0 %v3592
        %3616 = vmatprep.subr.bf16.mxu0 0
        %3617 = vmatpush1.bf16.msra.mxu0 %v3593
        %3618 = vmatprep.subr.bf16.mxu0 0
        %3619 = vmatpush1.bf16.msra.mxu0 0
        %3620 = vmatprep.subr.bf16.mxu0 0
        %3621 = vmatpush1.bf16.msra.mxu0 0
        %3622 = vmatprep.subr.bf16.mxu0 0
        %3623 = vmatpush1.bf16.msra.mxu0 0
        %3624 = vmatprep.subr.bf16.mxu0 0
        %3625 = vmatpush1.bf16.msra.mxu0 0
        %3626 = vmatprep.subr.bf16.mxu0 0
        %3627 = vmatpush1.bf16.msra.mxu0 0
        %3628 = vmatprep.subr.bf16.mxu0 0
        %3629 = vmatpush1.bf16.msra.mxu0 0
        %3630 = vmatprep.subr.bf16.mxu0 0
        %3631 = vmatpush1.bf16.msra.mxu0 0
        %3632 = vmatprep.subr.bf16.mxu0 0
        %3633 = vmatpush1.bf16.msra.mxu0 0
        %3634 = vmatprep.mubr.bf16.mxu0 0
        %3635 = vmatmul.mubr.bf16.gmra.mrb[0].mxu0 %v3522
        %v3636 = vpop.f32.mrb[0].mxu0
        %v3637 = vadd.f32 0.0, %v3636
        %v3638 = vpop.f32.mrb[0].mxu0
        %v3639 = vpop.f32.mrb[0].mxu0
        %v3640 = vadd.f32 0.0, %v3639
        %v3641 = vpop.f32.mrb[0].mxu0
        %3642 = vmatprep.mubr.bf16.mxu0 0
        %3643 = vmatmul.mubr.bf16.gmra.mrb[0].mxu0 %v3523
        %v3644 = vpop.f32.mrb[0].mxu0
        %v3645 = vadd.f32 0.0, %v3644
        %v3646 = vpop.f32.mrb[0].mxu0
        %v3647 = vpop.f32.mrb[0].mxu0
        %v3648 = vadd.f32 0.0, %v3647
        %v3649 = vpop.f32.mrb[0].mxu0
        %3650 = vmatprep.mubr.bf16.mxu0 0
        %3651 = vmatmul.mubr.bf16.gmra.mrb[0].mxu0 %v3524
        %v3652 = vpop.f32.mrb[0].mxu0
        %v3653 = vadd.f32 0.0, %v3652
        %v3654 = vpop.f32.mrb[0].mxu0
        %v3655 = vpop.f32.mrb[0].mxu0
        %v3656 = vadd.f32 0.0, %v3655
        %v3657 = vpop.f32.mrb[0].mxu0
        %3658 = vmatprep.mubr.bf16.mxu0 0
        %3659 = vmatmul.mubr.bf16.gmra.mrb[0].mxu0 %v3525
        %v3660 = vpop.f32.mrb[0].mxu0
        %v3661 = vadd.f32 0.0, %v3660
        %v3662 = vpop.f32.mrb[0].mxu0
        %v3663 = vpop.f32.mrb[0].mxu0
        %v3664 = vadd.f32 0.0, %v3663
        %v3665 = vpop.f32.mrb[0].mxu0
        %3666 = vmatprep.mubr.bf16.mxu0 0
        %3667 = vmatmul.mubr.bf16.gmra.mrb[0].mxu0 %v3526
        %v3668 = vpop.f32.mrb[0].mxu0
        %v3669 = vadd.f32 0.0, %v3668
        %v3670 = vpop.f32.mrb[0].mxu0
        %v3671 = vpop.f32.mrb[0].mxu0
        %v3672 = vadd.f32 0.0, %v3671
        %v3673 = vpop.f32.mrb[0].mxu0
        %3674 = vmatprep.mubr.bf16.mxu0 0
        %3675 = vmatmul.mubr.bf16.gmra.mrb[0].mxu0 %v3527
        %v3676 = vpop.f32.mrb[0].mxu0
        %v3677 = vadd.f32 0.0, %v3676
        %v3678 = vpop.f32.mrb[0].mxu0
        %v3679 = vpop.f32.mrb[0].mxu0
        %v3680 = vadd.f32 0.0, %v3679
        %v3681 = vpop.f32.mrb[0].mxu0
        %3682 = vmatprep.mubr.bf16.mxu0 0
        %3683 = vmatmul.mubr.bf16.gmra.mrb[0].mxu0 %v3528
        %v3684 = vpop.f32.mrb[0].mxu0
        %v3685 = vadd.f32 0.0, %v3684
        %v3686 = vpop.f32.mrb[0].mxu0
        %v3687 = vpop.f32.mrb[0].mxu0
        %v3688 = vadd.f32 0.0, %v3687
        %v3689 = vpop.f32.mrb[0].mxu0
        %3690 = vmatprep.mubr.bf16.mxu0 0
        %3691 = vmatmul.mubr.bf16.gmra.mrb[0].mxu0 %v3529
        %v3692 = vpop.f32.mrb[0].mxu0
        %v3693 = vadd.f32 0.0, %v3692
        %v3694 = vpop.f32.mrb[0].mxu0
        %v3695 = vpop.f32.mrb[0].mxu0
        %v3696 = vadd.f32 0.0, %v3695
        %v3697 = vpop.f32.mrb[0].mxu0
        %3698 = vmatprep.mubr.bf16.mxu0 0
        %3699 = vmatmul.mubr.bf16.gmra.mrb[0].mxu0 %v3530
        %v3700 = vpop.f32.mrb[0].mxu0
        %v3701 = vadd.f32 0.0, %v3700
        %v3702 = vpop.f32.mrb[0].mxu0
        %v3703 = vpop.f32.mrb[0].mxu0
        %v3704 = vadd.f32 0.0, %v3703
        %v3705 = vpop.f32.mrb[0].mxu0
        %3706 = vmatprep.mubr.bf16.mxu0 0
        %3707 = vmatmul.mubr.bf16.gmra.mrb[0].mxu0 %v3531
        %v3708 = vpop.f32.mrb[0].mxu0
        %v3709 = vadd.f32 0.0, %v3708
        %v3710 = vpop.f32.mrb[0].mxu0
        %v3711 = vpop.f32.mrb[0].mxu0
        %v3712 = vadd.f32 0.0, %v3711
        %v3713 = vpop.f32.mrb[0].mxu0
        %3714 = vmatprep.mubr.bf16.mxu0 0
        %3715 = vmatmul.mubr.bf16.gmra.mrb[0].mxu0 %v3532
        %v3716 = vpop.f32.mrb[0].mxu0
        %v3717 = vadd.f32 0.0, %v3716
        %v3718 = vpop.f32.mrb[0].mxu0
        %v3719 = vpop.f32.mrb[0].mxu0
        %v3720 = vadd.f32 0.0, %v3719
        %v3721 = vpop.f32.mrb[0].mxu0
        %3722 = vmatprep.mubr.bf16.mxu0 0
        %3723 = vmatmul.mubr.bf16.gmra.mrb[0].mxu0 %v3533
        %v3724 = vpop.f32.mrb[0].mxu0
        %v3725 = vadd.f32 0.0, %v3724
        %v3726 = vpop.f32.mrb[0].mxu0
        %v3727 = vpop.f32.mrb[0].mxu0
        %v3728 = vadd.f32 0.0, %v3727
        %v3729 = vpop.f32.mrb[0].mxu0
        %3730 = vmatprep.mubr.bf16.mxu0 0
        %3731 = vmatmul.mubr.bf16.gmra.mrb[0].mxu0 %v3534
        %v3732 = vpop.f32.mrb[0].mxu0
        %v3733 = vadd.f32 0.0, %v3732
        %v3734 = vpop.f32.mrb[0].mxu0
        %v3735 = vpop.f32.mrb[0].mxu0
        %v3736 = vadd.f32 0.0, %v3735
        %v3737 = vpop.f32.mrb[0].mxu0
        %3738 = vmatprep.mubr.bf16.mxu0 0
        %3739 = vmatmul.mubr.bf16.gmra.mrb[0].mxu0 %v3535
        %v3740 = vpop.f32.mrb[0].mxu0
        %v3741 = vadd.f32 0.0, %v3740
        %v3742 = vpop.f32.mrb[0].mxu0
        %v3743 = vpop.f32.mrb[0].mxu0
        %v3744 = vadd.f32 0.0, %v3743
        %v3745 = vpop.f32.mrb[0].mxu0
        %3746 = vmatprep.mubr.bf16.mxu0 0
        %3747 = vmatmul.mubr.bf16.gmra.mrb[0].mxu0 %v3536
        %v3748 = vpop.f32.mrb[0].mxu0
        %v3749 = vadd.f32 0.0, %v3748
        %v3750 = vpop.f32.mrb[0].mxu0
        %v3751 = vpop.f32.mrb[0].mxu0
        %v3752 = vadd.f32 0.0, %v3751
        %v3753 = vpop.f32.mrb[0].mxu0
        %3754 = vmatprep.mubr.bf16.mxu0 0
        %3755 = vmatmul.mubr.bf16.gmra.mrb[0].mxu0 %v3537
        %v3756 = vpop.f32.mrb[0].mxu0
        %v3757 = vadd.f32 0.0, %v3756
        %v3758 = vpop.f32.mrb[0].mxu0
        %v3759 = vpop.f32.mrb[0].mxu0
        %v3760 = vadd.f32 0.0, %v3759
        %v3761 = vpop.f32.mrb[0].mxu0
        %3762 = vdwg.mxu0
        %v3763 = vadd.f32 %v3376, %v3637
        %v3764 = vadd.f32 %v3377, %v3640
        %v3765 = vadd.f32 %v3378, %v3645
        %v3766 = vadd.f32 %v3379, %v3648
        %v3767 = vadd.f32 %v3380, %v3653
        %v3768 = vadd.f32 %v3381, %v3656
        %v3769 = vadd.f32 %v3382, %v3661
        %v3770 = vadd.f32 %v3383, %v3664
        %v3771 = vadd.f32 %v3384, %v3669
        %v3772 = vadd.f32 %v3385, %v3672
        %v3773 = vadd.f32 %v3386, %v3677
        %v3774 = vadd.f32 %v3387, %v3680
        %v3775 = vadd.f32 %v3388, %v3685
        %v3776 = vadd.f32 %v3389, %v3688
        %v3777 = vadd.f32 %v3390, %v3693
        %v3778 = vadd.f32 %v3391, %v3696
        %v3779 = vadd.f32 %v3392, %v3701
        %v3780 = vadd.f32 %v3393, %v3704
        %v3781 = vadd.f32 %v3394, %v3709
        %v3782 = vadd.f32 %v3395, %v3712
        %v3783 = vadd.f32 %v3396, %v3717
        %v3784 = vadd.f32 %v3397, %v3720
        %v3785 = vadd.f32 %v3398, %v3725
        %v3786 = vadd.f32 %v3399, %v3728
        %v3787 = vadd.f32 %v3400, %v3733
        %v3788 = vadd.f32 %v3401, %v3736
        %v3789 = vadd.f32 %v3402, %v3741
        %v3790 = vadd.f32 %v3403, %v3744
        %v3791 = vadd.f32 %v3404, %v3749
        %v3792 = vadd.f32 %v3405, %v3752
        %v3793 = vadd.f32 %v3406, %v3757
        %v3794 = vadd.f32 %v3407, %v3760
        %v3795 = vld [vmem:[%s3408] sm:$0xf]
        %v3796 = vld [vmem:[%s3408 + $0x4] sm:$0xf]
        %v3797 = vld [vmem:[%s3408 + $0x8] sm:$0x1]
        %v3798 = vld [vmem:[%s3408 + $0xc] sm:$0xf]
        %v3799 = vld [vmem:[%s3408 + $0x10] sm:$0xf]
        %v3800 = vld [vmem:[%s3408 + $0x14] sm:$0x1]
        %v3801 = vld [vmem:[%s3408 + $0x18] sm:$0xf]
        %v3802 = vld [vmem:[%s3408 + $0x1c] sm:$0xf]
        %v3803 = vld [vmem:[%s3408 + $0x20] sm:$0x1]
        %v3804 = vld [vmem:[%s3408 + $0x24] sm:$0xf]
        %v3805 = vld [vmem:[%s3408 + $0x28] sm:$0xf]
        %v3806 = vld [vmem:[%s3408 + $0x2c] sm:$0x1]
        %v3807 = vld [vmem:[%s3408 + $0x30] sm:$0xf]
        %v3808 = vld [vmem:[%s3408 + $0x34] sm:$0xf]
        %v3809 = vld [vmem:[%s3408 + $0x38] sm:$0x1]
        %v3810 = vld [vmem:[%s3408 + $0x3c] sm:$0xf]
        %v3811 = vld [vmem:[%s3408 + $0x40] sm:$0xf]
        %v3812 = vld [vmem:[%s3408 + $0x44] sm:$0x1]
        %v3813 = vld [vmem:[%s3408 + $0x48] sm:$0xf]
        %v3814 = vld [vmem:[%s3408 + $0x4c] sm:$0xf]
        %v3815 = vld [vmem:[%s3408 + $0x50] sm:$0x1]
        %v3816 = vld [vmem:[%s3408 + $0x54] sm:$0xf]
        %v3817 = vld [vmem:[%s3408 + $0x58] sm:$0xf]
        %v3818 = vld [vmem:[%s3408 + $0x5c] sm:$0x1]
        %v3819 = vld [vmem:[%s3408 + $0x60] sm:$0xf]
        %v3820 = vld [vmem:[%s3408 + $0x64] sm:$0xf]
        %v3821 = vld [vmem:[%s3408 + $0x68] sm:$0x1]
        %v3822 = vld [vmem:[%s3408 + $0x6c] sm:$0xf]
        %v3823 = vld [vmem:[%s3408 + $0x70] sm:$0xf]
        %v3824 = vld [vmem:[%s3408 + $0x74] sm:$0x1]
        %v3825 = vld [vmem:[%s3408 + $0x78] sm:$0xf]
        %v3826 = vld [vmem:[%s3408 + $0x7c] sm:$0xf]
        %v3827 = vld [vmem:[%s3408 + $0x80] sm:$0x1]
        %v3828 = vld [vmem:[%s3408 + $0x84] sm:$0xf]
        %v3829 = vld [vmem:[%s3408 + $0x88] sm:$0xf]
        %v3830 = vld [vmem:[%s3408 + $0x8c] sm:$0x1]
        %v3831 = vld [vmem:[%s3408 + $0x90] sm:$0xf]
        %v3832 = vld [vmem:[%s3408 + $0x94] sm:$0xf]
        %v3833 = vld [vmem:[%s3408 + $0x98] sm:$0x1]
        %v3834 = vld [vmem:[%s3408 + $0x9c] sm:$0xf]
        %v3835 = vld [vmem:[%s3408 + $0xa0] sm:$0xf]
        %v3836 = vld [vmem:[%s3408 + $0xa4] sm:$0x1]
        %v3837 = vld [vmem:[%s3408 + $0xa8] sm:$0xf]
        %v3838 = vld [vmem:[%s3408 + $0xac] sm:$0xf]
        %v3839 = vld [vmem:[%s3408 + $0xb0] sm:$0x1]
        %v3840 = vld [vmem:[%s3408 + $0xb4] sm:$0xf]
        %v3841 = vld [vmem:[%s3408 + $0xb8] sm:$0xf]
        %v3842 = vld [vmem:[%s3408 + $0xbc] sm:$0x1]
        %v3844 = vshrl.u32 %v3795, 16
        %v3846 = vrot.slane %v3844, 4
        %v3847 = vshll.u32 %v3795, 16
        %v3849 = vrot.slane %v3847, 5
        %v3850 = vor.u32 %v3846, %v3849
        %v3851 = vrot.slane %v3850, 4
        %v3853 = vshll.u32 %v3796, 16
        %v3855 = vrot.slane %v3853, 5
        %v3856 = vsel %vm304, %v3851, %v3855
        %v3857 = vshrl.u32 %v3796, 16
        %v3859 = vrot.slane %v3857, 4
        %v3860 = vor.u32 %v3859, %v3855
        %v3861 = vrot.slane %v3860, 4
        %v3863 = vshll.u32 %v3797, 16
        %v3865 = vrot.slane %v3863, 5
        %v3866 = vsel %vm304, %v3861, %v3865
        %v3868 = vshrl.u32 %v3798, 16
        %v3870 = vrot.slane %v3868, 4
        %v3871 = vshll.u32 %v3798, 16
        %v3873 = vrot.slane %v3871, 5
        %v3874 = vor.u32 %v3870, %v3873
        %v3875 = vrot.slane %v3874, 4
        %v3877 = vshll.u32 %v3799, 16
        %v3879 = vrot.slane %v3877, 5
        %v3880 = vsel %vm304, %v3875, %v3879
        %v3881 = vshrl.u32 %v3799, 16
        %v3883 = vrot.slane %v3881, 4
        %v3884 = vor.u32 %v3883, %v3879
        %v3885 = vrot.slane %v3884, 4
        %v3887 = vshll.u32 %v3800, 16
        %v3889 = vrot.slane %v3887, 5
        %v3890 = vsel %vm304, %v3885, %v3889
        %v3892 = vshrl.u32 %v3801, 16
        %v3894 = vrot.slane %v3892, 4
        %v3895 = vshll.u32 %v3801, 16
        %v3897 = vrot.slane %v3895, 5
        %v3898 = vor.u32 %v3894, %v3897
        %v3899 = vrot.slane %v3898, 4
        %v3901 = vshll.u32 %v3802, 16
        %v3903 = vrot.slane %v3901, 5
        %v3904 = vsel %vm304, %v3899, %v3903
        %v3905 = vshrl.u32 %v3802, 16
        %v3907 = vrot.slane %v3905, 4
        %v3908 = vor.u32 %v3907, %v3903
        %v3909 = vrot.slane %v3908, 4
        %v3911 = vshll.u32 %v3803, 16
        %v3913 = vrot.slane %v3911, 5
        %v3914 = vsel %vm304, %v3909, %v3913
        %v3916 = vshrl.u32 %v3804, 16
        %v3918 = vrot.slane %v3916, 4
        %v3919 = vshll.u32 %v3804, 16
        %v3921 = vrot.slane %v3919, 5
        %v3922 = vor.u32 %v3918, %v3921
        %v3923 = vrot.slane %v3922, 4
        %v3925 = vshll.u32 %v3805, 16
        %v3927 = vrot.slane %v3925, 5
        %v3928 = vsel %vm304, %v3923, %v3927
        %v3929 = vshrl.u32 %v3805, 16
        %v3931 = vrot.slane %v3929, 4
        %v3932 = vor.u32 %v3931, %v3927
        %v3933 = vrot.slane %v3932, 4
        %v3935 = vshll.u32 %v3806, 16
        %v3937 = vrot.slane %v3935, 5
        %v3938 = vsel %vm304, %v3933, %v3937
        %v3940 = vshrl.u32 %v3807, 16
        %v3942 = vrot.slane %v3940, 4
        %v3943 = vshll.u32 %v3807, 16
        %v3945 = vrot.slane %v3943, 5
        %v3946 = vor.u32 %v3942, %v3945
        %v3947 = vrot.slane %v3946, 4
        %v3949 = vshll.u32 %v3808, 16
        %v3951 = vrot.slane %v3949, 5
        %v3952 = vsel %vm304, %v3947, %v3951
        %v3953 = vshrl.u32 %v3808, 16
        %v3955 = vrot.slane %v3953, 4
        %v3956 = vor.u32 %v3955, %v3951
        %v3957 = vrot.slane %v3956, 4
        %v3959 = vshll.u32 %v3809, 16
        %v3961 = vrot.slane %v3959, 5
        %v3962 = vsel %vm304, %v3957, %v3961
        %v3964 = vshrl.u32 %v3810, 16
        %v3966 = vrot.slane %v3964, 4
        %v3967 = vshll.u32 %v3810, 16
        %v3969 = vrot.slane %v3967, 5
        %v3970 = vor.u32 %v3966, %v3969
        %v3971 = vrot.slane %v3970, 4
        %v3973 = vshll.u32 %v3811, 16
        %v3975 = vrot.slane %v3973, 5
        %v3976 = vsel %vm304, %v3971, %v3975
        %v3977 = vshrl.u32 %v3811, 16
        %v3979 = vrot.slane %v3977, 4
        %v3980 = vor.u32 %v3979, %v3975
        %v3981 = vrot.slane %v3980, 4
        %v3983 = vshll.u32 %v3812, 16
        %v3985 = vrot.slane %v3983, 5
        %v3986 = vsel %vm304, %v3981, %v3985
        %v3988 = vshrl.u32 %v3813, 16
        %v3990 = vrot.slane %v3988, 4
        %v3991 = vshll.u32 %v3813, 16
        %v3993 = vrot.slane %v3991, 5
        %v3994 = vor.u32 %v3990, %v3993
        %v3995 = vrot.slane %v3994, 4
        %v3997 = vshll.u32 %v3814, 16
        %v3999 = vrot.slane %v3997, 5
        %v4000 = vsel %vm304, %v3995, %v3999
        %v4001 = vshrl.u32 %v3814, 16
        %v4003 = vrot.slane %v4001, 4
        %v4004 = vor.u32 %v4003, %v3999
        %v4005 = vrot.slane %v4004, 4
        %v4007 = vshll.u32 %v3815, 16
        %v4009 = vrot.slane %v4007, 5
        %v4010 = vsel %vm304, %v4005, %v4009
        %v4012 = vshrl.u32 %v3816, 16
        %v4014 = vrot.slane %v4012, 4
        %v4015 = vshll.u32 %v3816, 16
        %v4017 = vrot.slane %v4015, 5
        %v4018 = vor.u32 %v4014, %v4017
        %v4019 = vrot.slane %v4018, 4
        %v4021 = vshll.u32 %v3817, 16
        %v4023 = vrot.slane %v4021, 5
        %v4024 = vsel %vm304, %v4019, %v4023
        %v4025 = vshrl.u32 %v3817, 16
        %v4027 = vrot.slane %v4025, 4
        %v4028 = vor.u32 %v4027, %v4023
        %v4029 = vrot.slane %v4028, 4
        %v4031 = vshll.u32 %v3818, 16
        %v4033 = vrot.slane %v4031, 5
        %v4034 = vsel %vm304, %v4029, %v4033
        %v4036 = vshrl.u32 %v3819, 16
        %v4038 = vrot.slane %v4036, 4
        %v4039 = vshll.u32 %v3819, 16
        %v4041 = vrot.slane %v4039, 5
        %v4042 = vor.u32 %v4038, %v4041
        %v4043 = vrot.slane %v4042, 4
        %v4045 = vshll.u32 %v3820, 16
        %v4047 = vrot.slane %v4045, 5
        %v4048 = vsel %vm304, %v4043, %v4047
        %v4049 = vshrl.u32 %v3820, 16
        %v4051 = vrot.slane %v4049, 4
        %v4052 = vor.u32 %v4051, %v4047
        %v4053 = vrot.slane %v4052, 4
        %v4055 = vshll.u32 %v3821, 16
        %v4057 = vrot.slane %v4055, 5
        %v4058 = vsel %vm304, %v4053, %v4057
        %v4060 = vshrl.u32 %v3822, 16
        %v4062 = vrot.slane %v4060, 4
        %v4063 = vshll.u32 %v3822, 16
        %v4065 = vrot.slane %v4063, 5
        %v4066 = vor.u32 %v4062, %v4065
        %v4067 = vrot.slane %v4066, 4
        %v4069 = vshll.u32 %v3823, 16
        %v4071 = vrot.slane %v4069, 5
        %v4072 = vsel %vm304, %v4067, %v4071
        %v4073 = vshrl.u32 %v3823, 16
        %v4075 = vrot.slane %v4073, 4
        %v4076 = vor.u32 %v4075, %v4071
        %v4077 = vrot.slane %v4076, 4
        %v4079 = vshll.u32 %v3824, 16
        %v4081 = vrot.slane %v4079, 5
        %v4082 = vsel %vm304, %v4077, %v4081
        %v4084 = vshrl.u32 %v3825, 16
        %v4086 = vrot.slane %v4084, 4
        %v4087 = vshll.u32 %v3825, 16
        %v4089 = vrot.slane %v4087, 5
        %v4090 = vor.u32 %v4086, %v4089
        %v4091 = vrot.slane %v4090, 4
        %v4093 = vshll.u32 %v3826, 16
        %v4095 = vrot.slane %v4093, 5
        %v4096 = vsel %vm304, %v4091, %v4095
        %v4097 = vshrl.u32 %v3826, 16
        %v4099 = vrot.slane %v4097, 4
        %v4100 = vor.u32 %v4099, %v4095
        %v4101 = vrot.slane %v4100, 4
        %v4103 = vshll.u32 %v3827, 16
        %v4105 = vrot.slane %v4103, 5
        %v4106 = vsel %vm304, %v4101, %v4105
        %v4108 = vshrl.u32 %v3828, 16
        %v4110 = vrot.slane %v4108, 4
        %v4111 = vshll.u32 %v3828, 16
        %v4113 = vrot.slane %v4111, 5
        %v4114 = vor.u32 %v4110, %v4113
        %v4115 = vrot.slane %v4114, 4
        %v4117 = vshll.u32 %v3829, 16
        %v4119 = vrot.slane %v4117, 5
        %v4120 = vsel %vm304, %v4115, %v4119
        %v4121 = vshrl.u32 %v3829, 16
        %v4123 = vrot.slane %v4121, 4
        %v4124 = vor.u32 %v4123, %v4119
        %v4125 = vrot.slane %v4124, 4
        %v4127 = vshll.u32 %v3830, 16
        %v4129 = vrot.slane %v4127, 5
        %v4130 = vsel %vm304, %v4125, %v4129
        %v4132 = vshrl.u32 %v3831, 16
        %v4134 = vrot.slane %v4132, 4
        %v4135 = vshll.u32 %v3831, 16
        %v4137 = vrot.slane %v4135, 5
        %v4138 = vor.u32 %v4134, %v4137
        %v4139 = vrot.slane %v4138, 4
        %v4141 = vshll.u32 %v3832, 16
        %v4143 = vrot.slane %v4141, 5
        %v4144 = vsel %vm304, %v4139, %v4143
        %v4145 = vshrl.u32 %v3832, 16
        %v4147 = vrot.slane %v4145, 4
        %v4148 = vor.u32 %v4147, %v4143
        %v4149 = vrot.slane %v4148, 4
        %v4151 = vshll.u32 %v3833, 16
        %v4153 = vrot.slane %v4151, 5
        %v4154 = vsel %vm304, %v4149, %v4153
        %v4156 = vshrl.u32 %v3834, 16
        %v4158 = vrot.slane %v4156, 4
        %v4159 = vshll.u32 %v3834, 16
        %v4161 = vrot.slane %v4159, 5
        %v4162 = vor.u32 %v4158, %v4161
        %v4163 = vrot.slane %v4162, 4
        %v4165 = vshll.u32 %v3835, 16
        %v4167 = vrot.slane %v4165, 5
        %v4168 = vsel %vm304, %v4163, %v4167
        %v4169 = vshrl.u32 %v3835, 16
        %v4171 = vrot.slane %v4169, 4
        %v4172 = vor.u32 %v4171, %v4167
        %v4173 = vrot.slane %v4172, 4
        %v4175 = vshll.u32 %v3836, 16
        %v4177 = vrot.slane %v4175, 5
        %v4178 = vsel %vm304, %v4173, %v4177
        %v4180 = vshrl.u32 %v3837, 16
        %v4182 = vrot.slane %v4180, 4
        %v4183 = vshll.u32 %v3837, 16
        %v4185 = vrot.slane %v4183, 5
        %v4186 = vor.u32 %v4182, %v4185
        %v4187 = vrot.slane %v4186, 4
        %v4189 = vshll.u32 %v3838, 16
        %v4191 = vrot.slane %v4189, 5
        %v4192 = vsel %vm304, %v4187, %v4191
        %v4193 = vshrl.u32 %v3838, 16
        %v4195 = vrot.slane %v4193, 4
        %v4196 = vor.u32 %v4195, %v4191
        %v4197 = vrot.slane %v4196, 4
        %v4199 = vshll.u32 %v3839, 16
        %v4201 = vrot.slane %v4199, 5
        %v4202 = vsel %vm304, %v4197, %v4201
        %v4204 = vshrl.u32 %v3840, 16
        %v4206 = vrot.slane %v4204, 4
        %v4207 = vshll.u32 %v3840, 16
        %v4209 = vrot.slane %v4207, 5
        %v4210 = vor.u32 %v4206, %v4209
        %v4211 = vrot.slane %v4210, 4
        %v4213 = vshll.u32 %v3841, 16
        %v4215 = vrot.slane %v4213, 5
        %v4216 = vsel %vm304, %v4211, %v4215
        %v4217 = vshrl.u32 %v3841, 16
        %v4219 = vrot.slane %v4217, 4
        %v4220 = vor.u32 %v4219, %v4215
        %v4221 = vrot.slane %v4220, 4
        %v4223 = vshll.u32 %v3842, 16
        %v4225 = vrot.slane %v4223, 5
        %v4226 = vsel %vm304, %v4221, %v4225
        %s4227 = scalar_lea.vmem %s233, 448
        %v4228 = vld [vmem:[%s4227] sm:$0xf]
        %v4229 = vld [vmem:[%s4227 + $0x4] sm:$0xf]
        %v4230 = vld [vmem:[%s4227 + $0x8] sm:$0xf]
        %v4231 = vld [vmem:[%s4227 + $0xc] sm:$0xf]
        %v4232 = vld [vmem:[%s4227 + $0x10] sm:$0xf]
        %v4233 = vld [vmem:[%s4227 + $0x14] sm:$0xf]
        %v4234 = vld [vmem:[%s4227 + $0x18] sm:$0xf]
        %v4235 = vld [vmem:[%s4227 + $0x1c] sm:$0xf]
        %v4236 = vld [vmem:[%s4227 + $0x20] sm:$0xf]
        %v4237 = vld [vmem:[%s4227 + $0x24] sm:$0xf]
        %v4238 = vld [vmem:[%s4227 + $0x28] sm:$0xf]
        %v4239 = vld [vmem:[%s4227 + $0x2c] sm:$0xf]
        %v4240 = vld [vmem:[%s4227 + $0x30] sm:$0xf]
        %v4241 = vld [vmem:[%s4227 + $0x34] sm:$0xf]
        %v4242 = vld [vmem:[%s4227 + $0x38] sm:$0xf]
        %v4243 = vld [vmem:[%s4227 + $0x3c] sm:$0xf]
        %v4244 = vunpack.c.l.b16 %v3856
        %v4245 = vunpack.c.l.b16 %v3866
        %v4246 = vunpack.c.l.b16 %v3880
        %v4247 = vunpack.c.l.b16 %v3890
        %v4248 = vunpack.c.l.b16 %v3904
        %v4249 = vunpack.c.l.b16 %v3914
        %v4250 = vunpack.c.l.b16 %v3928
        %v4251 = vunpack.c.l.b16 %v3938
        %v4252 = vunpack.c.l.b16 %v3952
        %v4253 = vunpack.c.l.b16 %v3962
        %v4254 = vunpack.c.l.b16 %v3976
        %v4255 = vunpack.c.l.b16 %v3986
        %v4256 = vunpack.c.l.b16 %v4000
        %v4257 = vunpack.c.l.b16 %v4010
        %v4258 = vunpack.c.l.b16 %v4024
        %v4259 = vunpack.c.l.b16 %v4034
        %v4260 = vunpack.c.l.b16 %v4048
        %v4261 = vunpack.c.l.b16 %v4058
        %v4262 = vunpack.c.l.b16 %v4072
        %v4263 = vunpack.c.l.b16 %v4082
        %v4264 = vunpack.c.l.b16 %v4096
        %v4265 = vunpack.c.l.b16 %v4106
        %v4266 = vunpack.c.l.b16 %v4120
        %v4267 = vunpack.c.l.b16 %v4130
        %v4268 = vunpack.c.l.b16 %v4144
        %v4269 = vunpack.c.l.b16 %v4154
        %v4270 = vunpack.c.l.b16 %v4168
        %v4271 = vunpack.c.l.b16 %v4178
        %v4272 = vunpack.c.l.b16 %v4192
        %v4273 = vunpack.c.l.b16 %v4202
        %v4274 = vunpack.c.l.b16 %v4216
        %v4275 = vunpack.c.l.b16 %v4226
        %v4276 = vpack.c.b16 %v4245, %v4244
        %v4277 = vpack.c.b16 %v4247, %v4246
        %v4278 = vpack.c.b16 %v4249, %v4248
        %v4279 = vpack.c.b16 %v4251, %v4250
        %v4280 = vpack.c.b16 %v4253, %v4252
        %v4281 = vpack.c.b16 %v4255, %v4254
        %v4282 = vpack.c.b16 %v4257, %v4256
        %v4283 = vpack.c.b16 %v4259, %v4258
        %v4284 = vpack.c.b16 %v4261, %v4260
        %v4285 = vpack.c.b16 %v4263, %v4262
        %v4286 = vpack.c.b16 %v4265, %v4264
        %v4287 = vpack.c.b16 %v4267, %v4266
        %v4288 = vpack.c.b16 %v4269, %v4268
        %v4289 = vpack.c.b16 %v4271, %v4270
        %v4290 = vpack.c.b16 %v4273, %v4272
        %v4291 = vpack.c.b16 %v4275, %v4274
        %v4324 = vunpack.c.l.b16 %v4228
        %v4325 = vunpack.c.l.b16 %v4229
        %v4326 = vunpack.c.l.b16 %v4230
        %v4327 = vunpack.c.l.b16 %v4231
        %v4328 = vunpack.c.l.b16 %v4232
        %v4329 = vunpack.c.l.b16 %v4233
        %v4330 = vunpack.c.l.b16 %v4234
        %v4331 = vunpack.c.l.b16 %v4235
        %v4332 = vunpack.c.l.b16 %v4236
        %v4333 = vunpack.c.l.b16 %v4237
        %v4334 = vunpack.c.l.b16 %v4238
        %v4335 = vunpack.c.l.b16 %v4239
        %v4336 = vunpack.c.l.b16 %v4240
        %v4337 = vunpack.c.l.b16 %v4241
        %v4338 = vunpack.c.l.b16 %v4242
        %v4339 = vunpack.c.l.b16 %v4243
        %v4340 = vpack.c.b16 %v4325, %v4324
        %v4341 = vpack.c.b16 %v4327, %v4326
        %v4342 = vpack.c.b16 %v4329, %v4328
        %v4343 = vpack.c.b16 %v4331, %v4330
        %v4344 = vpack.c.b16 %v4333, %v4332
        %v4345 = vpack.c.b16 %v4335, %v4334
        %v4346 = vpack.c.b16 %v4337, %v4336
        %v4347 = vpack.c.b16 %v4339, %v4338
        %4356 = vmatprep.subr.bf16.mxu0 0
        %4357 = vmatpush1.bf16.msra.mxu0 %v4340
        %4358 = vmatprep.subr.bf16.mxu0 0
        %4359 = vmatpush1.bf16.msra.mxu0 %v4341
        %4360 = vmatprep.subr.bf16.mxu0 0
        %4361 = vmatpush1.bf16.msra.mxu0 %v4342
        %4362 = vmatprep.subr.bf16.mxu0 0
        %4363 = vmatpush1.bf16.msra.mxu0 %v4343
        %4364 = vmatprep.subr.bf16.mxu0 0
        %4365 = vmatpush1.bf16.msra.mxu0 %v4344
        %4366 = vmatprep.subr.bf16.mxu0 0
        %4367 = vmatpush1.bf16.msra.mxu0 %v4345
        %4368 = vmatprep.subr.bf16.mxu0 0
        %4369 = vmatpush1.bf16.msra.mxu0 %v4346
        %4370 = vmatprep.subr.bf16.mxu0 0
        %4371 = vmatpush1.bf16.msra.mxu0 %v4347
        %4372 = vmatprep.subr.bf16.mxu0 0
        %4373 = vmatpush1.bf16.msra.mxu0 0
        %4374 = vmatprep.subr.bf16.mxu0 0
        %4375 = vmatpush1.bf16.msra.mxu0 0
        %4376 = vmatprep.subr.bf16.mxu0 0
        %4377 = vmatpush1.bf16.msra.mxu0 0
        %4378 = vmatprep.subr.bf16.mxu0 0
        %4379 = vmatpush1.bf16.msra.mxu0 0
        %4380 = vmatprep.subr.bf16.mxu0 0
        %4381 = vmatpush1.bf16.msra.mxu0 0
        %4382 = vmatprep.subr.bf16.mxu0 0
        %4383 = vmatpush1.bf16.msra.mxu0 0
        %4384 = vmatprep.subr.bf16.mxu0 0
        %4385 = vmatpush1.bf16.msra.mxu0 0
        %4386 = vmatprep.subr.bf16.mxu0 0
        %4387 = vmatpush1.bf16.msra.mxu0 0
        %4388 = vmatprep.mubr.bf16.mxu0 0
        %4389 = vmatmul.mubr.bf16.gmra.mrb[0].mxu0 %v4276
        %v4390 = vpop.f32.mrb[0].mxu0
        %v4391 = vadd.f32 0.0, %v4390
        %v4392 = vpop.f32.mrb[0].mxu0
        %v4393 = vpop.f32.mrb[0].mxu0
        %v4394 = vadd.f32 0.0, %v4393
        %v4395 = vpop.f32.mrb[0].mxu0
        %4396 = vmatprep.mubr.bf16.mxu0 0
        %4397 = vmatmul.mubr.bf16.gmra.mrb[0].mxu0 %v4277
        %v4398 = vpop.f32.mrb[0].mxu0
        %v4399 = vadd.f32 0.0, %v4398
        %v4400 = vpop.f32.mrb[0].mxu0
        %v4401 = vpop.f32.mrb[0].mxu0
        %v4402 = vadd.f32 0.0, %v4401
        %v4403 = vpop.f32.mrb[0].mxu0
        %4404 = vmatprep.mubr.bf16.mxu0 0
        %4405 = vmatmul.mubr.bf16.gmra.mrb[0].mxu0 %v4278
        %v4406 = vpop.f32.mrb[0].mxu0
        %v4407 = vadd.f32 0.0, %v4406
        %v4408 = vpop.f32.mrb[0].mxu0
        %v4409 = vpop.f32.mrb[0].mxu0
        %v4410 = vadd.f32 0.0, %v4409
        %v4411 = vpop.f32.mrb[0].mxu0
        %4412 = vmatprep.mubr.bf16.mxu0 0
        %4413 = vmatmul.mubr.bf16.gmra.mrb[0].mxu0 %v4279
        %v4414 = vpop.f32.mrb[0].mxu0
        %v4415 = vadd.f32 0.0, %v4414
        %v4416 = vpop.f32.mrb[0].mxu0
        %v4417 = vpop.f32.mrb[0].mxu0
        %v4418 = vadd.f32 0.0, %v4417
        %v4419 = vpop.f32.mrb[0].mxu0
        %4420 = vmatprep.mubr.bf16.mxu0 0
        %4421 = vmatmul.mubr.bf16.gmra.mrb[0].mxu0 %v4280
        %v4422 = vpop.f32.mrb[0].mxu0
        %v4423 = vadd.f32 0.0, %v4422
        %v4424 = vpop.f32.mrb[0].mxu0
        %v4425 = vpop.f32.mrb[0].mxu0
        %v4426 = vadd.f32 0.0, %v4425
        %v4427 = vpop.f32.mrb[0].mxu0
        %4428 = vmatprep.mubr.bf16.mxu0 0
        %4429 = vmatmul.mubr.bf16.gmra.mrb[0].mxu0 %v4281
        %v4430 = vpop.f32.mrb[0].mxu0
        %v4431 = vadd.f32 0.0, %v4430
        %v4432 = vpop.f32.mrb[0].mxu0
        %v4433 = vpop.f32.mrb[0].mxu0
        %v4434 = vadd.f32 0.0, %v4433
        %v4435 = vpop.f32.mrb[0].mxu0
        %4436 = vmatprep.mubr.bf16.mxu0 0
        %4437 = vmatmul.mubr.bf16.gmra.mrb[0].mxu0 %v4282
        %v4438 = vpop.f32.mrb[0].mxu0
        %v4439 = vadd.f32 0.0, %v4438
        %v4440 = vpop.f32.mrb[0].mxu0
        %v4441 = vpop.f32.mrb[0].mxu0
        %v4442 = vadd.f32 0.0, %v4441
        %v4443 = vpop.f32.mrb[0].mxu0
        %4444 = vmatprep.mubr.bf16.mxu0 0
        %4445 = vmatmul.mubr.bf16.gmra.mrb[0].mxu0 %v4283
        %v4446 = vpop.f32.mrb[0].mxu0
        %v4447 = vadd.f32 0.0, %v4446
        %v4448 = vpop.f32.mrb[0].mxu0
        %v4449 = vpop.f32.mrb[0].mxu0
        %v4450 = vadd.f32 0.0, %v4449
        %v4451 = vpop.f32.mrb[0].mxu0
        %4452 = vmatprep.mubr.bf16.mxu0 0
        %4453 = vmatmul.mubr.bf16.gmra.mrb[0].mxu0 %v4284
        %v4454 = vpop.f32.mrb[0].mxu0
        %v4455 = vadd.f32 0.0, %v4454
        %v4456 = vpop.f32.mrb[0].mxu0
        %v4457 = vpop.f32.mrb[0].mxu0
        %v4458 = vadd.f32 0.0, %v4457
        %v4459 = vpop.f32.mrb[0].mxu0
        %4460 = vmatprep.mubr.bf16.mxu0 0
        %4461 = vmatmul.mubr.bf16.gmra.mrb[0].mxu0 %v4285
        %v4462 = vpop.f32.mrb[0].mxu0
        %v4463 = vadd.f32 0.0, %v4462
        %v4464 = vpop.f32.mrb[0].mxu0
        %v4465 = vpop.f32.mrb[0].mxu0
        %v4466 = vadd.f32 0.0, %v4465
        %v4467 = vpop.f32.mrb[0].mxu0
        %4468 = vmatprep.mubr.bf16.mxu0 0
        %4469 = vmatmul.mubr.bf16.gmra.mrb[0].mxu0 %v4286
        %v4470 = vpop.f32.mrb[0].mxu0
        %v4471 = vadd.f32 0.0, %v4470
        %v4472 = vpop.f32.mrb[0].mxu0
        %v4473 = vpop.f32.mrb[0].mxu0
        %v4474 = vadd.f32 0.0, %v4473
        %v4475 = vpop.f32.mrb[0].mxu0
        %4476 = vmatprep.mubr.bf16.mxu0 0
        %4477 = vmatmul.mubr.bf16.gmra.mrb[0].mxu0 %v4287
        %v4478 = vpop.f32.mrb[0].mxu0
        %v4479 = vadd.f32 0.0, %v4478
        %v4480 = vpop.f32.mrb[0].mxu0
        %v4481 = vpop.f32.mrb[0].mxu0
        %v4482 = vadd.f32 0.0, %v4481
        %v4483 = vpop.f32.mrb[0].mxu0
        %4484 = vmatprep.mubr.bf16.mxu0 0
        %4485 = vmatmul.mubr.bf16.gmra.mrb[0].mxu0 %v4288
        %v4486 = vpop.f32.mrb[0].mxu0
        %v4487 = vadd.f32 0.0, %v4486
        %v4488 = vpop.f32.mrb[0].mxu0
        %v4489 = vpop.f32.mrb[0].mxu0
        %v4490 = vadd.f32 0.0, %v4489
        %v4491 = vpop.f32.mrb[0].mxu0
        %4492 = vmatprep.mubr.bf16.mxu0 0
        %4493 = vmatmul.mubr.bf16.gmra.mrb[0].mxu0 %v4289
        %v4494 = vpop.f32.mrb[0].mxu0
        %v4495 = vadd.f32 0.0, %v4494
        %v4496 = vpop.f32.mrb[0].mxu0
        %v4497 = vpop.f32.mrb[0].mxu0
        %v4498 = vadd.f32 0.0, %v4497
        %v4499 = vpop.f32.mrb[0].mxu0
        %4500 = vmatprep.mubr.bf16.mxu0 0
        %4501 = vmatmul.mubr.bf16.gmra.mrb[0].mxu0 %v4290
        %v4502 = vpop.f32.mrb[0].mxu0
        %v4503 = vadd.f32 0.0, %v4502
        %v4504 = vpop.f32.mrb[0].mxu0
        %v4505 = vpop.f32.mrb[0].mxu0
        %v4506 = vadd.f32 0.0, %v4505
        %v4507 = vpop.f32.mrb[0].mxu0
        %4508 = vmatprep.mubr.bf16.mxu0 0
        %4509 = vmatmul.mubr.bf16.gmra.mrb[0].mxu0 %v4291
        %v4510 = vpop.f32.mrb[0].mxu0
        %v4511 = vadd.f32 0.0, %v4510
        %v4512 = vpop.f32.mrb[0].mxu0
        %v4513 = vpop.f32.mrb[0].mxu0
        %v4514 = vadd.f32 0.0, %v4513
        %v4515 = vpop.f32.mrb[0].mxu0
        %4516 = vdwg.mxu0
        %v4517 = vadd.f32 %v3763, %v4391
        %v4518 = vadd.f32 %v3764, %v4394
        %v4519 = vadd.f32 %v3765, %v4399
        %v4520 = vadd.f32 %v3766, %v4402
        %v4521 = vadd.f32 %v3767, %v4407
        %v4522 = vadd.f32 %v3768, %v4410
        %v4523 = vadd.f32 %v3769, %v4415
        %v4524 = vadd.f32 %v3770, %v4418
        %v4525 = vadd.f32 %v3771, %v4423
        %v4526 = vadd.f32 %v3772, %v4426
        %v4527 = vadd.f32 %v3773, %v4431
        %v4528 = vadd.f32 %v3774, %v4434
        %v4529 = vadd.f32 %v3775, %v4439
        %v4530 = vadd.f32 %v3776, %v4442
        %v4531 = vadd.f32 %v3777, %v4447
        %v4532 = vadd.f32 %v3778, %v4450
        %v4533 = vadd.f32 %v3779, %v4455
        %v4534 = vadd.f32 %v3780, %v4458
        %v4535 = vadd.f32 %v3781, %v4463
        %v4536 = vadd.f32 %v3782, %v4466
        %v4537 = vadd.f32 %v3783, %v4471
        %v4538 = vadd.f32 %v3784, %v4474
        %v4539 = vadd.f32 %v3785, %v4479
        %v4540 = vadd.f32 %v3786, %v4482
        %v4541 = vadd.f32 %v3787, %v4487
        %v4542 = vadd.f32 %v3788, %v4490
        %v4543 = vadd.f32 %v3789, %v4495
        %v4544 = vadd.f32 %v3790, %v4498
        %v4545 = vadd.f32 %v3791, %v4503
        %v4546 = vadd.f32 %v3792, %v4506
        %v4547 = vadd.f32 %v3793, %v4511
        %v4548 = vadd.f32 %v3794, %v4514
        %v4549 = vld [vmem:[%s3408] sm:$0xe]
        %v4550 = vld [vmem:[%s3408 + $0xc] sm:$0xe]
        %v4551 = vld [vmem:[%s3408 + $0x18] sm:$0xe]
        %v4552 = vld [vmem:[%s3408 + $0x24] sm:$0xe]
        %v4553 = vld [vmem:[%s3408 + $0x30] sm:$0xe]
        %v4554 = vld [vmem:[%s3408 + $0x3c] sm:$0xe]
        %v4555 = vld [vmem:[%s3408 + $0x48] sm:$0xe]
        %v4556 = vld [vmem:[%s3408 + $0x54] sm:$0xe]
        %v4557 = vld [vmem:[%s3408 + $0x60] sm:$0xe]
        %v4558 = vld [vmem:[%s3408 + $0x6c] sm:$0xe]
        %v4559 = vld [vmem:[%s3408 + $0x78] sm:$0xe]
        %v4560 = vld [vmem:[%s3408 + $0x84] sm:$0xe]
        %v4561 = vld [vmem:[%s3408 + $0x90] sm:$0xe]
        %v4562 = vld [vmem:[%s3408 + $0x9c] sm:$0xe]
        %v4563 = vld [vmem:[%s3408 + $0xa8] sm:$0xe]
        %v4564 = vld [vmem:[%s3408 + $0xb4] sm:$0xe]
        %v4613 = vrot.slane %v4549, 5
        %v4614 = vrot.slane %v4613, 4
        %v4615 = vrot.slane %v3796, 5
        %v4616 = vsel %vm1334, %v4614, %v4615
        %v4617 = vrot.slane %v4615, 4
        %v4618 = vrot.slane %v3797, 5
        %v4619 = vsel %vm1334, %v4617, %v4618
        %v4620 = vrot.slane %v4550, 5
        %v4621 = vrot.slane %v4620, 4
        %v4622 = vrot.slane %v3799, 5
        %v4623 = vsel %vm1334, %v4621, %v4622
        %v4624 = vrot.slane %v4622, 4
        %v4625 = vrot.slane %v3800, 5
        %v4626 = vsel %vm1334, %v4624, %v4625
        %v4627 = vrot.slane %v4551, 5
        %v4628 = vrot.slane %v4627, 4
        %v4629 = vrot.slane %v3802, 5
        %v4630 = vsel %vm1334, %v4628, %v4629
        %v4631 = vrot.slane %v4629, 4
        %v4632 = vrot.slane %v3803, 5
        %v4633 = vsel %vm1334, %v4631, %v4632
        %v4634 = vrot.slane %v4552, 5
        %v4635 = vrot.slane %v4634, 4
        %v4636 = vrot.slane %v3805, 5
        %v4637 = vsel %vm1334, %v4635, %v4636
        %v4638 = vrot.slane %v4636, 4
        %v4639 = vrot.slane %v3806, 5
        %v4640 = vsel %vm1334, %v4638, %v4639
        %v4641 = vrot.slane %v4553, 5
        %v4642 = vrot.slane %v4641, 4
        %v4643 = vrot.slane %v3808, 5
        %v4644 = vsel %vm1334, %v4642, %v4643
        %v4645 = vrot.slane %v4643, 4
        %v4646 = vrot.slane %v3809, 5
        %v4647 = vsel %vm1334, %v4645, %v4646
        %v4648 = vrot.slane %v4554, 5
        %v4649 = vrot.slane %v4648, 4
        %v4650 = vrot.slane %v3811, 5
        %v4651 = vsel %vm1334, %v4649, %v4650
        %v4652 = vrot.slane %v4650, 4
        %v4653 = vrot.slane %v3812, 5
        %v4654 = vsel %vm1334, %v4652, %v4653
        %v4655 = vrot.slane %v4555, 5
        %v4656 = vrot.slane %v4655, 4
        %v4657 = vrot.slane %v3814, 5
        %v4658 = vsel %vm1334, %v4656, %v4657
        %v4659 = vrot.slane %v4657, 4
        %v4660 = vrot.slane %v3815, 5
        %v4661 = vsel %vm1334, %v4659, %v4660
        %v4662 = vrot.slane %v4556, 5
        %v4663 = vrot.slane %v4662, 4
        %v4664 = vrot.slane %v3817, 5
        %v4665 = vsel %vm1334, %v4663, %v4664
        %v4666 = vrot.slane %v4664, 4
        %v4667 = vrot.slane %v3818, 5
        %v4668 = vsel %vm1334, %v4666, %v4667
        %v4669 = vrot.slane %v4557, 5
        %v4670 = vrot.slane %v4669, 4
        %v4671 = vrot.slane %v3820, 5
        %v4672 = vsel %vm1334, %v4670, %v4671
        %v4673 = vrot.slane %v4671, 4
        %v4674 = vrot.slane %v3821, 5
        %v4675 = vsel %vm1334, %v4673, %v4674
        %v4676 = vrot.slane %v4558, 5
        %v4677 = vrot.slane %v4676, 4
        %v4678 = vrot.slane %v3823, 5
        %v4679 = vsel %vm1334, %v4677, %v4678
        %v4680 = vrot.slane %v4678, 4
        %v4681 = vrot.slane %v3824, 5
        %v4682 = vsel %vm1334, %v4680, %v4681
        %v4683 = vrot.slane %v4559, 5
        %v4684 = vrot.slane %v4683, 4
        %v4685 = vrot.slane %v3826, 5
        %v4686 = vsel %vm1334, %v4684, %v4685
        %v4687 = vrot.slane %v4685, 4
        %v4688 = vrot.slane %v3827, 5
        %v4689 = vsel %vm1334, %v4687, %v4688
        %v4690 = vrot.slane %v4560, 5
        %v4691 = vrot.slane %v4690, 4
        %v4692 = vrot.slane %v3829, 5
        %v4693 = vsel %vm1334, %v4691, %v4692
        %v4694 = vrot.slane %v4692, 4
        %v4695 = vrot.slane %v3830, 5
        %v4696 = vsel %vm1334, %v4694, %v4695
        %v4697 = vrot.slane %v4561, 5
        %v4698 = vrot.slane %v4697, 4
        %v4699 = vrot.slane %v3832, 5
        %v4700 = vsel %vm1334, %v4698, %v4699
        %v4701 = vrot.slane %v4699, 4
        %v4702 = vrot.slane %v3833, 5
        %v4703 = vsel %vm1334, %v4701, %v4702
        %v4704 = vrot.slane %v4562, 5
        %v4705 = vrot.slane %v4704, 4
        %v4706 = vrot.slane %v3835, 5
        %v4707 = vsel %vm1334, %v4705, %v4706
        %v4708 = vrot.slane %v4706, 4
        %v4709 = vrot.slane %v3836, 5
        %v4710 = vsel %vm1334, %v4708, %v4709
        %v4711 = vrot.slane %v4563, 5
        %v4712 = vrot.slane %v4711, 4
        %v4713 = vrot.slane %v3838, 5
        %v4714 = vsel %vm1334, %v4712, %v4713
        %v4715 = vrot.slane %v4713, 4
        %v4716 = vrot.slane %v3839, 5
        %v4717 = vsel %vm1334, %v4715, %v4716
        %v4718 = vrot.slane %v4564, 5
        %v4719 = vrot.slane %v4718, 4
        %v4720 = vrot.slane %v3841, 5
        %v4721 = vsel %vm1334, %v4719, %v4720
        %v4722 = vrot.slane %v4720, 4
        %v4723 = vrot.slane %v3842, 5
        %v4724 = vsel %vm1334, %v4722, %v4723
        %s4725 = scalar_lea.vmem %s233, 512
        %v4726 = vld [vmem:[%s4725] sm:$0xf]
        %v4727 = vld [vmem:[%s4725 + $0x4] sm:$0xf]
        %v4728 = vld [vmem:[%s4725 + $0x8] sm:$0xf]
        %v4729 = vld [vmem:[%s4725 + $0xc] sm:$0xf]
        %v4730 = vld [vmem:[%s4725 + $0x10] sm:$0xf]
        %v4731 = vld [vmem:[%s4725 + $0x14] sm:$0xf]
        %v4732 = vld [vmem:[%s4725 + $0x18] sm:$0xf]
        %v4733 = vld [vmem:[%s4725 + $0x1c] sm:$0xf]
        %v4734 = vld [vmem:[%s4725 + $0x20] sm:$0xf]
        %v4735 = vld [vmem:[%s4725 + $0x24] sm:$0xf]
        %v4736 = vld [vmem:[%s4725 + $0x28] sm:$0xf]
        %v4737 = vld [vmem:[%s4725 + $0x2c] sm:$0xf]
        %v4738 = vld [vmem:[%s4725 + $0x30] sm:$0xf]
        %v4739 = vld [vmem:[%s4725 + $0x34] sm:$0xf]
        %v4740 = vld [vmem:[%s4725 + $0x38] sm:$0xf]
        %v4741 = vld [vmem:[%s4725 + $0x3c] sm:$0xf]
        %v4742 = vunpack.c.l.b16 %v4616
        %v4743 = vunpack.c.l.b16 %v4619
        %v4744 = vunpack.c.l.b16 %v4623
        %v4745 = vunpack.c.l.b16 %v4626
        %v4746 = vunpack.c.l.b16 %v4630
        %v4747 = vunpack.c.l.b16 %v4633
        %v4748 = vunpack.c.l.b16 %v4637
        %v4749 = vunpack.c.l.b16 %v4640
        %v4750 = vunpack.c.l.b16 %v4644
        %v4751 = vunpack.c.l.b16 %v4647
        %v4752 = vunpack.c.l.b16 %v4651
        %v4753 = vunpack.c.l.b16 %v4654
        %v4754 = vunpack.c.l.b16 %v4658
        %v4755 = vunpack.c.l.b16 %v4661
        %v4756 = vunpack.c.l.b16 %v4665
        %v4757 = vunpack.c.l.b16 %v4668
        %v4758 = vunpack.c.l.b16 %v4672
        %v4759 = vunpack.c.l.b16 %v4675
        %v4760 = vunpack.c.l.b16 %v4679
        %v4761 = vunpack.c.l.b16 %v4682
        %v4762 = vunpack.c.l.b16 %v4686
        %v4763 = vunpack.c.l.b16 %v4689
        %v4764 = vunpack.c.l.b16 %v4693
        %v4765 = vunpack.c.l.b16 %v4696
        %v4766 = vunpack.c.l.b16 %v4700
        %v4767 = vunpack.c.l.b16 %v4703
        %v4768 = vunpack.c.l.b16 %v4707
        %v4769 = vunpack.c.l.b16 %v4710
        %v4770 = vunpack.c.l.b16 %v4714
        %v4771 = vunpack.c.l.b16 %v4717
        %v4772 = vunpack.c.l.b16 %v4721
        %v4773 = vunpack.c.l.b16 %v4724
        %v4774 = vpack.c.b16 %v4743, %v4742
        %v4775 = vpack.c.b16 %v4745, %v4744
        %v4776 = vpack.c.b16 %v4747, %v4746
        %v4777 = vpack.c.b16 %v4749, %v4748
        %v4778 = vpack.c.b16 %v4751, %v4750
        %v4779 = vpack.c.b16 %v4753, %v4752
        %v4780 = vpack.c.b16 %v4755, %v4754
        %v4781 = vpack.c.b16 %v4757, %v4756
        %v4782 = vpack.c.b16 %v4759, %v4758
        %v4783 = vpack.c.b16 %v4761, %v4760
        %v4784 = vpack.c.b16 %v4763, %v4762
        %v4785 = vpack.c.b16 %v4765, %v4764
        %v4786 = vpack.c.b16 %v4767, %v4766
        %v4787 = vpack.c.b16 %v4769, %v4768
        %v4788 = vpack.c.b16 %v4771, %v4770
        %v4789 = vpack.c.b16 %v4773, %v4772
        %v4822 = vunpack.c.l.b16 %v4726
        %v4823 = vunpack.c.l.b16 %v4727
        %v4824 = vunpack.c.l.b16 %v4728
        %v4825 = vunpack.c.l.b16 %v4729
        %v4826 = vunpack.c.l.b16 %v4730
        %v4827 = vunpack.c.l.b16 %v4731
        %v4828 = vunpack.c.l.b16 %v4732
        %v4829 = vunpack.c.l.b16 %v4733
        %v4830 = vunpack.c.l.b16 %v4734
        %v4831 = vunpack.c.l.b16 %v4735
        %v4832 = vunpack.c.l.b16 %v4736
        %v4833 = vunpack.c.l.b16 %v4737
        %v4834 = vunpack.c.l.b16 %v4738
        %v4835 = vunpack.c.l.b16 %v4739
        %v4836 = vunpack.c.l.b16 %v4740
        %v4837 = vunpack.c.l.b16 %v4741
        %v4838 = vpack.c.b16 %v4823, %v4822
        %v4839 = vpack.c.b16 %v4825, %v4824
        %v4840 = vpack.c.b16 %v4827, %v4826
        %v4841 = vpack.c.b16 %v4829, %v4828
        %v4842 = vpack.c.b16 %v4831, %v4830
        %v4843 = vpack.c.b16 %v4833, %v4832
        %v4844 = vpack.c.b16 %v4835, %v4834
        %v4845 = vpack.c.b16 %v4837, %v4836
        %4854 = vmatprep.subr.bf16.mxu0 0
        %4855 = vmatpush1.bf16.msra.mxu0 %v4838
        %4856 = vmatprep.subr.bf16.mxu0 0
        %4857 = vmatpush1.bf16.msra.mxu0 %v4839
        %4858 = vmatprep.subr.bf16.mxu0 0
        %4859 = vmatpush1.bf16.msra.mxu0 %v4840
        %4860 = vmatprep.subr.bf16.mxu0 0
        %4861 = vmatpush1.bf16.msra.mxu0 %v4841
        %4862 = vmatprep.subr.bf16.mxu0 0
        %4863 = vmatpush1.bf16.msra.mxu0 %v4842
        %4864 = vmatprep.subr.bf16.mxu0 0
        %4865 = vmatpush1.bf16.msra.mxu0 %v4843
        %4866 = vmatprep.subr.bf16.mxu0 0
        %4867 = vmatpush1.bf16.msra.mxu0 %v4844
        %4868 = vmatprep.subr.bf16.mxu0 0
        %4869 = vmatpush1.bf16.msra.mxu0 %v4845
        %4870 = vmatprep.subr.bf16.mxu0 0
        %4871 = vmatpush1.bf16.msra.mxu0 0
        %4872 = vmatprep.subr.bf16.mxu0 0
        %4873 = vmatpush1.bf16.msra.mxu0 0
        %4874 = vmatprep.subr.bf16.mxu0 0
        %4875 = vmatpush1.bf16.msra.mxu0 0
        %4876 = vmatprep.subr.bf16.mxu0 0
        %4877 = vmatpush1.bf16.msra.mxu0 0
        %4878 = vmatprep.subr.bf16.mxu0 0
        %4879 = vmatpush1.bf16.msra.mxu0 0
        %4880 = vmatprep.subr.bf16.mxu0 0
        %4881 = vmatpush1.bf16.msra.mxu0 0
        %4882 = vmatprep.subr.bf16.mxu0 0
        %4883 = vmatpush1.bf16.msra.mxu0 0
        %4884 = vmatprep.subr.bf16.mxu0 0
        %4885 = vmatpush1.bf16.msra.mxu0 0
        %4886 = vmatprep.mubr.bf16.mxu0 0
        %4887 = vmatmul.mubr.bf16.gmra.mrb[0].mxu0 %v4774
        %v4888 = vpop.f32.mrb[0].mxu0
        %v4889 = vadd.f32 0.0, %v4888
        %v4890 = vpop.f32.mrb[0].mxu0
        %v4891 = vpop.f32.mrb[0].mxu0
        %v4892 = vadd.f32 0.0, %v4891
        %v4893 = vpop.f32.mrb[0].mxu0
        %4894 = vmatprep.mubr.bf16.mxu0 0
        %4895 = vmatmul.mubr.bf16.gmra.mrb[0].mxu0 %v4775
        %v4896 = vpop.f32.mrb[0].mxu0
        %v4897 = vadd.f32 0.0, %v4896
        %v4898 = vpop.f32.mrb[0].mxu0
        %v4899 = vpop.f32.mrb[0].mxu0
        %v4900 = vadd.f32 0.0, %v4899
        %v4901 = vpop.f32.mrb[0].mxu0
        %4902 = vmatprep.mubr.bf16.mxu0 0
        %4903 = vmatmul.mubr.bf16.gmra.mrb[0].mxu0 %v4776
        %v4904 = vpop.f32.mrb[0].mxu0
        %v4905 = vadd.f32 0.0, %v4904
        %v4906 = vpop.f32.mrb[0].mxu0
        %v4907 = vpop.f32.mrb[0].mxu0
        %v4908 = vadd.f32 0.0, %v4907
        %v4909 = vpop.f32.mrb[0].mxu0
        %4910 = vmatprep.mubr.bf16.mxu0 0
        %4911 = vmatmul.mubr.bf16.gmra.mrb[0].mxu0 %v4777
        %v4912 = vpop.f32.mrb[0].mxu0
        %v4913 = vadd.f32 0.0, %v4912
        %v4914 = vpop.f32.mrb[0].mxu0
        %v4915 = vpop.f32.mrb[0].mxu0
        %v4916 = vadd.f32 0.0, %v4915
        %v4917 = vpop.f32.mrb[0].mxu0
        %4918 = vmatprep.mubr.bf16.mxu0 0
        %4919 = vmatmul.mubr.bf16.gmra.mrb[0].mxu0 %v4778
        %v4920 = vpop.f32.mrb[0].mxu0
        %v4921 = vadd.f32 0.0, %v4920
        %v4922 = vpop.f32.mrb[0].mxu0
        %v4923 = vpop.f32.mrb[0].mxu0
        %v4924 = vadd.f32 0.0, %v4923
        %v4925 = vpop.f32.mrb[0].mxu0
        %4926 = vmatprep.mubr.bf16.mxu0 0
        %4927 = vmatmul.mubr.bf16.gmra.mrb[0].mxu0 %v4779
        %v4928 = vpop.f32.mrb[0].mxu0
        %v4929 = vadd.f32 0.0, %v4928
        %v4930 = vpop.f32.mrb[0].mxu0
        %v4931 = vpop.f32.mrb[0].mxu0
        %v4932 = vadd.f32 0.0, %v4931
        %v4933 = vpop.f32.mrb[0].mxu0
        %4934 = vmatprep.mubr.bf16.mxu0 0
        %4935 = vmatmul.mubr.bf16.gmra.mrb[0].mxu0 %v4780
        %v4936 = vpop.f32.mrb[0].mxu0
        %v4937 = vadd.f32 0.0, %v4936
        %v4938 = vpop.f32.mrb[0].mxu0
        %v4939 = vpop.f32.mrb[0].mxu0
        %v4940 = vadd.f32 0.0, %v4939
        %v4941 = vpop.f32.mrb[0].mxu0
        %4942 = vmatprep.mubr.bf16.mxu0 0
        %4943 = vmatmul.mubr.bf16.gmra.mrb[0].mxu0 %v4781
        %v4944 = vpop.f32.mrb[0].mxu0
        %v4945 = vadd.f32 0.0, %v4944
        %v4946 = vpop.f32.mrb[0].mxu0
        %v4947 = vpop.f32.mrb[0].mxu0
        %v4948 = vadd.f32 0.0, %v4947
        %v4949 = vpop.f32.mrb[0].mxu0
        %4950 = vmatprep.mubr.bf16.mxu0 0
        %4951 = vmatmul.mubr.bf16.gmra.mrb[0].mxu0 %v4782
        %v4952 = vpop.f32.mrb[0].mxu0
        %v4953 = vadd.f32 0.0, %v4952
        %v4954 = vpop.f32.mrb[0].mxu0
        %v4955 = vpop.f32.mrb[0].mxu0
        %v4956 = vadd.f32 0.0, %v4955
        %v4957 = vpop.f32.mrb[0].mxu0
        %4958 = vmatprep.mubr.bf16.mxu0 0
        %4959 = vmatmul.mubr.bf16.gmra.mrb[0].mxu0 %v4783
        %v4960 = vpop.f32.mrb[0].mxu0
        %v4961 = vadd.f32 0.0, %v4960
        %v4962 = vpop.f32.mrb[0].mxu0
        %v4963 = vpop.f32.mrb[0].mxu0
        %v4964 = vadd.f32 0.0, %v4963
        %v4965 = vpop.f32.mrb[0].mxu0
        %4966 = vmatprep.mubr.bf16.mxu0 0
        %4967 = vmatmul.mubr.bf16.gmra.mrb[0].mxu0 %v4784
        %v4968 = vpop.f32.mrb[0].mxu0
        %v4969 = vadd.f32 0.0, %v4968
        %v4970 = vpop.f32.mrb[0].mxu0
        %v4971 = vpop.f32.mrb[0].mxu0
        %v4972 = vadd.f32 0.0, %v4971
        %v4973 = vpop.f32.mrb[0].mxu0
        %4974 = vmatprep.mubr.bf16.mxu0 0
        %4975 = vmatmul.mubr.bf16.gmra.mrb[0].mxu0 %v4785
        %v4976 = vpop.f32.mrb[0].mxu0
        %v4977 = vadd.f32 0.0, %v4976
        %v4978 = vpop.f32.mrb[0].mxu0
        %v4979 = vpop.f32.mrb[0].mxu0
        %v4980 = vadd.f32 0.0, %v4979
        %v4981 = vpop.f32.mrb[0].mxu0
        %4982 = vmatprep.mubr.bf16.mxu0 0
        %4983 = vmatmul.mubr.bf16.gmra.mrb[0].mxu0 %v4786
        %v4984 = vpop.f32.mrb[0].mxu0
        %v4985 = vadd.f32 0.0, %v4984
        %v4986 = vpop.f32.mrb[0].mxu0
        %v4987 = vpop.f32.mrb[0].mxu0
        %v4988 = vadd.f32 0.0, %v4987
        %v4989 = vpop.f32.mrb[0].mxu0
        %4990 = vmatprep.mubr.bf16.mxu0 0
        %4991 = vmatmul.mubr.bf16.gmra.mrb[0].mxu0 %v4787
        %v4992 = vpop.f32.mrb[0].mxu0
        %v4993 = vadd.f32 0.0, %v4992
        %v4994 = vpop.f32.mrb[0].mxu0
        %v4995 = vpop.f32.mrb[0].mxu0
        %v4996 = vadd.f32 0.0, %v4995
        %v4997 = vpop.f32.mrb[0].mxu0
        %4998 = vmatprep.mubr.bf16.mxu0 0
        %4999 = vmatmul.mubr.bf16.gmra.mrb[0].mxu0 %v4788
        %v5000 = vpop.f32.mrb[0].mxu0
        %v5001 = vadd.f32 0.0, %v5000
        %v5002 = vpop.f32.mrb[0].mxu0
        %v5003 = vpop.f32.mrb[0].mxu0
        %v5004 = vadd.f32 0.0, %v5003
        %v5005 = vpop.f32.mrb[0].mxu0
        %5006 = vmatprep.mubr.bf16.mxu0 0
        %5007 = vmatmul.mubr.bf16.gmra.mrb[0].mxu0 %v4789
        %v5008 = vpop.f32.mrb[0].mxu0
        %v5009 = vadd.f32 0.0, %v5008
        %v5010 = vpop.f32.mrb[0].mxu0
        %v5011 = vpop.f32.mrb[0].mxu0
        %v5012 = vadd.f32 0.0, %v5011
        %v5013 = vpop.f32.mrb[0].mxu0
        %5014 = vdwg.mxu0
        %v5015 = vadd.f32 %v4517, %v4889
        %v5016 = vadd.f32 %v4518, %v4892
        %v5017 = vadd.f32 %v4519, %v4897
        %v5018 = vadd.f32 %v4520, %v4900
        %v5019 = vadd.f32 %v4521, %v4905
        %v5020 = vadd.f32 %v4522, %v4908
        %v5021 = vadd.f32 %v4523, %v4913
        %v5022 = vadd.f32 %v4524, %v4916
        %v5023 = vadd.f32 %v4525, %v4921
        %v5024 = vadd.f32 %v4526, %v4924
        %v5025 = vadd.f32 %v4527, %v4929
        %v5026 = vadd.f32 %v4528, %v4932
        %v5027 = vadd.f32 %v4529, %v4937
        %v5028 = vadd.f32 %v4530, %v4940
        %v5029 = vadd.f32 %v4531, %v4945
        %v5030 = vadd.f32 %v4532, %v4948
        %v5031 = vadd.f32 %v4533, %v4953
        %v5032 = vadd.f32 %v4534, %v4956
        %v5033 = vadd.f32 %v4535, %v4961
        %v5034 = vadd.f32 %v4536, %v4964
        %v5035 = vadd.f32 %v4537, %v4969
        %v5036 = vadd.f32 %v4538, %v4972
        %v5037 = vadd.f32 %v4539, %v4977
        %v5038 = vadd.f32 %v4540, %v4980
        %v5039 = vadd.f32 %v4541, %v4985
        %v5040 = vadd.f32 %v4542, %v4988
        %v5041 = vadd.f32 %v4543, %v4993
        %v5042 = vadd.f32 %v4544, %v4996
        %v5043 = vadd.f32 %v4545, %v5001
        %v5044 = vadd.f32 %v4546, %v5004
        %v5045 = vadd.f32 %v4547, %v5009
        %v5046 = vadd.f32 %v4548, %v5012
        %v5047 = vld [vmem:[%s236] sm:$0x1]
        %v5049 = vlaneseq
        %v5050 = vshrl.u32 %v5049, 7
        %v5051 = vsub.s32 0, %v5050
        %v5052 = vrot.slane %v5047, %v5051
        %v5054 = vadd.f32 %v5015, %v5052
        %v5055 = vadd.f32 %v5016, %v5052
        %v5056 = vadd.f32 %v5017, %v5052
        %v5057 = vadd.f32 %v5018, %v5052
        %v5058 = vadd.f32 %v5019, %v5052
        %v5059 = vadd.f32 %v5020, %v5052
        %v5060 = vadd.f32 %v5021, %v5052
        %v5061 = vadd.f32 %v5022, %v5052
        %v5062 = vadd.f32 %v5023, %v5052
        %v5063 = vadd.f32 %v5024, %v5052
        %v5064 = vadd.f32 %v5025, %v5052
        %v5065 = vadd.f32 %v5026, %v5052
        %v5066 = vadd.f32 %v5027, %v5052
        %v5067 = vadd.f32 %v5028, %v5052
        %v5068 = vadd.f32 %v5029, %v5052
        %v5069 = vadd.f32 %v5030, %v5052
        %v5070 = vadd.f32 %v5031, %v5052
        %v5071 = vadd.f32 %v5032, %v5052
        %v5072 = vadd.f32 %v5033, %v5052
        %v5073 = vadd.f32 %v5034, %v5052
        %v5074 = vadd.f32 %v5035, %v5052
        %v5075 = vadd.f32 %v5036, %v5052
        %v5076 = vadd.f32 %v5037, %v5052
        %v5077 = vadd.f32 %v5038, %v5052
        %v5078 = vadd.f32 %v5039, %v5052
        %v5079 = vadd.f32 %v5040, %v5052
        %v5080 = vadd.f32 %v5041, %v5052
        %v5081 = vadd.f32 %v5042, %v5052
        %v5082 = vadd.f32 %v5043, %v5052
        %v5083 = vadd.f32 %v5044, %v5052
        %v5084 = vadd.f32 %v5045, %v5052
        %v5085 = vadd.f32 %v5046, %v5052
        %v5086 = vmax.f32 %v5054, 0.0
        %v5087 = vmax.f32 %v5055, 0.0
        %v5088 = vmax.f32 %v5056, 0.0
        %v5089 = vmax.f32 %v5057, 0.0
        %v5090 = vmax.f32 %v5058, 0.0
        %v5091 = vmax.f32 %v5059, 0.0
        %v5092 = vmax.f32 %v5060, 0.0
        %v5093 = vmax.f32 %v5061, 0.0
        %v5094 = vmax.f32 %v5062, 0.0
        %v5095 = vmax.f32 %v5063, 0.0
        %v5096 = vmax.f32 %v5064, 0.0
        %v5097 = vmax.f32 %v5065, 0.0
        %v5098 = vmax.f32 %v5066, 0.0
        %v5099 = vmax.f32 %v5067, 0.0
        %v5100 = vmax.f32 %v5068, 0.0
        %v5101 = vmax.f32 %v5069, 0.0
        %v5102 = vmax.f32 %v5070, 0.0
        %v5103 = vmax.f32 %v5071, 0.0
        %v5104 = vmax.f32 %v5072, 0.0
        %v5105 = vmax.f32 %v5073, 0.0
        %v5106 = vmax.f32 %v5074, 0.0
        %v5107 = vmax.f32 %v5075, 0.0
        %v5108 = vmax.f32 %v5076, 0.0
        %v5109 = vmax.f32 %v5077, 0.0
        %v5110 = vmax.f32 %v5078, 0.0
        %v5111 = vmax.f32 %v5079, 0.0
        %v5112 = vmax.f32 %v5080, 0.0
        %v5113 = vmax.f32 %v5081, 0.0
        %v5114 = vmax.f32 %v5082, 0.0
        %v5115 = vmax.f32 %v5083, 0.0
        %v5116 = vmax.f32 %v5084, 0.0
        %v5117 = vmax.f32 %v5085, 0.0
        %v5118 = vpack.c.bf16 %v5087, %v5086
        %v5119 = vpack.c.bf16 %v5089, %v5088
        %v5120 = vpack.c.bf16 %v5091, %v5090
        %v5121 = vpack.c.bf16 %v5093, %v5092
        %v5122 = vpack.c.bf16 %v5095, %v5094
        %v5123 = vpack.c.bf16 %v5097, %v5096
        %v5124 = vpack.c.bf16 %v5099, %v5098
        %v5125 = vpack.c.bf16 %v5101, %v5100
        %v5126 = vpack.c.bf16 %v5103, %v5102
        %v5127 = vpack.c.bf16 %v5105, %v5104
        %v5128 = vpack.c.bf16 %v5107, %v5106
        %v5129 = vpack.c.bf16 %v5109, %v5108
        %v5130 = vpack.c.bf16 %v5111, %v5110
        %v5131 = vpack.c.bf16 %v5113, %v5112
        %v5132 = vpack.c.bf16 %v5115, %v5114
        %v5133 = vpack.c.bf16 %v5117, %v5116
        %v5150 = vunpack.c.l.b16 %v5118
        %v5151 = vunpack.c.h.b16 %v5118
        %v5152 = vunpack.c.l.b16 %v5119
        %v5153 = vunpack.c.h.b16 %v5119
        %v5154 = vunpack.c.l.b16 %v5120
        %v5155 = vunpack.c.h.b16 %v5120
        %v5156 = vunpack.c.l.b16 %v5121
        %v5157 = vunpack.c.h.b16 %v5121
        %v5158 = vunpack.c.l.b16 %v5122
        %v5159 = vunpack.c.h.b16 %v5122
        %v5160 = vunpack.c.l.b16 %v5123
        %v5161 = vunpack.c.h.b16 %v5123
        %v5162 = vunpack.c.l.b16 %v5124
        %v5163 = vunpack.c.h.b16 %v5124
        %v5164 = vunpack.c.l.b16 %v5125
        %v5165 = vunpack.c.h.b16 %v5125
        %v5166 = vunpack.c.l.b16 %v5126
        %v5167 = vunpack.c.h.b16 %v5126
        %v5168 = vunpack.c.l.b16 %v5127
        %v5169 = vunpack.c.h.b16 %v5127
        %v5170 = vunpack.c.l.b16 %v5128
        %v5171 = vunpack.c.h.b16 %v5128
        %v5172 = vunpack.c.l.b16 %v5129
        %v5173 = vunpack.c.h.b16 %v5129
        %v5174 = vunpack.c.l.b16 %v5130
        %v5175 = vunpack.c.h.b16 %v5130
        %v5176 = vunpack.c.l.b16 %v5131
        %v5177 = vunpack.c.h.b16 %v5131
        %v5178 = vunpack.c.l.b16 %v5132
        %v5179 = vunpack.c.h.b16 %v5132
        %v5180 = vunpack.c.l.b16 %v5133
        %v5181 = vunpack.c.h.b16 %v5133
        %v5182 = vpack.c.b16 %v5150, %v5150
        %v5183 = vpack.c.b16 %v5151, %v5151
        %v5184 = vpack.c.b16 %v5152, %v5152
        %v5185 = vpack.c.b16 %v5153, %v5153
        %v5186 = vpack.c.b16 %v5154, %v5154
        %v5187 = vpack.c.b16 %v5155, %v5155
        %v5188 = vpack.c.b16 %v5156, %v5156
        %v5189 = vpack.c.b16 %v5157, %v5157
        %v5190 = vpack.c.b16 %v5158, %v5158
        %v5191 = vpack.c.b16 %v5159, %v5159
        %v5192 = vpack.c.b16 %v5160, %v5160
        %v5193 = vpack.c.b16 %v5161, %v5161
        %v5194 = vpack.c.b16 %v5162, %v5162
        %v5195 = vpack.c.b16 %v5163, %v5163
        %v5196 = vpack.c.b16 %v5164, %v5164
        %v5197 = vpack.c.b16 %v5165, %v5165
        %v5198 = vpack.c.b16 %v5166, %v5166
        %v5199 = vpack.c.b16 %v5167, %v5167
        %v5200 = vpack.c.b16 %v5168, %v5168
        %v5201 = vpack.c.b16 %v5169, %v5169
        %v5202 = vpack.c.b16 %v5170, %v5170
        %v5203 = vpack.c.b16 %v5171, %v5171
        %v5204 = vpack.c.b16 %v5172, %v5172
        %v5205 = vpack.c.b16 %v5173, %v5173
        %v5206 = vpack.c.b16 %v5174, %v5174
        %v5207 = vpack.c.b16 %v5175, %v5175
        %v5208 = vpack.c.b16 %v5176, %v5176
        %v5209 = vpack.c.b16 %v5177, %v5177
        %v5210 = vpack.c.b16 %v5178, %v5178
        %v5211 = vpack.c.b16 %v5179, %v5179
        %v5212 = vpack.c.b16 %v5180, %v5180
        %v5213 = vpack.c.b16 %v5181, %v5181
        %5246 = vst [vmem:[%s220] sm:$0xf] %v5182
        %5247 = vst [vmem:[%s220 + $0x4] sm:$0xf] %v5183
        %5248 = vst [vmem:[%s220 + $0x8] sm:$0xf] %v5184
        %5249 = vst [vmem:[%s220 + $0xc] sm:$0xf] %v5185
        %5250 = vst [vmem:[%s220 + $0x10] sm:$0xf] %v5186
        %5251 = vst [vmem:[%s220 + $0x14] sm:$0xf] %v5187
        %5252 = vst [vmem:[%s220 + $0x18] sm:$0xf] %v5188
        %5253 = vst [vmem:[%s220 + $0x1c] sm:$0xf] %v5189
        %5254 = vst [vmem:[%s220 + $0x20] sm:$0xf] %v5190
        %5255 = vst [vmem:[%s220 + $0x24] sm:$0xf] %v5191
        %5256 = vst [vmem:[%s220 + $0x28] sm:$0xf] %v5192
        %5257 = vst [vmem:[%s220 + $0x2c] sm:$0xf] %v5193
        %5258 = vst [vmem:[%s220 + $0x30] sm:$0xf] %v5194
        %5259 = vst [vmem:[%s220 + $0x34] sm:$0xf] %v5195
        %5260 = vst [vmem:[%s220 + $0x38] sm:$0xf] %v5196
        %5261 = vst [vmem:[%s220 + $0x3c] sm:$0xf] %v5197
        %5262 = vst [vmem:[%s220 + $0x40] sm:$0xf] %v5198
        %5263 = vst [vmem:[%s220 + $0x44] sm:$0xf] %v5199
        %5264 = vst [vmem:[%s220 + $0x48] sm:$0xf] %v5200
        %5265 = vst [vmem:[%s220 + $0x4c] sm:$0xf] %v5201
        %5266 = vst [vmem:[%s220 + $0x50] sm:$0xf] %v5202
        %5267 = vst [vmem:[%s220 + $0x54] sm:$0xf] %v5203
        %5268 = vst [vmem:[%s220 + $0x58] sm:$0xf] %v5204
        %5269 = vst [vmem:[%s220 + $0x5c] sm:$0xf] %v5205
        %5270 = vst [vmem:[%s220 + $0x60] sm:$0xf] %v5206
        %5271 = vst [vmem:[%s220 + $0x64] sm:$0xf] %v5207
        %5272 = vst [vmem:[%s220 + $0x68] sm:$0xf] %v5208
        %5273 = vst [vmem:[%s220 + $0x6c] sm:$0xf] %v5209
        %5274 = vst [vmem:[%s220 + $0x70] sm:$0xf] %v5210
        %5275 = vst [vmem:[%s220 + $0x74] sm:$0xf] %v5211
        %5276 = vst [vmem:[%s220 + $0x78] sm:$0xf] %v5212
        %5277 = vst [vmem:[%s220 + $0x7c] sm:$0xf] %v5213
        %s5278 = sand.u32 %s128, 1
        %s5279 = scalar_lea.sflag [#allocation3], %s5278
        %s5280 = sand.u32 %s128, 1
        %s5281 = smul.addr %s5280, 128
        %s5282 = scalar_lea.vmem [#allocation2], %s5281
        // Predicated region
        $region33: #{tpu_custom_call.1} parent=31 // pred_check
          %p5283 = pneg %p138
        $region34: #{tpu_custom_call.1} parent=31 // pred_check_branch
          %5285 = sbr.rel (%p5283) target = $region36
        $region35: #{tpu_custom_call.1} parent=31 // pred_region
          %s5287 = ssub.s32 2048, 2048
          %5288 = vsyncadd %s5279, %s5287
          %s5289 = smul.addr %s23, 32
          %s5290 = sadd.s32 %s24, %s5289
          %s5291 = smul.addr %s22, 32
          %s5292 = sadd.s32 %s5290, %s5291
          %s5293 = smul.addr %s5292, 64
          %s5294 = scalar_lea.hbm %s3, %s5293
          %s5295 = sshll.u32 %s5282, 4
          %s5296 = int_to_ptr.vmem [resolvable:$true] %s5295
          %5301 = dma.vmem_to_hbm [thread:$0]  %s5296, 2048, %s5294, %s5279, 64, 64, 4
        $region36: #{tpu_custom_call.1} parent=31 // pred_fallthru
          _
      $region32: #{tpu_custom_call.1} parent=5 // pred_fallthru
        _
      %p5302 = scmp.le.s32.totalorder 2, %s12
      // Predicated region
      $region37: #{tpu_custom_call.1} parent=5 // pred_check
        %p5303 = pneg %p5302
      $region38: #{tpu_custom_call.1} parent=5 // pred_check_branch
        %5305 = sbr.rel (%p5303) target = $region40
      $region39: #{tpu_custom_call.1} parent=5 // pred_region
        %s5306 = ssub.s32 %s12, 2
        // Predicated region
        $region41: #{tpu_custom_call.1} parent=39 // pred_check
          %p5307 = pneg %p144
        $region42: #{tpu_custom_call.1} parent=39 // pred_check_branch
          %5309 = sbr.rel (%p5307) target = $region44
        $region43: #{tpu_custom_call.1} parent=39 // pred_region
          %s5310 = sand.u32 %s129, 1
          %s5311 = scalar_lea.sflag [#allocation3], %s5310
          %s5312 = sand.u32 %s129, 1
          %s5313 = smul.addr %s5312, 128
          %s5314 = scalar_lea.vmem [#allocation2], %s5313
          %5315 = dma.done %s5311, 2048
        $region44: #{tpu_custom_call.1} parent=39 // pred_fallthru
          _
      $region40: #{tpu_custom_call.1} parent=5 // pred_fallthru
        _
    $region6: #{tpu_custom_call.1} parent=1 // loop_footer
      %s16 = sadd.s32 1, %s12
    $region7: #{tpu_custom_call.1} parent=1 // loop_footer_branch
      %11 = sbr.rel target = $region3
    $region8: #{tpu_custom_call.1} parent=1 // loop_exit
      _
    %5316 = vsyncpa [#allocation3], 1
    %s5317 = scalar_lea.sflag [#allocation3], 1
    %5318 = vsyncpa %s5317, 1

</llo_original>
